<compile_context>
chip_gen: v7x
topology: tpu7x:2x2x1
jax: 0.10.0
libtpu: 0.0.40
codegen_flags: <defaults>
</compile_context>

<pallas_src>
import jax
import jax.numpy as jnp
from jax import lax
from jax.experimental import pallas as pl
from jax.experimental.pallas import tpu as pltpu


# ---------------------------------------------------------------------------
# Hardware-aware sizing helpers.
# ---------------------------------------------------------------------------
def _tpu_vmem_bytes():
    """Physical VMEM per core (falls back to 128 MiB if it cannot be queried)."""
    try:
        info = pltpu.get_tpu_info()
        v = int(getattr(info, "vmem_capacity_bytes", 0) or 0)
        if v > 0:
            return v
    except Exception:
        pass
    try:
        kind = jax.devices()[0].device_kind.lower()
        if "v7" in kind:
            return 64 << 20
    except Exception:
        pass
    return 128 << 20


def _vmem_limit_bytes(vmem_phys):
    # v7x (64 MiB physical): cap scoped VMEM at ~40 MiB; v5e/v6e (128 MiB): allow ~96 MiB.
    return min(96 << 20, max(32 << 20, vmem_phys - (24 << 20)))


def _pick_batch_block(B, T, D, Dh, vmem_phys):
    """Number of sequences processed per grid step (Bb)."""
    # Budget for in-flight f32 temporaries (attention scores, qkv, FFN hidden, misc
    # slabs); leaves room for double-buffered weights/activations + Mosaic scratch.
    budget = (12 << 20) if vmem_phys <= (64 << 20) else (32 << 20)
    per_seq = 4 * (3 * T * T + T * (3 * D + Dh + 6 * max(D, 128)))
    bb = max(1, budget // max(per_seq, 1))
    bb = min(bb, B, 64)
    # Keep >= 2 steps along the batch grid axis so both v7x TensorCores get work.
    if B >= 2:
        bb = min(bb, (B + 1) // 2)
    return max(1, bb)


# ---------------------------------------------------------------------------
# Fused kernel: the full stack of FFT blocks, one layer per inner grid step.
# ---------------------------------------------------------------------------
def make_encoder_stack_kernel(Bb, T, D, num_heads, k1, p1, k2, p2,
                              prelayer_norm, eps=1e-5):
    N = Bb * T
    H = num_heads
    dh = D // H
    scale = 1.0 / (dh ** 0.5)
    bf16 = jnp.bfloat16
    f32 = jnp.float32

    def layer_norm(v, g, b):
        mu = jnp.mean(v, axis=-1, keepdims=True)
        var = jnp.mean((v - mu) ** 2, axis=-1, keepdims=True)
        return (v - mu) * lax.rsqrt(var + eps) * g + b

    def conv1d_taps(xf, w_ref, kk, pp):
        # xf: (N, Cin) f32 = Bb sequences of length T stacked; w_ref: (1, kk, Cin, Cout) bf16.
        # 'same'-style Conv1d as a sum of rolled matmuls over the static taps.  Rows whose
        # source index falls outside [0, T) are zeroed -- this also kills the rows that
        # wrapped across sequence boundaries under the flattened roll, so one 2-D sublane
        # roll serves all Bb sequences at once.
        cout = w_ref.shape[-1]
        if kk == 1 and pp == 0:
            return jnp.dot(xf.astype(bf16), w_ref[0, 0], preferred_element_type=f32)
        t_idx = lax.broadcasted_iota(jnp.int32, (Bb, T, 1), 1).reshape(N, 1)
        acc = jnp.zeros((N, cout), f32)
        # TODO(synk): if the bundle dump shows ld/st spills at Dh=1024, convert this
        # static tap loop to lax.fori_loop with dynamic w_ref indexing to bound live ranges.
        for j in range(kk):
            src = j - pp                               # y[t] += x[t + src] @ W[j]
            if src == 0:
                xs = xf.astype(bf16)
            else:
                xs = pltpu.roll(xf, (-src) % N, axis=0)          # jnp.roll semantics
                valid = jnp.logical_and(t_idx + src >= 0, t_idx + src < T)
                # mask after the bf16 cast: half the VPU cost on v6e/v7x bf16 VALUs.
                xs = xs.astype(bf16) * valid.astype(bf16)
            acc = acc + jnp.dot(xs, w_ref[0, j], preferred_element_type=f32)
        return acc

    def kernel(x_ref, kp_ref, npm_ref,
               wqkv_ref, bqkv_ref, wo_ref, bo_ref, ln1g_ref, ln1b_ref,
               w1_ref, b1_ref, w2_ref, b2_ref, ln2g_ref, ln2b_ref,
               o_ref):
        layer = pl.program_id(1)

        # Seed the resident activation block from the embedded input at layer 0.  For
        # later layers the output block (constant block index along the layer axis, so it
        # never leaves VMEM until the batch block changes) already holds the previous
        # layer's output -- same mechanism as the accumulate-into-o_ref matmul pattern.
        @pl.when(layer == 0)
        def _():
            o_ref[...] = x_ref[...]

        x = o_ref[...].reshape(N, D)                            # (N, D) f32 carried state
        # hoist the (Bb,1,T) -> (Bb,T,T) additive pad-bias broadcast out of the head loop
        kp_bias = jnp.broadcast_to(kp_ref[...] * (-1e9), (Bb, T, T))
        npm = npm_ref[...].reshape(N, 1)                        # 1.0 on non-pad rows

        wqkv = wqkv_ref[0]                                      # (D, 3D) bf16
        wo = wo_ref[0]                                          # (D, D)  bf16
        bqkv, bo = bqkv_ref[0], bo_ref[0]
        ln1g, ln1b = ln1g_ref[0], ln1b_ref[0]
        ln2g, ln2b = ln2g_ref[0], ln2b_ref[0]
        b1, b2 = b1_ref[0], b2_ref[0]

        # ----- multi-head self-attention sub-layer -----
        residual = x
        h = layer_norm(x, ln1g, ln1b) if prelayer_norm else x

        # fused Q/K/V projection: one wide MXU matmul on the flattened (N, D) slab.
        qkv = jnp.dot(h.astype(bf16), wqkv, preferred_element_type=f32) + bqkv   # (N, 3D)
        qkv3 = qkv.reshape(Bb, T, 3 * D)

        # TODO(synk): flash-style key-block tiling (online softmax with m/l/acc in VMEM
        # scratch) for T >~ 512 so the (Bb,T,T) score temporaries stop dictating Bb.
        if dh % 128 == 0:
            ctxs = []
        else:
            attn = jnp.zeros((N, D), f32)
        for hh in range(H):
            off = hh * dh
            qh = qkv3[:, :, off:off + dh] * scale
            kh = qkv3[:, :, D + off:D + off + dh]
            vh = qkv3[:, :, 2 * D + off:2 * D + off + dh]
            s = jnp.einsum('bqd,bkd->bqk', qh.astype(bf16), kh.astype(bf16),
                           preferred_element_type=f32)          # (Bb, T, T)
            s = s + kp_bias                                     # additive key-pad mask
            s = s - jnp.max(s, axis=-1, keepdims=True)
            e = jnp.exp(s)
            p = e * pl.reciprocal(jnp.sum(e, axis=-1, keepdims=True), approx=True)
            ctx = jnp.einsum('bqk,bkd->bqd', p.astype(bf16), vh.astype(bf16),
                             preferred_element_type=f32)        # (Bb, T, dh)
            if dh % 128 == 0:
                ctxs.append(ctx.reshape(N, dh))                 # 128-aligned lane concat
            else:
                # small dh: fold the head straight into the output projection rows.
                attn = attn + jnp.dot(ctx.reshape(N, dh).astype(bf16),
                                      wo[off:off + dh, :], preferred_element_type=f32)
        if dh % 128 == 0:
            # relayout-free concat + one K=D output projection (matches 2x256 MXU).
            attn = jnp.dot(jnp.concatenate(ctxs, axis=-1).astype(bf16), wo,
                           preferred_element_type=f32)
        attn = attn + bo

        y = attn + residual
        if not prelayer_norm:
            y = layer_norm(y, ln1g, ln1b)
        y = y * npm

        # ----- position-wise conv FFN sub-layer -----
        # TODO(synk): confirm whether the pre-LN FastSpeech2 variant also pre-norms the
        # conv FFN; this keeps the post-LN FFN of the reference implementation.
        residual2 = y
        h1 = jnp.maximum(conv1d_taps(y, w1_ref, k1, p1) + b1, 0.0)
        h2 = conv1d_taps(h1, w2_ref, k2, p2) + b2
        out = layer_norm(h2 + residual2, ln2g, ln2b)
        out = out * npm

        o_ref[...] = out.reshape(Bb, T, D).astype(o_ref.dtype)

    return kernel


# ---------------------------------------------------------------------------
# Wrapper: one pallas_call for the whole layer stack.
# ---------------------------------------------------------------------------
def encoder_stack_pallas(x, key_pad, non_pad, stacked, cfg, Bb, vmem_phys):
    B, T, D = x.shape                       # B already padded to a multiple of Bb
    L = stacked["wqkv"].shape[0]
    k1, k2 = cfg["fft_conv1d_kernel"]
    p1, p2 = cfg["fft_conv1d_padding"]
    kernel = make_encoder_stack_kernel(Bb, T, D, cfg["encoder_head"],
                                       k1, p1, k2, p2,
                                       cfg["attn_use_prelayer_norm"])

    names = ["wqkv", "bqkv", "wo", "bo", "ln1_g", "ln1_b",
             "w1", "b1", "w2", "b2", "ln2_g", "ln2_b"]
    flat = [stacked[n] for n in names]

    def layer_spec(arr):
        tail = (0,) * (arr.ndim - 1)
        return pl.BlockSpec((1,) + arr.shape[1:],
                            lambda b, l, _t=tail: (l,) + _t)

    in_specs = [
        pl.BlockSpec((Bb, T, D), lambda b, l: (b, 0, 0)),   # embedded input (read at layer 0)
        pl.BlockSpec((Bb, 1, T), lambda b, l: (b, 0, 0)),   # key-pad vector (no T x T mask)
        pl.BlockSpec((Bb, T, 1), lambda b, l: (b, 0, 0)),   # non-pad vector
    ] + [layer_spec(a) for a in flat]

    return pl.pallas_call(
        kernel,
        out_shape=jax.ShapeDtypeStruct((B, T, D), jnp.float32),
        grid=(B // Bb, L),
        in_specs=in_specs,
        out_specs=pl.BlockSpec((Bb, T, D), lambda b, l: (b, 0, 0)),
        compiler_params=pltpu.CompilerParams(
            dimension_semantics=("parallel", "arbitrary"),
            vmem_limit_bytes=_vmem_limit_bytes(vmem_phys),
        ),
    )(x, key_pad, non_pad, *flat)


# ---------------------------------------------------------------------------
# Parameter construction (deterministic, synthetic) and full Encoder forward.
# ---------------------------------------------------------------------------
def init_encoder_params(key, cfg):
    D = cfg["encoder_dim"]
    Dh = cfg["encoder_conv1d_filter_size"]
    k1, k2 = cfg["fft_conv1d_kernel"]
    n_pos = cfg["max_seq_len"] + 1
    PAD = cfg["PAD"]

    keys = jax.random.split(key, 2 + cfg["encoder_n_layer"])

    word_emb = 0.02 * jax.random.normal(keys[0], (cfg["vocab_size"], D), jnp.float32)
    word_emb = word_emb.at[PAD].set(0.0)            # padding_idx
    pos_emb = 0.02 * jax.random.normal(keys[1], (n_pos, D), jnp.float32)
    pos_emb = pos_emb.at[PAD].set(0.0)              # padding_idx

    layers = []
    for li in range(cfg["encoder_n_layer"]):
        lk = jax.random.split(keys[2 + li], 8)
        wq = 0.02 * jax.random.normal(lk[0], (D, D), jnp.float32)
        wk = 0.02 * jax.random.normal(lk[1], (D, D), jnp.float32)
        wv = 0.02 * jax.random.normal(lk[2], (D, D), jnp.float32)
        wo = 0.02 * jax.random.normal(lk[3], (D, D), jnp.float32)
        w1 = 0.02 * jax.random.normal(lk[4], (k1, D, Dh), jnp.float32)
        w2 = 0.02 * jax.random.normal(lk[5], (k2, Dh, D), jnp.float32)
        layers.append(dict(
            # Matmul weights stored bf16 (halves weight DMA; MXU runs bf16 with f32
            # accumulation via preferred_element_type).  Biases / LN params stay f32.
            wqkv=jnp.concatenate([wq, wk, wv], axis=1).astype(jnp.bfloat16),  # (D, 3D)
            bqkv=jnp.zeros((1, 3 * D), jnp.float32),
            wo=wo.astype(jnp.bfloat16),
            bo=jnp.zeros((1, D), jnp.float32),
            ln1_g=jnp.ones((1, D), jnp.float32),
            ln1_b=jnp.zeros((1, D), jnp.float32),
            # conv weights stored as (kernel, Cin, Cout) == torch weight.transpose(2,1,0)
            w1=w1.astype(jnp.bfloat16),
            b1=jnp.zeros((1, Dh), jnp.float32),
            w2=w2.astype(jnp.bfloat16),
            b2=jnp.zeros((1, D), jnp.float32),
            ln2_g=jnp.ones((1, D), jnp.float32),
            ln2_b=jnp.zeros((1, D), jnp.float32),
        ))
    return dict(word_emb=word_emb, pos_emb=pos_emb, layers=layers)


def _stack_layers(layers):
    return {k: jnp.stack([lp[k] for lp in layers], axis=0) for k in layers[0]}


def encoder_forward(params, src_seq, src_pos, cfg):
    PAD = cfg["PAD"]
    B, T = src_seq.shape
    D = cfg["encoder_dim"]
    Dh = cfg["encoder_conv1d_filter_size"]
    assert D % cfg["encoder_head"] == 0

    # masks (glue, plain JAX) -- only O(T) vectors, no dense (B,T,T) mask in HBM.
    pad_f = (src_seq == PAD).astype(jnp.float32)           # (B, T)
    key_pad = pad_f[:, None, :]                             # (B, 1, T): 1.0 where key is PAD
    non_pad = (1.0 - pad_f)[:, :, None]                     # (B, T, 1): 1.0 on real tokens

    # embedding lookups (gather glue)
    enc = jnp.take(params["word_emb"], src_seq, axis=0) + \
          jnp.take(params["pos_emb"], src_pos, axis=0)      # (B, T, D)

    vmem_phys = _tpu_vmem_bytes()
    Bb = _pick_batch_block(B, T, D, Dh, vmem_phys)
    B_pad = ((B + Bb - 1) // Bb) * Bb
    if B_pad != B:
        pb = B_pad - B
        enc = jnp.pad(enc, ((0, pb), (0, 0), (0, 0)))
        key_pad = jnp.pad(key_pad, ((0, pb), (0, 0), (0, 0)), constant_values=1.0)
        non_pad = jnp.pad(non_pad, ((0, pb), (0, 0), (0, 0)))

    stacked = _stack_layers(params["layers"])
    enc = encoder_stack_pallas(enc, key_pad, non_pad, stacked, cfg, Bb, vmem_phys)
    return enc[:B], non_pad[:B]


# ---------------------------------------------------------------------------
# Pure-JAX reference of the same math (exact softmax division, ground-truth
# zero-padded conv taps) -- used to validate the fused kernel end to end.
# ---------------------------------------------------------------------------
def _layer_reference(x, key_pad, non_pad, lp, cfg, eps=1e-5):
    bf16, f32 = jnp.bfloat16, jnp.float32
    B, T, D = x.shape
    H = cfg["encoder_head"]
    dh = D // H
    k1, k2 = cfg["fft_conv1d_kernel"]
    p1, p2 = cfg["fft_conv1d_padding"]

    def ln(v, g, b):
        mu = jnp.mean(v, -1, keepdims=True)
        var = jnp.mean((v - mu) ** 2, -1, keepdims=True)
        return (v - mu) * lax.rsqrt(var + eps) * g + b

    def conv(xin, w, pp):
        kk = w.shape[0]
        acc = jnp.zeros(xin.shape[:2] + (w.shape[-1],), f32)
        for j in range(kk):
            src = j - pp
            if src > 0:
                xs = jnp.concatenate(
                    [xin[:, src:, :], jnp.zeros((B, src, xin.shape[-1]), xin.dtype)], axis=1)
            elif src < 0:
                xs = jnp.concatenate(
                    [jnp.zeros((B, -src, xin.shape[-1]), xin.dtype), xin[:, :src, :]], axis=1)
            else:
                xs = xin
            acc = acc + jnp.einsum('btc,ce->bte', xs.astype(bf16), w[j],
                                   preferred_element_type=f32)
        return acc

    residual = x
    h = ln(x, lp["ln1_g"], lp["ln1_b"]) if cfg["attn_use_prelayer_norm"] else x
    qkv = jnp.einsum('btd,de->bte', h.astype(bf16), lp["wqkv"],
                     preferred_element_type=f32) + lp["bqkv"]
    bias = key_pad * (-1e9)
    ctxs = []
    for hh in range(H):
        off = hh * dh
        qh = qkv[:, :, off:off + dh] * (1.0 / dh ** 0.5)
        kh = qkv[:, :, D + off:D + off + dh]
        vh = qkv[:, :, 2 * D + off:2 * D + off + dh]
        s = jnp.einsum('bqd,bkd->bqk', qh.astype(bf16), kh.astype(bf16),
                       preferred_element_type=f32) + bias
        s = s - jnp.max(s, -1, keepdims=True)
        e = jnp.exp(s)
        p = e / jnp.sum(e, -1, keepdims=True)
        ctxs.append(jnp.einsum('bqk,bkd->bqd', p.astype(bf16), vh.astype(bf16),
                               preferred_element_type=f32))
    attn = jnp.einsum('btd,de->bte', jnp.concatenate(ctxs, -1).astype(bf16),
                      lp["wo"], preferred_element_type=f32) + lp["bo"]
    y = attn + residual
    if not cfg["attn_use_prelayer_norm"]:
        y = ln(y, lp["ln1_g"], lp["ln1_b"])
    y = y * non_pad

    r2 = y
    h1 = jnp.maximum(conv(y, lp["w1"], p1) + lp["b1"], 0.0)
    h2 = conv(h1, lp["w2"], p2) + lp["b2"]
    return ln(h2 + r2, lp["ln2_g"], lp["ln2_b"]) * non_pad


def encoder_reference(params, src_seq, src_pos, cfg):
    PAD = cfg["PAD"]
    pad_f = (src_seq == PAD).astype(jnp.float32)
    key_pad = pad_f[:, None, :]
    non_pad = (1.0 - pad_f)[:, :, None]
    x = jnp.take(params["word_emb"], src_seq, axis=0) + \
        jnp.take(params["pos_emb"], src_pos, axis=0)
    for lp in params["layers"]:
        x = _layer_reference(x, key_pad, non_pad, lp, cfg)
    return x, non_pad


# ---------------------------------------------------------------------------
if __name__ == "__main__":
    cfg = dict(
        max_seq_len=8,
        vocab_size=12,
        encoder_dim=32,
        encoder_conv1d_filter_size=64,
        encoder_head=2,
        fft_conv1d_kernel=(9, 1),
        fft_conv1d_padding=(4, 0),
        dropout=0.1,                     # inference: dropout is identity
        attn_use_prelayer_norm=False,
        encoder_n_layer=2,
        PAD=0,
    )

    key = jax.random.PRNGKey(0)
    pkey, skey = jax.random.split(key)
    params = init_encoder_params(pkey, cfg)

    B, T = 4, 8
    src_seq = jax.random.randint(skey, (B, T), 1, cfg["vocab_size"], dtype=jnp.int32)
    # make the tail of the second sequence PAD to exercise the masks
    src_seq = src_seq.at[1, 6:].set(cfg["PAD"])
    positions = jnp.arange(1, T + 1, dtype=jnp.int32)[None, :]
    src_pos = jnp.where(src_seq != cfg["PAD"], positions, cfg["PAD"])

    enc_out, non_pad_mask = encoder_forward(params, src_seq, src_pos, cfg)
    jax.block_until_ready(enc_out)
    jax.block_until_ready(non_pad_mask)

    assert enc_out.shape == (B, T, cfg["encoder_dim"])
    assert non_pad_mask.shape == (B, T, 1)
    assert bool(jnp.all(jnp.isfinite(enc_out)))
    # padded positions must be zeroed by non_pad_mask inside the kernel
    assert float(jnp.max(jnp.abs(enc_out[1, 6:]))) == 0.0

    # end-to-end check against the pure-JAX reference (loose tolerance: the kernel uses
    # the EUP approximate reciprocal in the softmax denominator).
    ref_out, _ = encoder_reference(params, src_seq, src_pos, cfg)
    assert float(jnp.max(jnp.abs(enc_out - ref_out))) < 5e-2

    print("KERNEL_OK")
</pallas_src>

<mosaic_0001>
module attributes {stable_mosaic.version = 11 : i64} {
  func.func @kernel(%arg0: i32, %arg1: i32, %arg2: memref<2x8x32xf32, #tpu.memory_space<vmem>>, %arg3: memref<2x1x8xf32, #tpu.memory_space<vmem>>, %arg4: memref<2x8x1xf32, #tpu.memory_space<vmem>>, %arg5: memref<1x32x96xbf16, #tpu.memory_space<vmem>>, %arg6: memref<1x1x96xf32, #tpu.memory_space<vmem>>, %arg7: memref<1x32x32xbf16, #tpu.memory_space<vmem>>, %arg8: memref<1x1x32xf32, #tpu.memory_space<vmem>>, %arg9: memref<1x1x32xf32, #tpu.memory_space<vmem>>, %arg10: memref<1x1x32xf32, #tpu.memory_space<vmem>>, %arg11: memref<1x9x32x64xbf16, #tpu.memory_space<vmem>>, %arg12: memref<1x1x64xf32, #tpu.memory_space<vmem>>, %arg13: memref<1x1x64x32xbf16, #tpu.memory_space<vmem>>, %arg14: memref<1x1x32xf32, #tpu.memory_space<vmem>>, %arg15: memref<1x1x32xf32, #tpu.memory_space<vmem>>, %arg16: memref<1x1x32xf32, #tpu.memory_space<vmem>>, %arg17: memref<2x8x32xf32, #tpu.memory_space<vmem>>) attributes {dimension_semantics = [#tpu.dimension_semantics<parallel>, #tpu.dimension_semantics<arbitrary>], iteration_bounds = array<i64: 2, 2>, scalar_prefetch = 0 : i64, scratch_operands = 0 : i64, tpu.core_type = #tpu.core_type<tc>, window_params = [{transform_indices = @transform_0, window_bounds = array<i64: 2, 8, 32>}, {transform_indices = @transform_1, window_bounds = array<i64: 2, 1, 8>}, {transform_indices = @transform_2, window_bounds = array<i64: 2, 8, 1>}, {transform_indices = @transform_3, window_bounds = array<i64: 1, 32, 96>}, {transform_indices = @transform_4, window_bounds = array<i64: 1, 1, 96>}, {transform_indices = @transform_5, window_bounds = array<i64: 1, 32, 32>}, {transform_indices = @transform_6, window_bounds = array<i64: 1, 1, 32>}, {transform_indices = @transform_7, window_bounds = array<i64: 1, 1, 32>}, {transform_indices = @transform_8, window_bounds = array<i64: 1, 1, 32>}, {transform_indices = @transform_9, window_bounds = array<i64: 1, 9, 32, 64>}, {transform_indices = @transform_10, window_bounds = array<i64: 1, 1, 64>}, {transform_indices = @transform_11, window_bounds = array<i64: 1, 1, 64, 32>}, {transform_indices = @transform_12, window_bounds = array<i64: 1, 1, 32>}, {transform_indices = @transform_13, window_bounds = array<i64: 1, 1, 32>}, {transform_indices = @transform_14, window_bounds = array<i64: 1, 1, 32>}, {transform_indices = @transform_15, window_bounds = array<i64: 2, 8, 32>}]} {
    %c0_i32 = arith.constant 0 : i32
    %0 = arith.cmpi eq, %arg1, %c0_i32 : i32
    %1 = arith.extui %0 : i1 to i32
    %c0_i32_0 = arith.constant 0 : i32
    %2 = arith.cmpi ne, %1, %c0_i32_0 : i32
    scf.if %2 {
      %c0_137 = arith.constant 0 : index
      %c0_138 = arith.constant 0 : index
      %c0_139 = arith.constant 0 : index
      %324 = vector.load %arg2[%c0_137, %c0_138, %c0_139] : memref<2x8x32xf32, #tpu.memory_space<vmem>>, vector<2x8x32xf32>
      %c0_140 = arith.constant 0 : index
      %c0_141 = arith.constant 0 : index
      %c0_142 = arith.constant 0 : index
      %325 = vector.load %arg17[%c0_140, %c0_141, %c0_142] : memref<2x8x32xf32, #tpu.memory_space<vmem>>, vector<2x8x32xf32>
      tpu.vector_store %arg17[%c0_140, %c0_141, %c0_142], %324 {strides = array<i32>} : memref<2x8x32xf32, #tpu.memory_space<vmem>>, vector<2x8x32xf32>,
    } else {
    }
    %c0 = arith.constant 0 : index
    %c0_1 = arith.constant 0 : index
    %c0_2 = arith.constant 0 : index
    %3 = vector.load %arg17[%c0, %c0_1, %c0_2] : memref<2x8x32xf32, #tpu.memory_space<vmem>>, vector<2x8x32xf32>
    %4 = vector.shape_cast %3 : vector<2x8x32xf32> to vector<16x32xf32>
    %c0_3 = arith.constant 0 : index
    %c0_4 = arith.constant 0 : index
    %c0_5 = arith.constant 0 : index
    %5 = vector.load %arg3[%c0_3, %c0_4, %c0_5] : memref<2x1x8xf32, #tpu.memory_space<vmem>>, vector<2x1x8xf32>
    %cst = arith.constant -1.000000e+09 : f32
    %6 = vector.broadcast %cst : f32 to vector<2x1x8xf32>
    %7 = arith.mulf %5, %6 : vector<2x1x8xf32>
    %8 = vector.shape_cast %7 : vector<2x1x8xf32> to vector<2x1x8xf32>
    %9 = vector.broadcast %8 : vector<2x1x8xf32> to vector<2x8x8xf32>
    %c0_6 = arith.constant 0 : index
    %c0_7 = arith.constant 0 : index
    %c0_8 = arith.constant 0 : index
    %10 = vector.load %arg4[%c0_6, %c0_7, %c0_8] : memref<2x8x1xf32, #tpu.memory_space<vmem>>, vector<2x8x1xf32>
    %11 = vector.shape_cast %10 : vector<2x8x1xf32> to vector<16x1xf32>
    %c0_9 = arith.constant 0 : index
    %c0_10 = arith.constant 0 : index
    %c0_11 = arith.constant 0 : index
    %12 = vector.load %arg5[%c0_9, %c0_10, %c0_11] : memref<1x32x96xbf16, #tpu.memory_space<vmem>>, vector<1x32x96xbf16>
    %13 = vector.shape_cast %12 : vector<1x32x96xbf16> to vector<32x96xbf16>
    %c0_12 = arith.constant 0 : index
    %c0_13 = arith.constant 0 : index
    %c0_14 = arith.constant 0 : index
    %14 = vector.load %arg7[%c0_12, %c0_13, %c0_14] : memref<1x32x32xbf16, #tpu.memory_space<vmem>>, vector<1x32x32xbf16>
    %15 = vector.shape_cast %14 : vector<1x32x32xbf16> to vector<32x32xbf16>
    %c0_15 = arith.constant 0 : index
    %c0_16 = arith.constant 0 : index
    %c0_17 = arith.constant 0 : index
    %16 = vector.load %arg6[%c0_15, %c0_16, %c0_17] : memref<1x1x96xf32, #tpu.memory_space<vmem>>, vector<1x1x96xf32>
    %17 = vector.shape_cast %16 : vector<1x1x96xf32> to vector<1x96xf32>
    %c0_18 = arith.constant 0 : index
    %c0_19 = arith.constant 0 : index
    %c0_20 = arith.constant 0 : index
    %18 = vector.load %arg8[%c0_18, %c0_19, %c0_20] : memref<1x1x32xf32, #tpu.memory_space<vmem>>, vector<1x1x32xf32>
    %19 = vector.shape_cast %18 : vector<1x1x32xf32> to vector<1x32xf32>
    %c0_21 = arith.constant 0 : index
    %c0_22 = arith.constant 0 : index
    %c0_23 = arith.constant 0 : index
    %20 = vector.load %arg9[%c0_21, %c0_22, %c0_23] : memref<1x1x32xf32, #tpu.memory_space<vmem>>, vector<1x1x32xf32>
    %21 = vector.shape_cast %20 : vector<1x1x32xf32> to vector<1x32xf32>
    %c0_24 = arith.constant 0 : index
    %c0_25 = arith.constant 0 : index
    %c0_26 = arith.constant 0 : index
    %22 = vector.load %arg10[%c0_24, %c0_25, %c0_26] : memref<1x1x32xf32, #tpu.memory_space<vmem>>, vector<1x1x32xf32>
    %23 = vector.shape_cast %22 : vector<1x1x32xf32> to vector<1x32xf32>
    %c0_27 = arith.constant 0 : index
    %c0_28 = arith.constant 0 : index
    %c0_29 = arith.constant 0 : index
    %24 = vector.load %arg15[%c0_27, %c0_28, %c0_29] : memref<1x1x32xf32, #tpu.memory_space<vmem>>, vector<1x1x32xf32>
    %25 = vector.shape_cast %24 : vector<1x1x32xf32> to vector<1x32xf32>
    %c0_30 = arith.constant 0 : index
    %c0_31 = arith.constant 0 : index
    %c0_32 = arith.constant 0 : index
    %26 = vector.load %arg16[%c0_30, %c0_31, %c0_32] : memref<1x1x32xf32, #tpu.memory_space<vmem>>, vector<1x1x32xf32>
    %27 = vector.shape_cast %26 : vector<1x1x32xf32> to vector<1x32xf32>
    %c0_33 = arith.constant 0 : index
    %c0_34 = arith.constant 0 : index
    %c0_35 = arith.constant 0 : index
    %28 = vector.load %arg12[%c0_33, %c0_34, %c0_35] : memref<1x1x64xf32, #tpu.memory_space<vmem>>, vector<1x1x64xf32>
    %29 = vector.shape_cast %28 : vector<1x1x64xf32> to vector<1x64xf32>
    %c0_36 = arith.constant 0 : index
    %c0_37 = arith.constant 0 : index
    %c0_38 = arith.constant 0 : index
    %30 = vector.load %arg14[%c0_36, %c0_37, %c0_38] : memref<1x1x32xf32, #tpu.memory_space<vmem>>, vector<1x1x32xf32>
    %31 = vector.shape_cast %30 : vector<1x1x32xf32> to vector<1x32xf32>
    %32 = arith.truncf %4 : vector<16x32xf32> to vector<16x32xbf16>
    %cst_39 = arith.constant dense<0.000000e+00> : vector<16x96xf32>
    %33 = tpu.matmul %32, %13, %cst_39 {dimension_numbers = #tpu.dot_dimension_numbers<[1], [0], [0], [1], [0, 0, 1, 1], [], []>} : vector<16x32xbf16>, vector<32x96xbf16>, vector<16x96xf32> -> vector<16x96xf32>
    %34 = vector.broadcast %17 : vector<1x96xf32> to vector<16x96xf32>
    %35 = arith.addf %33, %34 : vector<16x96xf32>
    %36 = vector.shape_cast %35 : vector<16x96xf32> to vector<2x8x96xf32>
    %cst_40 = arith.constant 0.000000e+00 : f32
    %37 = vector.broadcast %cst_40 : f32 to vector<16x32xf32>
    %38 = vector.extract_strided_slice %36 {offsets = [0, 0, 0], sizes = [2, 8, 16], strides = [1, 1, 1]} : vector<2x8x96xf32> to vector<2x8x16xf32>
    %cst_41 = arith.constant 2.500000e-01 : f32
    %39 = vector.broadcast %cst_41 : f32 to vector<2x8x16xf32>
    %40 = arith.mulf %38, %39 : vector<2x8x16xf32>
    %41 = vector.extract_strided_slice %36 {offsets = [0, 0, 32], sizes = [2, 8, 16], strides = [1, 1, 1]} : vector<2x8x96xf32> to vector<2x8x16xf32>
    %42 = vector.extract_strided_slice %36 {offsets = [0, 0, 64], sizes = [2, 8, 16], strides = [1, 1, 1]} : vector<2x8x96xf32> to vector<2x8x16xf32>
    %43 = arith.truncf %40 : vector<2x8x16xf32> to vector<2x8x16xbf16>
    %44 = arith.truncf %41 : vector<2x8x16xf32> to vector<2x8x16xbf16>
    "tpu.trace_start"() <{level = 10 : i32, message = "bqd,bkd->bqk"}> : () -> ()
    %cst_42 = arith.constant dense<0.000000e+00> : vector<2x8x8xf32>
    %45 = tpu.matmul %43, %44, %cst_42 {dimension_numbers = #tpu.dot_dimension_numbers<[2], [2], [1], [1], [0, 0, 0, 1, 1, 1], [0], [0]>} : vector<2x8x16xbf16>, vector<2x8x16xbf16>, vector<2x8x8xf32> -> vector<2x8x8xf32>
    "tpu.trace_stop"() : () -> ()
    %46 = arith.addf %45, %9 : vector<2x8x8xf32>
    %cst_43 = arith.constant dense<0xFF800000> : vector<2x8xf32>
    %47 = vector.multi_reduction <maximumf>, %46, %cst_43 [2] : vector<2x8x8xf32> to vector<2x8xf32>
    %48 = vector.shape_cast %47 : vector<2x8xf32> to vector<2x8x1xf32>
    %49 = vector.broadcast %48 : vector<2x8x1xf32> to vector<2x8x8xf32>
    %50 = arith.subf %46, %49 : vector<2x8x8xf32>
    %51 = math.exp %50 : vector<2x8x8xf32>
    %cst_44 = arith.constant dense<0.000000e+00> : vector<2x8xf32>
    %52 = vector.multi_reduction <add>, %51, %cst_44 [2] : vector<2x8x8xf32> to vector<2x8xf32>
    %53 = vector.shape_cast %52 : vector<2x8xf32> to vector<2x8x1xf32>
    %54 = tpu.reciprocal %53 {approx = true} : vector<2x8x1xf32> -> vector<2x8x1xf32>
    %55 = vector.broadcast %54 : vector<2x8x1xf32> to vector<2x8x8xf32>
    %56 = arith.mulf %51, %55 : vector<2x8x8xf32>
    %57 = arith.truncf %56 : vector<2x8x8xf32> to vector<2x8x8xbf16>
    %58 = arith.truncf %42 : vector<2x8x16xf32> to vector<2x8x16xbf16>
    "tpu.trace_start"() <{level = 10 : i32, message = "bqk,bkd->bqd"}> : () -> ()
    %cst_45 = arith.constant dense<0.000000e+00> : vector<2x8x16xf32>
    %59 = tpu.matmul %57, %58, %cst_45 {dimension_numbers = #tpu.dot_dimension_numbers<[2], [1], [1], [2], [0, 0, 0, 1, 1, 2], [0], [0]>} : vector<2x8x8xbf16>, vector<2x8x16xbf16>, vector<2x8x16xf32> -> vector<2x8x16xf32>
    "tpu.trace_stop"() : () -> ()
    %60 = vector.shape_cast %59 : vector<2x8x16xf32> to vector<16x16xf32>
    %61 = arith.truncf %60 : vector<16x16xf32> to vector<16x16xbf16>
    %62 = vector.extract_strided_slice %15 {offsets = [0, 0], sizes = [16, 32], strides = [1, 1]} : vector<32x32xbf16> to vector<16x32xbf16>
    %cst_46 = arith.constant dense<0.000000e+00> : vector<16x32xf32>
    %63 = tpu.matmul %61, %62, %cst_46 {dimension_numbers = #tpu.dot_dimension_numbers<[1], [0], [0], [1], [0, 0, 1, 1], [], []>} : vector<16x16xbf16>, vector<16x32xbf16>, vector<16x32xf32> -> vector<16x32xf32>
    %64 = arith.addf %37, %63 : vector<16x32xf32>
    %65 = vector.extract_strided_slice %36 {offsets = [0, 0, 16], sizes = [2, 8, 16], strides = [1, 1, 1]} : vector<2x8x96xf32> to vector<2x8x16xf32>
    %cst_47 = arith.constant 2.500000e-01 : f32
    %66 = vector.broadcast %cst_47 : f32 to vector<2x8x16xf32>
    %67 = arith.mulf %65, %66 : vector<2x8x16xf32>
    %68 = vector.extract_strided_slice %36 {offsets = [0, 0, 48], sizes = [2, 8, 16], strides = [1, 1, 1]} : vector<2x8x96xf32> to vector<2x8x16xf32>
    %69 = vector.extract_strided_slice %36 {offsets = [0, 0, 80], sizes = [2, 8, 16], strides = [1, 1, 1]} : vector<2x8x96xf32> to vector<2x8x16xf32>
    %70 = arith.truncf %67 : vector<2x8x16xf32> to vector<2x8x16xbf16>
    %71 = arith.truncf %68 : vector<2x8x16xf32> to vector<2x8x16xbf16>
    "tpu.trace_start"() <{level = 10 : i32, message = "bqd,bkd->bqk"}> : () -> ()
    %cst_48 = arith.constant dense<0.000000e+00> : vector<2x8x8xf32>
    %72 = tpu.matmul %70, %71, %cst_48 {dimension_numbers = #tpu.dot_dimension_numbers<[2], [2], [1], [1], [0, 0, 0, 1, 1, 1], [0], [0]>} : vector<2x8x16xbf16>, vector<2x8x16xbf16>, vector<2x8x8xf32> -> vector<2x8x8xf32>
    "tpu.trace_stop"() : () -> ()
    %73 = arith.addf %72, %9 : vector<2x8x8xf32>
    %cst_49 = arith.constant dense<0xFF800000> : vector<2x8xf32>
    %74 = vector.multi_reduction <maximumf>, %73, %cst_49 [2] : vector<2x8x8xf32> to vector<2x8xf32>
    %75 = vector.shape_cast %74 : vector<2x8xf32> to vector<2x8x1xf32>
    %76 = vector.broadcast %75 : vector<2x8x1xf32> to vector<2x8x8xf32>
    %77 = arith.subf %73, %76 : vector<2x8x8xf32>
    %78 = math.exp %77 : vector<2x8x8xf32>
    %cst_50 = arith.constant dense<0.000000e+00> : vector<2x8xf32>
    %79 = vector.multi_reduction <add>, %78, %cst_50 [2] : vector<2x8x8xf32> to vector<2x8xf32>
    %80 = vector.shape_cast %79 : vector<2x8xf32> to vector<2x8x1xf32>
    %81 = tpu.reciprocal %80 {approx = true} : vector<2x8x1xf32> -> vector<2x8x1xf32>
    %82 = vector.broadcast %81 : vector<2x8x1xf32> to vector<2x8x8xf32>
    %83 = arith.mulf %78, %82 : vector<2x8x8xf32>
    %84 = arith.truncf %83 : vector<2x8x8xf32> to vector<2x8x8xbf16>
    %85 = arith.truncf %69 : vector<2x8x16xf32> to vector<2x8x16xbf16>
    "tpu.trace_start"() <{level = 10 : i32, message = "bqk,bkd->bqd"}> : () -> ()
    %cst_51 = arith.constant dense<0.000000e+00> : vector<2x8x16xf32>
    %86 = tpu.matmul %84, %85, %cst_51 {dimension_numbers = #tpu.dot_dimension_numbers<[2], [1], [1], [2], [0, 0, 0, 1, 1, 2], [0], [0]>} : vector<2x8x8xbf16>, vector<2x8x16xbf16>, vector<2x8x16xf32> -> vector<2x8x16xf32>
    "tpu.trace_stop"() : () -> ()
    %87 = vector.shape_cast %86 : vector<2x8x16xf32> to vector<16x16xf32>
    %88 = arith.truncf %87 : vector<16x16xf32> to vector<16x16xbf16>
    %89 = vector.extract_strided_slice %15 {offsets = [16, 0], sizes = [16, 32], strides = [1, 1]} : vector<32x32xbf16> to vector<16x32xbf16>
    %cst_52 = arith.constant dense<0.000000e+00> : vector<16x32xf32>
    %90 = tpu.matmul %88, %89, %cst_52 {dimension_numbers = #tpu.dot_dimension_numbers<[1], [0], [0], [1], [0, 0, 1, 1], [], []>} : vector<16x16xbf16>, vector<16x32xbf16>, vector<16x32xf32> -> vector<16x32xf32>
    %91 = arith.addf %64, %90 : vector<16x32xf32>
    %92 = vector.broadcast %19 : vector<1x32xf32> to vector<16x32xf32>
    %93 = arith.addf %91, %92 : vector<16x32xf32>
    %94 = arith.addf %93, %4 : vector<16x32xf32>
    %cst_53 = arith.constant dense<0.000000e+00> : vector<16xf32>
    %95 = vector.multi_reduction <add>, %94, %cst_53 [1] : vector<16x32xf32> to vector<16xf32>
    %96 = vector.shape_cast %95 : vector<16xf32> to vector<16x1xf32>
    %cst_54 = arith.constant 3.200000e+01 : f32
    %97 = vector.broadcast %cst_54 : f32 to vector<16x1xf32>
    %98 = arith.divf %96, %97 : vector<16x1xf32>
    %99 = vector.broadcast %98 : vector<16x1xf32> to vector<16x32xf32>
    %100 = arith.subf %94, %99 : vector<16x32xf32>
    %101 = arith.mulf %100, %100 : vector<16x32xf32>
    %cst_55 = arith.constant dense<0.000000e+00> : vector<16xf32>
    %102 = vector.multi_reduction <add>, %101, %cst_55 [1] : vector<16x32xf32> to vector<16xf32>
    %103 = vector.shape_cast %102 : vector<16xf32> to vector<16x1xf32>
    %cst_56 = arith.constant 3.200000e+01 : f32
    %104 = vector.broadcast %cst_56 : f32 to vector<16x1xf32>
    %105 = arith.divf %103, %104 : vector<16x1xf32>
    %106 = vector.broadcast %98 : vector<16x1xf32> to vector<16x32xf32>
    %107 = arith.subf %94, %106 : vector<16x32xf32>
    %cst_57 = arith.constant 9.99999974E-6 : f32
    %108 = vector.broadcast %cst_57 : f32 to vector<16x1xf32>
    %109 = arith.addf %105, %108 : vector<16x1xf32>
    %110 = math.rsqrt %109 : vector<16x1xf32>
    %111 = vector.broadcast %110 : vector<16x1xf32> to vector<16x32xf32>
    %112 = arith.mulf %107, %111 : vector<16x32xf32>
    %113 = vector.broadcast %21 : vector<1x32xf32> to vector<16x32xf32>
    %114 = arith.mulf %112, %113 : vector<16x32xf32>
    %115 = vector.broadcast %23 : vector<1x32xf32> to vector<16x32xf32>
    %116 = arith.addf %114, %115 : vector<16x32xf32>
    %117 = vector.broadcast %11 : vector<16x1xf32> to vector<16x32xf32>
    %118 = arith.mulf %116, %117 : vector<16x32xf32>
    %119 = tpu.iota {dimensions = array<i32: 1>} : vector<2x8x1xi32>
    %120 = vector.shape_cast %119 : vector<2x8x1xi32> to vector<16x1xi32>
    %cst_58 = arith.constant 0.000000e+00 : f32
    %121 = vector.broadcast %cst_58 : f32 to vector<16x64xf32>
    %c4_i32 = arith.constant 4 : i32
    %122 = tpu.dynamic_rotate %118 by %c4_i32 dim 0 : vector<16x32xf32>, i32 -> vector<16x32xf32>
    %c-4_i32 = arith.constant -4 : i32
    %123 = vector.broadcast %c-4_i32 : i32 to vector<16x1xi32>
    %124 = arith.addi %120, %123 : vector<16x1xi32>
    %c0_i32_59 = arith.constant 0 : i32
    %125 = vector.broadcast %c0_i32_59 : i32 to vector<16x1xi32>
    %126 = arith.cmpi sge, %124, %125 : vector<16x1xi32>
    %c-4_i32_60 = arith.constant -4 : i32
    %127 = vector.broadcast %c-4_i32_60 : i32 to vector<16x1xi32>
    %128 = arith.addi %120, %127 : vector<16x1xi32>
    %c8_i32 = arith.constant 8 : i32
    %129 = vector.broadcast %c8_i32 : i32 to vector<16x1xi32>
    %130 = arith.cmpi slt, %128, %129 : vector<16x1xi32>
    %131 = arith.andi %126, %130 : vector<16x1xi1>
    %132 = arith.truncf %122 : vector<16x32xf32> to vector<16x32xbf16>
    %133 = arith.extui %131 : vector<16x1xi1> to vector<16x1xi32>
    %134 = arith.sitofp %133 : vector<16x1xi32> to vector<16x1xf32>
    %135 = arith.truncf %134 : vector<16x1xf32> to vector<16x1xbf16>
    %136 = vector.broadcast %135 : vector<16x1xbf16> to vector<16x32xbf16>
    %137 = arith.mulf %132, %136 : vector<16x32xbf16>
    %c0_61 = arith.constant 0 : index
    %c0_62 = arith.constant 0 : index
    %c0_63 = arith.constant 0 : index
    %c0_64 = arith.constant 0 : index
    %138 = vector.load %arg11[%c0_61, %c0_62, %c0_63, %c0_64] : memref<1x9x32x64xbf16, #tpu.memory_space<vmem>>, vector<1x1x32x64xbf16>
    %139 = vector.shape_cast %138 : vector<1x1x32x64xbf16> to vector<32x64xbf16>
    %cst_65 = arith.constant dense<0.000000e+00> : vector<16x64xf32>
    %140 = tpu.matmul %137, %139, %cst_65 {dimension_numbers = #tpu.dot_dimension_numbers<[1], [0], [0], [1], [0, 0, 1, 1], [], []>} : vector<16x32xbf16>, vector<32x64xbf16>, vector<16x64xf32> -> vector<16x64xf32>
    %141 = arith.addf %121, %140 : vector<16x64xf32>
    %c3_i32 = arith.constant 3 : i32
    %142 = tpu.dynamic_rotate %118 by %c3_i32 dim 0 : vector<16x32xf32>, i32 -> vector<16x32xf32>
    %c-3_i32 = arith.constant -3 : i32
    %143 = vector.broadcast %c-3_i32 : i32 to vector<16x1xi32>
    %144 = arith.addi %120, %143 : vector<16x1xi32>
    %c0_i32_66 = arith.constant 0 : i32
    %145 = vector.broadcast %c0_i32_66 : i32 to vector<16x1xi32>
    %146 = arith.cmpi sge, %144, %145 : vector<16x1xi32>
    %c-3_i32_67 = arith.constant -3 : i32
    %147 = vector.broadcast %c-3_i32_67 : i32 to vector<16x1xi32>
    %148 = arith.addi %120, %147 : vector<16x1xi32>
    %c8_i32_68 = arith.constant 8 : i32
    %149 = vector.broadcast %c8_i32_68 : i32 to vector<16x1xi32>
    %150 = arith.cmpi slt, %148, %149 : vector<16x1xi32>
    %151 = arith.andi %146, %150 : vector<16x1xi1>
    %152 = arith.truncf %142 : vector<16x32xf32> to vector<16x32xbf16>
    %153 = arith.extui %151 : vector<16x1xi1> to vector<16x1xi32>
    %154 = arith.sitofp %153 : vector<16x1xi32> to vector<16x1xf32>
    %155 = arith.truncf %154 : vector<16x1xf32> to vector<16x1xbf16>
    %156 = vector.broadcast %155 : vector<16x1xbf16> to vector<16x32xbf16>
    %157 = arith.mulf %152, %156 : vector<16x32xbf16>
    %c0_69 = arith.constant 0 : index
    %c1 = arith.constant 1 : index
    %c0_70 = arith.constant 0 : index
    %c0_71 = arith.constant 0 : index
    %158 = vector.load %arg11[%c0_69, %c1, %c0_70, %c0_71] : memref<1x9x32x64xbf16, #tpu.memory_space<vmem>>, vector<1x1x32x64xbf16>
    %159 = vector.shape_cast %158 : vector<1x1x32x64xbf16> to vector<32x64xbf16>
    %cst_72 = arith.constant dense<0.000000e+00> : vector<16x64xf32>
    %160 = tpu.matmul %157, %159, %cst_72 {dimension_numbers = #tpu.dot_dimension_numbers<[1], [0], [0], [1], [0, 0, 1, 1], [], []>} : vector<16x32xbf16>, vector<32x64xbf16>, vector<16x64xf32> -> vector<16x64xf32>
    %161 = arith.addf %141, %160 : vector<16x64xf32>
    %c2_i32 = arith.constant 2 : i32
    %162 = tpu.dynamic_rotate %118 by %c2_i32 dim 0 : vector<16x32xf32>, i32 -> vector<16x32xf32>
    %c-2_i32 = arith.constant -2 : i32
    %163 = vector.broadcast %c-2_i32 : i32 to vector<16x1xi32>
    %164 = arith.addi %120, %163 : vector<16x1xi32>
    %c0_i32_73 = arith.constant 0 : i32
    %165 = vector.broadcast %c0_i32_73 : i32 to vector<16x1xi32>
    %166 = arith.cmpi sge, %164, %165 : vector<16x1xi32>
    %c-2_i32_74 = arith.constant -2 : i32
    %167 = vector.broadcast %c-2_i32_74 : i32 to vector<16x1xi32>
    %168 = arith.addi %120, %167 : vector<16x1xi32>
    %c8_i32_75 = arith.constant 8 : i32
    %169 = vector.broadcast %c8_i32_75 : i32 to vector<16x1xi32>
    %170 = arith.cmpi slt, %168, %169 : vector<16x1xi32>
    %171 = arith.andi %166, %170 : vector<16x1xi1>
    %172 = arith.truncf %162 : vector<16x32xf32> to vector<16x32xbf16>
    %173 = arith.extui %171 : vector<16x1xi1> to vector<16x1xi32>
    %174 = arith.sitofp %173 : vector<16x1xi32> to vector<16x1xf32>
    %175 = arith.truncf %174 : vector<16x1xf32> to vector<16x1xbf16>
    %176 = vector.broadcast %175 : vector<16x1xbf16> to vector<16x32xbf16>
    %177 = arith.mulf %172, %176 : vector<16x32xbf16>
    %c0_76 = arith.constant 0 : index
    %c2 = arith.constant 2 : index
    %c0_77 = arith.constant 0 : index
    %c0_78 = arith.constant 0 : index
    %178 = vector.load %arg11[%c0_76, %c2, %c0_77, %c0_78] : memref<1x9x32x64xbf16, #tpu.memory_space<vmem>>, vector<1x1x32x64xbf16>
    %179 = vector.shape_cast %178 : vector<1x1x32x64xbf16> to vector<32x64xbf16>
    %cst_79 = arith.constant dense<0.000000e+00> : vector<16x64xf32>
    %180 = tpu.matmul %177, %179, %cst_79 {dimension_numbers = #tpu.dot_dimension_numbers<[1], [0], [0], [1], [0, 0, 1, 1], [], []>} : vector<16x32xbf16>, vector<32x64xbf16>, vector<16x64xf32> -> vector<16x64xf32>
    %181 = arith.addf %161, %180 : vector<16x64xf32>
    %c1_i32 = arith.constant 1 : i32
    %182 = tpu.dynamic_rotate %118 by %c1_i32 dim 0 : vector<16x32xf32>, i32 -> vector<16x32xf32>
    %c-1_i32 = arith.constant -1 : i32
    %183 = vector.broadcast %c-1_i32 : i32 to vector<16x1xi32>
    %184 = arith.addi %120, %183 : vector<16x1xi32>
    %c0_i32_80 = arith.constant 0 : i32
    %185 = vector.broadcast %c0_i32_80 : i32 to vector<16x1xi32>
    %186 = arith.cmpi sge, %184, %185 : vector<16x1xi32>
    %c-1_i32_81 = arith.constant -1 : i32
    %187 = vector.broadcast %c-1_i32_81 : i32 to vector<16x1xi32>
    %188 = arith.addi %120, %187 : vector<16x1xi32>
    %c8_i32_82 = arith.constant 8 : i32
    %189 = vector.broadcast %c8_i32_82 : i32 to vector<16x1xi32>
    %190 = arith.cmpi slt, %188, %189 : vector<16x1xi32>
    %191 = arith.andi %186, %190 : vector<16x1xi1>
    %192 = arith.truncf %182 : vector<16x32xf32> to vector<16x32xbf16>
    %193 = arith.extui %191 : vector<16x1xi1> to vector<16x1xi32>
    %194 = arith.sitofp %193 : vector<16x1xi32> to vector<16x1xf32>
    %195 = arith.truncf %194 : vector<16x1xf32> to vector<16x1xbf16>
    %196 = vector.broadcast %195 : vector<16x1xbf16> to vector<16x32xbf16>
    %197 = arith.mulf %192, %196 : vector<16x32xbf16>
    %c0_83 = arith.constant 0 : index
    %c3 = arith.constant 3 : index
    %c0_84 = arith.constant 0 : index
    %c0_85 = arith.constant 0 : index
    %198 = vector.load %arg11[%c0_83, %c3, %c0_84, %c0_85] : memref<1x9x32x64xbf16, #tpu.memory_space<vmem>>, vector<1x1x32x64xbf16>
    %199 = vector.shape_cast %198 : vector<1x1x32x64xbf16> to vector<32x64xbf16>
    %cst_86 = arith.constant dense<0.000000e+00> : vector<16x64xf32>
    %200 = tpu.matmul %197, %199, %cst_86 {dimension_numbers = #tpu.dot_dimension_numbers<[1], [0], [0], [1], [0, 0, 1, 1], [], []>} : vector<16x32xbf16>, vector<32x64xbf16>, vector<16x64xf32> -> vector<16x64xf32>
    %201 = arith.addf %181, %200 : vector<16x64xf32>
    %202 = arith.truncf %118 : vector<16x32xf32> to vector<16x32xbf16>
    %c0_87 = arith.constant 0 : index
    %c4 = arith.constant 4 : index
    %c0_88 = arith.constant 0 : index
    %c0_89 = arith.constant 0 : index
    %203 = vector.load %arg11[%c0_87, %c4, %c0_88, %c0_89] : memref<1x9x32x64xbf16, #tpu.memory_space<vmem>>, vector<1x1x32x64xbf16>
    %204 = vector.shape_cast %203 : vector<1x1x32x64xbf16> to vector<32x64xbf16>
    %cst_90 = arith.constant dense<0.000000e+00> : vector<16x64xf32>
    %205 = tpu.matmul %202, %204, %cst_90 {dimension_numbers = #tpu.dot_dimension_numbers<[1], [0], [0], [1], [0, 0, 1, 1], [], []>} : vector<16x32xbf16>, vector<32x64xbf16>, vector<16x64xf32> -> vector<16x64xf32>
    %206 = arith.addf %201, %205 : vector<16x64xf32>
    %c15_i32 = arith.constant 15 : i32
    %207 = tpu.dynamic_rotate %118 by %c15_i32 dim 0 : vector<16x32xf32>, i32 -> vector<16x32xf32>
    %c1_i32_91 = arith.constant 1 : i32
    %208 = vector.broadcast %c1_i32_91 : i32 to vector<16x1xi32>
    %209 = arith.addi %120, %208 : vector<16x1xi32>
    %c0_i32_92 = arith.constant 0 : i32
    %210 = vector.broadcast %c0_i32_92 : i32 to vector<16x1xi32>
    %211 = arith.cmpi sge, %209, %210 : vector<16x1xi32>
    %c1_i32_93 = arith.constant 1 : i32
    %212 = vector.broadcast %c1_i32_93 : i32 to vector<16x1xi32>
    %213 = arith.addi %120, %212 : vector<16x1xi32>
    %c8_i32_94 = arith.constant 8 : i32
    %214 = vector.broadcast %c8_i32_94 : i32 to vector<16x1xi32>
    %215 = arith.cmpi slt, %213, %214 : vector<16x1xi32>
    %216 = arith.andi %211, %215 : vector<16x1xi1>
    %217 = arith.truncf %207 : vector<16x32xf32> to vector<16x32xbf16>
    %218 = arith.extui %216 : vector<16x1xi1> to vector<16x1xi32>
    %219 = arith.sitofp %218 : vector<16x1xi32> to vector<16x1xf32>
    %220 = arith.truncf %219 : vector<16x1xf32> to vector<16x1xbf16>
    %221 = vector.broadcast %220 : vector<16x1xbf16> to vector<16x32xbf16>
    %222 = arith.mulf %217, %221 : vector<16x32xbf16>
    %c0_95 = arith.constant 0 : index
    %c5 = arith.constant 5 : index
    %c0_96 = arith.constant 0 : index
    %c0_97 = arith.constant 0 : index
    %223 = vector.load %arg11[%c0_95, %c5, %c0_96, %c0_97] : memref<1x9x32x64xbf16, #tpu.memory_space<vmem>>, vector<1x1x32x64xbf16>
    %224 = vector.shape_cast %223 : vector<1x1x32x64xbf16> to vector<32x64xbf16>
    %cst_98 = arith.constant dense<0.000000e+00> : vector<16x64xf32>
    %225 = tpu.matmul %222, %224, %cst_98 {dimension_numbers = #tpu.dot_dimension_numbers<[1], [0], [0], [1], [0, 0, 1, 1], [], []>} : vector<16x32xbf16>, vector<32x64xbf16>, vector<16x64xf32> -> vector<16x64xf32>
    %226 = arith.addf %206, %225 : vector<16x64xf32>
    %c14_i32 = arith.constant 14 : i32
    %227 = tpu.dynamic_rotate %118 by %c14_i32 dim 0 : vector<16x32xf32>, i32 -> vector<16x32xf32>
    %c2_i32_99 = arith.constant 2 : i32
    %228 = vector.broadcast %c2_i32_99 : i32 to vector<16x1xi32>
    %229 = arith.addi %120, %228 : vector<16x1xi32>
    %c0_i32_100 = arith.constant 0 : i32
    %230 = vector.broadcast %c0_i32_100 : i32 to vector<16x1xi32>
    %231 = arith.cmpi sge, %229, %230 : vector<16x1xi32>
    %c2_i32_101 = arith.constant 2 : i32
    %232 = vector.broadcast %c2_i32_101 : i32 to vector<16x1xi32>
    %233 = arith.addi %120, %232 : vector<16x1xi32>
    %c8_i32_102 = arith.constant 8 : i32
    %234 = vector.broadcast %c8_i32_102 : i32 to vector<16x1xi32>
    %235 = arith.cmpi slt, %233, %234 : vector<16x1xi32>
    %236 = arith.andi %231, %235 : vector<16x1xi1>
    %237 = arith.truncf %227 : vector<16x32xf32> to vector<16x32xbf16>
    %238 = arith.extui %236 : vector<16x1xi1> to vector<16x1xi32>
    %239 = arith.sitofp %238 : vector<16x1xi32> to vector<16x1xf32>
    %240 = arith.truncf %239 : vector<16x1xf32> to vector<16x1xbf16>
    %241 = vector.broadcast %240 : vector<16x1xbf16> to vector<16x32xbf16>
    %242 = arith.mulf %237, %241 : vector<16x32xbf16>
    %c0_103 = arith.constant 0 : index
    %c6 = arith.constant 6 : index
    %c0_104 = arith.constant 0 : index
    %c0_105 = arith.constant 0 : index
    %243 = vector.load %arg11[%c0_103, %c6, %c0_104, %c0_105] : memref<1x9x32x64xbf16, #tpu.memory_space<vmem>>, vector<1x1x32x64xbf16>
    %244 = vector.shape_cast %243 : vector<1x1x32x64xbf16> to vector<32x64xbf16>
    %cst_106 = arith.constant dense<0.000000e+00> : vector<16x64xf32>
    %245 = tpu.matmul %242, %244, %cst_106 {dimension_numbers = #tpu.dot_dimension_numbers<[1], [0], [0], [1], [0, 0, 1, 1], [], []>} : vector<16x32xbf16>, vector<32x64xbf16>, vector<16x64xf32> -> vector<16x64xf32>
    %246 = arith.addf %226, %245 : vector<16x64xf32>
    %c13_i32 = arith.constant 13 : i32
    %247 = tpu.dynamic_rotate %118 by %c13_i32 dim 0 : vector<16x32xf32>, i32 -> vector<16x32xf32>
    %c3_i32_107 = arith.constant 3 : i32
    %248 = vector.broadcast %c3_i32_107 : i32 to vector<16x1xi32>
    %249 = arith.addi %120, %248 : vector<16x1xi32>
    %c0_i32_108 = arith.constant 0 : i32
    %250 = vector.broadcast %c0_i32_108 : i32 to vector<16x1xi32>
    %251 = arith.cmpi sge, %249, %250 : vector<16x1xi32>
    %c3_i32_109 = arith.constant 3 : i32
    %252 = vector.broadcast %c3_i32_109 : i32 to vector<16x1xi32>
    %253 = arith.addi %120, %252 : vector<16x1xi32>
    %c8_i32_110 = arith.constant 8 : i32
    %254 = vector.broadcast %c8_i32_110 : i32 to vector<16x1xi32>
    %255 = arith.cmpi slt, %253, %254 : vector<16x1xi32>
    %256 = arith.andi %251, %255 : vector<16x1xi1>
    %257 = arith.truncf %247 : vector<16x32xf32> to vector<16x32xbf16>
    %258 = arith.extui %256 : vector<16x1xi1> to vector<16x1xi32>
    %259 = arith.sitofp %258 : vector<16x1xi32> to vector<16x1xf32>
    %260 = arith.truncf %259 : vector<16x1xf32> to vector<16x1xbf16>
    %261 = vector.broadcast %260 : vector<16x1xbf16> to vector<16x32xbf16>
    %262 = arith.mulf %257, %261 : vector<16x32xbf16>
    %c0_111 = arith.constant 0 : index
    %c7 = arith.constant 7 : index
    %c0_112 = arith.constant 0 : index
    %c0_113 = arith.constant 0 : index
    %263 = vector.load %arg11[%c0_111, %c7, %c0_112, %c0_113] : memref<1x9x32x64xbf16, #tpu.memory_space<vmem>>, vector<1x1x32x64xbf16>
    %264 = vector.shape_cast %263 : vector<1x1x32x64xbf16> to vector<32x64xbf16>
    %cst_114 = arith.constant dense<0.000000e+00> : vector<16x64xf32>
    %265 = tpu.matmul %262, %264, %cst_114 {dimension_numbers = #tpu.dot_dimension_numbers<[1], [0], [0], [1], [0, 0, 1, 1], [], []>} : vector<16x32xbf16>, vector<32x64xbf16>, vector<16x64xf32> -> vector<16x64xf32>
    %266 = arith.addf %246, %265 : vector<16x64xf32>
    %c12_i32 = arith.constant 12 : i32
    %267 = tpu.dynamic_rotate %118 by %c12_i32 dim 0 : vector<16x32xf32>, i32 -> vector<16x32xf32>
    %c4_i32_115 = arith.constant 4 : i32
    %268 = vector.broadcast %c4_i32_115 : i32 to vector<16x1xi32>
    %269 = arith.addi %120, %268 : vector<16x1xi32>
    %c0_i32_116 = arith.constant 0 : i32
    %270 = vector.broadcast %c0_i32_116 : i32 to vector<16x1xi32>
    %271 = arith.cmpi sge, %269, %270 : vector<16x1xi32>
    %c4_i32_117 = arith.constant 4 : i32
    %272 = vector.broadcast %c4_i32_117 : i32 to vector<16x1xi32>
    %273 = arith.addi %120, %272 : vector<16x1xi32>
    %c8_i32_118 = arith.constant 8 : i32
    %274 = vector.broadcast %c8_i32_118 : i32 to vector<16x1xi32>
    %275 = arith.cmpi slt, %273, %274 : vector<16x1xi32>
    %276 = arith.andi %271, %275 : vector<16x1xi1>
    %277 = arith.truncf %267 : vector<16x32xf32> to vector<16x32xbf16>
    %278 = arith.extui %276 : vector<16x1xi1> to vector<16x1xi32>
    %279 = arith.sitofp %278 : vector<16x1xi32> to vector<16x1xf32>
    %280 = arith.truncf %279 : vector<16x1xf32> to vector<16x1xbf16>
    %281 = vector.broadcast %280 : vector<16x1xbf16> to vector<16x32xbf16>
    %282 = arith.mulf %277, %281 : vector<16x32xbf16>
    %c0_119 = arith.constant 0 : index
    %c8 = arith.constant 8 : index
    %c0_120 = arith.constant 0 : index
    %c0_121 = arith.constant 0 : index
    %283 = vector.load %arg11[%c0_119, %c8, %c0_120, %c0_121] : memref<1x9x32x64xbf16, #tpu.memory_space<vmem>>, vector<1x1x32x64xbf16>
    %284 = vector.shape_cast %283 : vector<1x1x32x64xbf16> to vector<32x64xbf16>
    %cst_122 = arith.constant dense<0.000000e+00> : vector<16x64xf32>
    %285 = tpu.matmul %282, %284, %cst_122 {dimension_numbers = #tpu.dot_dimension_numbers<[1], [0], [0], [1], [0, 0, 1, 1], [], []>} : vector<16x32xbf16>, vector<32x64xbf16>, vector<16x64xf32> -> vector<16x64xf32>
    %286 = arith.addf %266, %285 : vector<16x64xf32>
    %287 = vector.broadcast %29 : vector<1x64xf32> to vector<16x64xf32>
    %288 = arith.addf %286, %287 : vector<16x64xf32>
    %cst_123 = arith.constant 0.000000e+00 : f32
    %289 = vector.broadcast %cst_123 : f32 to vector<16x64xf32>
    %290 = arith.maximumf %288, %289 : vector<16x64xf32>
    %291 = arith.truncf %290 : vector<16x64xf32> to vector<16x64xbf16>
    %c0_124 = arith.constant 0 : index
    %c0_125 = arith.constant 0 : index
    %c0_126 = arith.constant 0 : index
    %c0_127 = arith.constant 0 : index
    %292 = vector.load %arg13[%c0_124, %c0_125, %c0_126, %c0_127] : memref<1x1x64x32xbf16, #tpu.memory_space<vmem>>, vector<1x1x64x32xbf16>
    %293 = vector.shape_cast %292 : vector<1x1x64x32xbf16> to vector<64x32xbf16>
    %cst_128 = arith.constant dense<0.000000e+00> : vector<16x32xf32>
    %294 = tpu.matmul %291, %293, %cst_128 {dimension_numbers = #tpu.dot_dimension_numbers<[1], [0], [0], [1], [0, 0, 1, 1], [], []>} : vector<16x64xbf16>, vector<64x32xbf16>, vector<16x32xf32> -> vector<16x32xf32>
    %295 = vector.broadcast %31 : vector<1x32xf32> to vector<16x32xf32>
    %296 = arith.addf %294, %295 : vector<16x32xf32>
    %297 = arith.addf %296, %118 : vector<16x32xf32>
    %cst_129 = arith.constant dense<0.000000e+00> : vector<16xf32>
    %298 = vector.multi_reduction <add>, %297, %cst_129 [1] : vector<16x32xf32> to vector<16xf32>
    %299 = vector.shape_cast %298 : vector<16xf32> to vector<16x1xf32>
    %cst_130 = arith.constant 3.200000e+01 : f32
    %300 = vector.broadcast %cst_130 : f32 to vector<16x1xf32>
    %301 = arith.divf %299, %300 : vector<16x1xf32>
    %302 = vector.broadcast %301 : vector<16x1xf32> to vector<16x32xf32>
    %303 = arith.subf %297, %302 : vector<16x32xf32>
    %304 = arith.mulf %303, %303 : vector<16x32xf32>
    %cst_131 = arith.constant dense<0.000000e+00> : vector<16xf32>
    %305 = vector.multi_reduction <add>, %304, %cst_131 [1] : vector<16x32xf32> to vector<16xf32>
    %306 = vector.shape_cast %305 : vector<16xf32> to vector<16x1xf32>
    %cst_132 = arith.constant 3.200000e+01 : f32
    %307 = vector.broadcast %cst_132 : f32 to vector<16x1xf32>
    %308 = arith.divf %306, %307 : vector<16x1xf32>
    %309 = vector.broadcast %301 : vector<16x1xf32> to vector<16x32xf32>
    %310 = arith.subf %297, %309 : vector<16x32xf32>
    %cst_133 = arith.constant 9.99999974E-6 : f32
    %311 = vector.broadcast %cst_133 : f32 to vector<16x1xf32>
    %312 = arith.addf %308, %311 : vector<16x1xf32>
    %313 = math.rsqrt %312 : vector<16x1xf32>
    %314 = vector.broadcast %313 : vector<16x1xf32> to vector<16x32xf32>
    %315 = arith.mulf %310, %314 : vector<16x32xf32>
    %316 = vector.broadcast %25 : vector<1x32xf32> to vector<16x32xf32>
    %317 = arith.mulf %315, %316 : vector<16x32xf32>
    %318 = vector.broadcast %27 : vector<1x32xf32> to vector<16x32xf32>
    %319 = arith.addf %317, %318 : vector<16x32xf32>
    %320 = vector.broadcast %11 : vector<16x1xf32> to vector<16x32xf32>
    %321 = arith.mulf %319, %320 : vector<16x32xf32>
    %322 = vector.shape_cast %321 : vector<16x32xf32> to vector<2x8x32xf32>
    %c0_134 = arith.constant 0 : index
    %c0_135 = arith.constant 0 : index
    %c0_136 = arith.constant 0 : index
    %323 = vector.load %arg17[%c0_134, %c0_135, %c0_136] : memref<2x8x32xf32, #tpu.memory_space<vmem>>, vector<2x8x32xf32>
    tpu.vector_store %arg17[%c0_134, %c0_135, %c0_136], %322 {strides = array<i32>} : memref<2x8x32xf32, #tpu.memory_space<vmem>>, vector<2x8x32xf32>,
    return
  }
  func.func @transform_0(%arg0: i32, %arg1: i32) -> (i32, i32, i32) {
    %c0_i32 = arith.constant 0 : i32
    %c0_i32_0 = arith.constant 0 : i32
    %c0_i32_1 = arith.constant 0 : i32
    return %arg0, %c0_i32, %c0_i32_0 : i32, i32, i32
  }
  func.func @transform_1(%arg0: i32, %arg1: i32) -> (i32, i32, i32) {
    %c0_i32 = arith.constant 0 : i32
    %c0_i32_0 = arith.constant 0 : i32
    %c0_i32_1 = arith.constant 0 : i32
    return %arg0, %c0_i32, %c0_i32_0 : i32, i32, i32
  }
  func.func @transform_2(%arg0: i32, %arg1: i32) -> (i32, i32, i32) {
    %c0_i32 = arith.constant 0 : i32
    %c0_i32_0 = arith.constant 0 : i32
    %c0_i32_1 = arith.constant 0 : i32
    return %arg0, %c0_i32, %c0_i32_0 : i32, i32, i32
  }
  func.func @transform_3(%arg0: i32, %arg1: i32) -> (i32, i32, i32) {
    %c0_i32 = arith.constant 0 : i32
    %c0_i32_0 = arith.constant 0 : i32
    %c0_i32_1 = arith.constant 0 : i32
    return %arg1, %c0_i32, %c0_i32_0 : i32, i32, i32
  }
  func.func @transform_4(%arg0: i32, %arg1: i32) -> (i32, i32, i32) {
    %c0_i32 = arith.constant 0 : i32
    %c0_i32_0 = arith.constant 0 : i32
    %c0_i32_1 = arith.constant 0 : i32
    return %arg1, %c0_i32, %c0_i32_0 : i32, i32, i32
  }
  func.func @transform_5(%arg0: i32, %arg1: i32) -> (i32, i32, i32) {
    %c0_i32 = arith.constant 0 : i32
    %c0_i32_0 = arith.constant 0 : i32
    %c0_i32_1 = arith.constant 0 : i32
    return %arg1, %c0_i32, %c0_i32_0 : i32, i32, i32
  }
  func.func @transform_6(%arg0: i32, %arg1: i32) -> (i32, i32, i32) {
    %c0_i32 = arith.constant 0 : i32
    %c0_i32_0 = arith.constant 0 : i32
    %c0_i32_1 = arith.constant 0 : i32
    return %arg1, %c0_i32, %c0_i32_0 : i32, i32, i32
  }
  func.func @transform_7(%arg0: i32, %arg1: i32) -> (i32, i32, i32) {
    %c0_i32 = arith.constant 0 : i32
    %c0_i32_0 = arith.constant 0 : i32
    %c0_i32_1 = arith.constant 0 : i32
    return %arg1, %c0_i32, %c0_i32_0 : i32, i32, i32
  }
  func.func @transform_8(%arg0: i32, %arg1: i32) -> (i32, i32, i32) {
    %c0_i32 = arith.constant 0 : i32
    %c0_i32_0 = arith.constant 0 : i32
    %c0_i32_1 = arith.constant 0 : i32
    return %arg1, %c0_i32, %c0_i32_0 : i32, i32, i32
  }
  func.func @transform_9(%arg0: i32, %arg1: i32) -> (i32, i32, i32, i32) {
    %c0_i32 = arith.constant 0 : i32
    %c0_i32_0 = arith.constant 0 : i32
    %c0_i32_1 = arith.constant 0 : i32
    %c0_i32_2 = arith.constant 0 : i32
    return %arg1, %c0_i32, %c0_i32_0, %c0_i32_1 : i32, i32, i32, i32
  }
  func.func @transform_10(%arg0: i32, %arg1: i32) -> (i32, i32, i32) {
    %c0_i32 = arith.constant 0 : i32
    %c0_i32_0 = arith.constant 0 : i32
    %c0_i32_1 = arith.constant 0 : i32
    return %arg1, %c0_i32, %c0_i32_0 : i32, i32, i32
  }
  func.func @transform_11(%arg0: i32, %arg1: i32) -> (i32, i32, i32, i32) {
    %c0_i32 = arith.constant 0 : i32
    %c0_i32_0 = arith.constant 0 : i32
    %c0_i32_1 = arith.constant 0 : i32
    %c0_i32_2 = arith.constant 0 : i32
    return %arg1, %c0_i32, %c0_i32_0, %c0_i32_1 : i32, i32, i32, i32
  }
  func.func @transform_12(%arg0: i32, %arg1: i32) -> (i32, i32, i32) {
    %c0_i32 = arith.constant 0 : i32
    %c0_i32_0 = arith.constant 0 : i32
    %c0_i32_1 = arith.constant 0 : i32
    return %arg1, %c0_i32, %c0_i32_0 : i32, i32, i32
  }
  func.func @transform_13(%arg0: i32, %arg1: i32) -> (i32, i32, i32) {
    %c0_i32 = arith.constant 0 : i32
    %c0_i32_0 = arith.constant 0 : i32
    %c0_i32_1 = arith.constant 0 : i32
    return %arg1, %c0_i32, %c0_i32_0 : i32, i32, i32
  }
  func.func @transform_14(%arg0: i32, %arg1: i32) -> (i32, i32, i32) {
    %c0_i32 = arith.constant 0 : i32
    %c0_i32_0 = arith.constant 0 : i32
    %c0_i32_1 = arith.constant 0 : i32
    return %arg1, %c0_i32, %c0_i32_0 : i32, i32, i32
  }
  func.func @transform_15(%arg0: i32, %arg1: i32) -> (i32, i32, i32) {
    %c0_i32 = arith.constant 0 : i32
    %c0_i32_0 = arith.constant 0 : i32
    %c0_i32_1 = arith.constant 0 : i32
    return %arg0, %c0_i32, %c0_i32_0 : i32, i32, i32
  }
}

</mosaic_0001>

<llo_original>
// kernel: tpu_custom_call.1
$region0: #{tpu_custom_call.1}
  #allocation0 [shape = 'u32[]', space=smem, size = 0x4, offset = 0x4, fixed_abs, tag = 'smem constant byte address 0x4 - core index']
  #allocation1 [shape = 'u32[144,128]{1,0:T(1,128)}', space=vmem, size = 0x12000, scoped, tag = 'internal scratch']
  %s0 = inlined_call_operand.hbm [shape: f32[4,8,32], index: 0, kind: input, shape index: {}]
  %s1 = inlined_call_operand.hbm [shape: f32[4,1,8], index: 1, kind: input, shape index: {}]
  %s2 = inlined_call_operand.hbm [shape: f32[4,8,1], index: 2, kind: input, shape index: {}]
  %s3 = inlined_call_operand.hbm [shape: bf16[2,32,96], index: 3, kind: input, shape index: {}]
  %s4 = inlined_call_operand.hbm [shape: f32[2,1,96], index: 4, kind: input, shape index: {}]
  %s5 = inlined_call_operand.hbm [shape: bf16[2,32,32], index: 5, kind: input, shape index: {}]
  %s6 = inlined_call_operand.hbm [shape: f32[2,1,32], index: 6, kind: input, shape index: {}]
  %s7 = inlined_call_operand.hbm [shape: f32[2,1,32], index: 7, kind: input, shape index: {}]
  %s8 = inlined_call_operand.hbm [shape: f32[2,1,32], index: 8, kind: input, shape index: {}]
  %s9 = inlined_call_operand.hbm [shape: bf16[2,9,32,64], index: 9, kind: input, shape index: {}]
  %s10 = inlined_call_operand.hbm [shape: f32[2,1,64], index: 10, kind: input, shape index: {}]
  %s11 = inlined_call_operand.hbm [shape: bf16[2,1,64,32], index: 11, kind: input, shape index: {}]
  %s12 = inlined_call_operand.hbm [shape: f32[2,1,32], index: 12, kind: input, shape index: {}]
  %s13 = inlined_call_operand.hbm [shape: f32[2,1,32], index: 13, kind: input, shape index: {}]
  %s14 = inlined_call_operand.hbm [shape: f32[2,1,32], index: 14, kind: input, shape index: {}]
  %s15 = inlined_call_operand.hbm [shape: f32[4,8,32], index: 15, kind: output, shape index: {}]
  %s16 = sld [smem:[#allocation0]]
  $region157: #{tpu_custom_call.1} parent=0
    _
  %s18 = ssub.s32 1, %s16
  %s19 = scalar_select 0, %s18, %s16
  $region1: #{tpu_custom_call.1} parent=0
    #allocation2 [shape = 'u8[16384]{0}', space=vmem, size = 0x4000, scoped, tag = 'input window, operand 0']
    #allocation3 [shape = 's32[2]{0}', space=sflag, size = 0x8, scoped, tag = 'scoped memory for tpu_custom_call.1']
    #allocation4 [shape = 's32[2]{0}', space=sflag, size = 0x8, scoped, tag = 'scoped memory for tpu_custom_call.1']
    #allocation5 [shape = 'u8[2048]{0}', space=vmem, size = 0x800, scoped, tag = 'input window, operand 1']
    #allocation6 [shape = 's32[2]{0}', space=sflag, size = 0x8, scoped, tag = 'scoped memory for tpu_custom_call.1']
    #allocation7 [shape = 'u8[16384]{0}', space=vmem, size = 0x4000, scoped, tag = 'input window, operand 2']
    #allocation8 [shape = 'u8[16384]{0}', space=vmem, size = 0x4000, scoped, tag = 'input window, operand 3']
    #allocation9 [shape = 's32[2]{0}', space=sflag, size = 0x8, scoped, tag = 'scoped memory for tpu_custom_call.1']
    #allocation10 [shape = 'u8[1024]{0}', space=vmem, size = 0x400, scoped, tag = 'input window, operand 4']
    #allocation11 [shape = 'u8[16384]{0}', space=vmem, size = 0x4000, scoped, tag = 'input window, operand 5']
    #allocation12 [shape = 's32[2]{0}', space=sflag, size = 0x8, scoped, tag = 'scoped memory for tpu_custom_call.1']
    #allocation13 [shape = 'u8[1024]{0}', space=vmem, size = 0x400, scoped, tag = 'input window, operand 6']
    #allocation14 [shape = 'u8[1024]{0}', space=vmem, size = 0x400, scoped, tag = 'input window, operand 7']
    #allocation15 [shape = 's32[2]{0}', space=sflag, size = 0x8, scoped, tag = 'scoped memory for tpu_custom_call.1']
    #allocation16 [shape = 'u8[1024]{0}', space=vmem, size = 0x400, scoped, tag = 'input window, operand 8']
    #allocation17 [shape = 'u8[147456]{0}', space=vmem, size = 0x24000, scoped, tag = 'input window, operand 9']
    #allocation18 [shape = 's32[2]{0}', space=sflag, size = 0x8, scoped, tag = 'scoped memory for tpu_custom_call.1']
    #allocation19 [shape = 'u8[1024]{0}', space=vmem, size = 0x400, scoped, tag = 'input window, operand 10']
    #allocation20 [shape = 'u8[32768]{0}', space=vmem, size = 0x8000, scoped, tag = 'input window, operand 11']
    #allocation21 [shape = 's32[2]{0}', space=sflag, size = 0x8, scoped, tag = 'scoped memory for tpu_custom_call.1']
    #allocation22 [shape = 'u8[1024]{0}', space=vmem, size = 0x400, scoped, tag = 'input window, operand 12']
    #allocation23 [shape = 'u8[1024]{0}', space=vmem, size = 0x400, scoped, tag = 'input window, operand 13']
    #allocation24 [shape = 's32[2]{0}', space=sflag, size = 0x8, scoped, tag = 'scoped memory for tpu_custom_call.1']
    #allocation25 [shape = 'u8[1024]{0}', space=vmem, size = 0x400, scoped, tag = 'input window, operand 14']
    #allocation26 [shape = 'u8[16384]{0}', space=vmem, size = 0x4000, scoped, tag = 'output window, operand 0']
    %20 = vsyncpa [#allocation3], 0
    %s21 = scalar_lea.sflag [#allocation3], 1
    %22 = vsyncpa %s21, 0
    %23 = vsyncpa [#allocation6], 0
    %s24 = scalar_lea.sflag [#allocation6], 1
    %25 = vsyncpa %s24, 0
    %26 = vsyncpa [#allocation9], 0
    %s27 = scalar_lea.sflag [#allocation9], 1
    %28 = vsyncpa %s27, 0
    %29 = vsyncpa [#allocation12], 0
    %s30 = scalar_lea.sflag [#allocation12], 1
    %31 = vsyncpa %s30, 0
    %32 = vsyncpa [#allocation15], 0
    %s33 = scalar_lea.sflag [#allocation15], 1
    %34 = vsyncpa %s33, 0
    %35 = vsyncpa [#allocation18], 0
    %s36 = scalar_lea.sflag [#allocation18], 1
    %37 = vsyncpa %s36, 0
    %38 = vsyncpa [#allocation21], 0
    %s39 = scalar_lea.sflag [#allocation21], 1
    %40 = vsyncpa %s39, 0
    %41 = vsyncpa [#allocation24], 0
    %s42 = scalar_lea.sflag [#allocation24], 1
    %43 = vsyncpa %s42, 0
    %44 = vsyncpa [#allocation4], 0
    %s45 = scalar_lea.sflag [#allocation4], 1
    %46 = vsyncpa %s45, 0
    loop: start=0, step=1, limit=6
    $region2: #{tpu_custom_call.1} parent=1 // loop_pre_header
      _
    $region3: #{tpu_custom_call.1} parent=1 // loop_header
      %s48 = sphi 0, %s52
      %p49 = scmp.ge.s32.totalorder %s48, 6
      %s55 = sphi 0, %s67
      %s56 = sphi 0, %s63
      %s57 = sphi 0, %s55
      %s58 = sphi 0, %s56
      %s59 = sphi 0, %s57
      %s60 = sphi 0, %s58
      %s70 = sphi 0, %s72
      %s73 = sphi 0, %s70
      %s74 = sphi 0, %s73
      %s90 = sphi 0, %s74
      %s96 = sphi 0, %s98
      %s99 = sphi 0, %s96
      %s100 = sphi 0, %s99
      %s116 = sphi 0, %s100
      %s122 = sphi 0, %s124
      %s125 = sphi 0, %s122
      %s126 = sphi 0, %s125
      %s142 = sphi 0, %s126
      %s148 = sphi 0, %s150
      %s151 = sphi 0, %s148
      %s152 = sphi 0, %s151
      %s168 = sphi 0, %s152
      %s174 = sphi 0, %s176
      %s177 = sphi 0, %s174
      %s178 = sphi 0, %s177
      %s194 = sphi 0, %s178
      %s200 = sphi 0, %s202
      %s203 = sphi 0, %s200
      %s204 = sphi 0, %s203
      %s220 = sphi 0, %s204
      %s226 = sphi 0, %s228
      %s229 = sphi 0, %s226
      %s230 = sphi 0, %s229
      %s246 = sphi 0, %s230
      %s252 = sphi 0, %s254
      %s255 = sphi 0, %s252
      %s256 = sphi 0, %s255
      %s272 = sphi 0, %s256
      %s278 = sphi 0, %s280
      %s281 = sphi 0, %s278
      %s282 = sphi 0, %s281
      %s298 = sphi 0, %s282
      %s304 = sphi 0, %s306
      %s307 = sphi 0, %s304
      %s308 = sphi 0, %s307
      %s324 = sphi 0, %s308
      %s330 = sphi 0, %s332
      %s333 = sphi 0, %s330
      %s334 = sphi 0, %s333
      %s350 = sphi 0, %s334
      %s356 = sphi 0, %s358
      %s359 = sphi 0, %s356
      %s360 = sphi 0, %s359
      %s376 = sphi 0, %s360
      %s382 = sphi 0, %s384
      %s385 = sphi 0, %s382
      %s386 = sphi 0, %s385
      %s402 = sphi 0, %s386
      %s408 = sphi 0, %s410
      %s411 = sphi 0, %s408
      %s412 = sphi 0, %s411
      %s428 = sphi 0, %s412
      %s434 = sphi 0, %s436
      %s437 = sphi 0, %s434
      %s438 = sphi 0, %s437
      %s454 = sphi 0, %s438
      %s460 = sphi 0, %s462
      %s463 = sphi 0, %s460
      %s464 = sphi 0, %s463
      %s480 = sphi 0, %s464
    $region4: #{tpu_custom_call.1} parent=1 // loop_header_branch
      %51 = sbr.rel (%p49) target = $region8
    $region5: #{tpu_custom_call.1} parent=1 // loop_body
      %s53 = ssub.s32 %s48, 1
      %s54 = ssub.s32 %s48, 2
      %s61 = sadd.s32 1, %s56
      %p62 = scmp.ge.s32.totalorder %s61, 2
      %s63 = scalar_select %p62, 0, %s61
      %s64 = sadd.s32 1, %s55
      %s65 = scalar_select %p62, %s64, %s55
      %p66 = scmp.ge.s32.totalorder %s65, 2
      %s67 = scalar_select %p66, 0, %s65
      %s68 = ssub.s32 %s55, %s67
      %p69 = scmp.eq.s32.totalorder %s68, 0
      %s71 = sadd.s32 %s70, 1
      %s72 = scalar_select %p69, %s70, %s71
      %p75 = pneg %p69
      %p76 = scmp.eq.s32.totalorder %s48, 3
      %p77 = por %p75, %p76
      %p78 = scmp.ne.s32.totalorder %s70, %s73
      %p79 = scmp.eq.s32.totalorder %s48, 0
      %p80 = por %p78, %p79
      %p81 = scmp.ne.s32.totalorder %s70, %s73
      %p82 = scmp.eq.s32.totalorder %s53, 3
      %p83 = por %p81, %p82
      %p84 = scmp.ne.s32.totalorder %s73, %s74
      %p85 = scmp.eq.s32.totalorder %s53, 0
      %p86 = por %p84, %p85
      %p87 = scmp.ne.s32.totalorder %s73, %s74
      %p88 = scmp.eq.s32.totalorder %s54, 3
      %p89 = por %p87, %p88
      %p91 = scmp.ne.s32.totalorder %s74, %s90
      %p92 = scmp.eq.s32.totalorder %s54, 0
      %p93 = por %p91, %p92
      %s94 = ssub.s32 %s55, %s67
      %p95 = scmp.eq.s32.totalorder %s94, 0
      %s97 = sadd.s32 %s96, 1
      %s98 = scalar_select %p95, %s96, %s97
      %p101 = pneg %p95
      %p102 = scmp.eq.s32.totalorder %s48, 3
      %p103 = por %p101, %p102
      %p104 = scmp.ne.s32.totalorder %s96, %s99
      %p105 = scmp.eq.s32.totalorder %s48, 0
      %p106 = por %p104, %p105
      %p107 = scmp.ne.s32.totalorder %s96, %s99
      %p108 = scmp.eq.s32.totalorder %s53, 3
      %p109 = por %p107, %p108
      %p110 = scmp.ne.s32.totalorder %s99, %s100
      %p111 = scmp.eq.s32.totalorder %s53, 0
      %p112 = por %p110, %p111
      %p113 = scmp.ne.s32.totalorder %s99, %s100
      %p114 = scmp.eq.s32.totalorder %s54, 3
      %p115 = por %p113, %p114
      %p117 = scmp.ne.s32.totalorder %s100, %s116
      %p118 = scmp.eq.s32.totalorder %s54, 0
      %p119 = por %p117, %p118
      %s120 = ssub.s32 %s55, %s67
      %p121 = scmp.eq.s32.totalorder %s120, 0
      %s123 = sadd.s32 %s122, 1
      %s124 = scalar_select %p121, %s122, %s123
      %p127 = pneg %p121
      %p128 = scmp.eq.s32.totalorder %s48, 3
      %p129 = por %p127, %p128
      %p130 = scmp.ne.s32.totalorder %s122, %s125
      %p131 = scmp.eq.s32.totalorder %s48, 0
      %p132 = por %p130, %p131
      %p133 = scmp.ne.s32.totalorder %s122, %s125
      %p134 = scmp.eq.s32.totalorder %s53, 3
      %p135 = por %p133, %p134
      %p136 = scmp.ne.s32.totalorder %s125, %s126
      %p137 = scmp.eq.s32.totalorder %s53, 0
      %p138 = por %p136, %p137
      %p139 = scmp.ne.s32.totalorder %s125, %s126
      %p140 = scmp.eq.s32.totalorder %s54, 3
      %p141 = por %p139, %p140
      %p143 = scmp.ne.s32.totalorder %s126, %s142
      %p144 = scmp.eq.s32.totalorder %s54, 0
      %p145 = por %p143, %p144
      %s146 = ssub.s32 %s56, %s63
      %p147 = scmp.eq.s32.totalorder %s146, 0
      %s149 = sadd.s32 %s148, 1
      %s150 = scalar_select %p147, %s148, %s149
      %p153 = pneg %p147
      %p154 = scmp.eq.s32.totalorder %s48, 3
      %p155 = por %p153, %p154
      %p156 = scmp.ne.s32.totalorder %s148, %s151
      %p157 = scmp.eq.s32.totalorder %s48, 0
      %p158 = por %p156, %p157
      %p159 = scmp.ne.s32.totalorder %s148, %s151
      %p160 = scmp.eq.s32.totalorder %s53, 3
      %p161 = por %p159, %p160
      %p162 = scmp.ne.s32.totalorder %s151, %s152
      %p163 = scmp.eq.s32.totalorder %s53, 0
      %p164 = por %p162, %p163
      %p165 = scmp.ne.s32.totalorder %s151, %s152
      %p166 = scmp.eq.s32.totalorder %s54, 3
      %p167 = por %p165, %p166
      %p169 = scmp.ne.s32.totalorder %s152, %s168
      %p170 = scmp.eq.s32.totalorder %s54, 0
      %p171 = por %p169, %p170
      %s172 = ssub.s32 %s56, %s63
      %p173 = scmp.eq.s32.totalorder %s172, 0
      %s175 = sadd.s32 %s174, 1
      %s176 = scalar_select %p173, %s174, %s175
      %p179 = pneg %p173
      %p180 = scmp.eq.s32.totalorder %s48, 3
      %p181 = por %p179, %p180
      %p182 = scmp.ne.s32.totalorder %s174, %s177
      %p183 = scmp.eq.s32.totalorder %s48, 0
      %p184 = por %p182, %p183
      %p185 = scmp.ne.s32.totalorder %s174, %s177
      %p186 = scmp.eq.s32.totalorder %s53, 3
      %p187 = por %p185, %p186
      %p188 = scmp.ne.s32.totalorder %s177, %s178
      %p189 = scmp.eq.s32.totalorder %s53, 0
      %p190 = por %p188, %p189
      %p191 = scmp.ne.s32.totalorder %s177, %s178
      %p192 = scmp.eq.s32.totalorder %s54, 3
      %p193 = por %p191, %p192
      %p195 = scmp.ne.s32.totalorder %s178, %s194
      %p196 = scmp.eq.s32.totalorder %s54, 0
      %p197 = por %p195, %p196
      %s198 = ssub.s32 %s56, %s63
      %p199 = scmp.eq.s32.totalorder %s198, 0
      %s201 = sadd.s32 %s200, 1
      %s202 = scalar_select %p199, %s200, %s201
      %p205 = pneg %p199
      %p206 = scmp.eq.s32.totalorder %s48, 3
      %p207 = por %p205, %p206
      %p208 = scmp.ne.s32.totalorder %s200, %s203
      %p209 = scmp.eq.s32.totalorder %s48, 0
      %p210 = por %p208, %p209
      %p211 = scmp.ne.s32.totalorder %s200, %s203
      %p212 = scmp.eq.s32.totalorder %s53, 3
      %p213 = por %p211, %p212
      %p214 = scmp.ne.s32.totalorder %s203, %s204
      %p215 = scmp.eq.s32.totalorder %s53, 0
      %p216 = por %p214, %p215
      %p217 = scmp.ne.s32.totalorder %s203, %s204
      %p218 = scmp.eq.s32.totalorder %s54, 3
      %p219 = por %p217, %p218
      %p221 = scmp.ne.s32.totalorder %s204, %s220
      %p222 = scmp.eq.s32.totalorder %s54, 0
      %p223 = por %p221, %p222
      %s224 = ssub.s32 %s56, %s63
      %p225 = scmp.eq.s32.totalorder %s224, 0
      %s227 = sadd.s32 %s226, 1
      %s228 = scalar_select %p225, %s226, %s227
      %p231 = pneg %p225
      %p232 = scmp.eq.s32.totalorder %s48, 3
      %p233 = por %p231, %p232
      %p234 = scmp.ne.s32.totalorder %s226, %s229
      %p235 = scmp.eq.s32.totalorder %s48, 0
      %p236 = por %p234, %p235
      %p237 = scmp.ne.s32.totalorder %s226, %s229
      %p238 = scmp.eq.s32.totalorder %s53, 3
      %p239 = por %p237, %p238
      %p240 = scmp.ne.s32.totalorder %s229, %s230
      %p241 = scmp.eq.s32.totalorder %s53, 0
      %p242 = por %p240, %p241
      %p243 = scmp.ne.s32.totalorder %s229, %s230
      %p244 = scmp.eq.s32.totalorder %s54, 3
      %p245 = por %p243, %p244
      %p247 = scmp.ne.s32.totalorder %s230, %s246
      %p248 = scmp.eq.s32.totalorder %s54, 0
      %p249 = por %p247, %p248
      %s250 = ssub.s32 %s56, %s63
      %p251 = scmp.eq.s32.totalorder %s250, 0
      %s253 = sadd.s32 %s252, 1
      %s254 = scalar_select %p251, %s252, %s253
      %p257 = pneg %p251
      %p258 = scmp.eq.s32.totalorder %s48, 3
      %p259 = por %p257, %p258
      %p260 = scmp.ne.s32.totalorder %s252, %s255
      %p261 = scmp.eq.s32.totalorder %s48, 0
      %p262 = por %p260, %p261
      %p263 = scmp.ne.s32.totalorder %s252, %s255
      %p264 = scmp.eq.s32.totalorder %s53, 3
      %p265 = por %p263, %p264
      %p266 = scmp.ne.s32.totalorder %s255, %s256
      %p267 = scmp.eq.s32.totalorder %s53, 0
      %p268 = por %p266, %p267
      %p269 = scmp.ne.s32.totalorder %s255, %s256
      %p270 = scmp.eq.s32.totalorder %s54, 3
      %p271 = por %p269, %p270
      %p273 = scmp.ne.s32.totalorder %s256, %s272
      %p274 = scmp.eq.s32.totalorder %s54, 0
      %p275 = por %p273, %p274
      %s276 = ssub.s32 %s56, %s63
      %p277 = scmp.eq.s32.totalorder %s276, 0
      %s279 = sadd.s32 %s278, 1
      %s280 = scalar_select %p277, %s278, %s279
      %p283 = pneg %p277
      %p284 = scmp.eq.s32.totalorder %s48, 3
      %p285 = por %p283, %p284
      %p286 = scmp.ne.s32.totalorder %s278, %s281
      %p287 = scmp.eq.s32.totalorder %s48, 0
      %p288 = por %p286, %p287
      %p289 = scmp.ne.s32.totalorder %s278, %s281
      %p290 = scmp.eq.s32.totalorder %s53, 3
      %p291 = por %p289, %p290
      %p292 = scmp.ne.s32.totalorder %s281, %s282
      %p293 = scmp.eq.s32.totalorder %s53, 0
      %p294 = por %p292, %p293
      %p295 = scmp.ne.s32.totalorder %s281, %s282
      %p296 = scmp.eq.s32.totalorder %s54, 3
      %p297 = por %p295, %p296
      %p299 = scmp.ne.s32.totalorder %s282, %s298
      %p300 = scmp.eq.s32.totalorder %s54, 0
      %p301 = por %p299, %p300
      %s302 = ssub.s32 %s56, %s63
      %p303 = scmp.eq.s32.totalorder %s302, 0
      %s305 = sadd.s32 %s304, 1
      %s306 = scalar_select %p303, %s304, %s305
      %p309 = pneg %p303
      %p310 = scmp.eq.s32.totalorder %s48, 3
      %p311 = por %p309, %p310
      %p312 = scmp.ne.s32.totalorder %s304, %s307
      %p313 = scmp.eq.s32.totalorder %s48, 0
      %p314 = por %p312, %p313
      %p315 = scmp.ne.s32.totalorder %s304, %s307
      %p316 = scmp.eq.s32.totalorder %s53, 3
      %p317 = por %p315, %p316
      %p318 = scmp.ne.s32.totalorder %s307, %s308
      %p319 = scmp.eq.s32.totalorder %s53, 0
      %p320 = por %p318, %p319
      %p321 = scmp.ne.s32.totalorder %s307, %s308
      %p322 = scmp.eq.s32.totalorder %s54, 3
      %p323 = por %p321, %p322
      %p325 = scmp.ne.s32.totalorder %s308, %s324
      %p326 = scmp.eq.s32.totalorder %s54, 0
      %p327 = por %p325, %p326
      %s328 = ssub.s32 %s56, %s63
      %p329 = scmp.eq.s32.totalorder %s328, 0
      %s331 = sadd.s32 %s330, 1
      %s332 = scalar_select %p329, %s330, %s331
      %p335 = pneg %p329
      %p336 = scmp.eq.s32.totalorder %s48, 3
      %p337 = por %p335, %p336
      %p338 = scmp.ne.s32.totalorder %s330, %s333
      %p339 = scmp.eq.s32.totalorder %s48, 0
      %p340 = por %p338, %p339
      %p341 = scmp.ne.s32.totalorder %s330, %s333
      %p342 = scmp.eq.s32.totalorder %s53, 3
      %p343 = por %p341, %p342
      %p344 = scmp.ne.s32.totalorder %s333, %s334
      %p345 = scmp.eq.s32.totalorder %s53, 0
      %p346 = por %p344, %p345
      %p347 = scmp.ne.s32.totalorder %s333, %s334
      %p348 = scmp.eq.s32.totalorder %s54, 3
      %p349 = por %p347, %p348
      %p351 = scmp.ne.s32.totalorder %s334, %s350
      %p352 = scmp.eq.s32.totalorder %s54, 0
      %p353 = por %p351, %p352
      %s354 = ssub.s32 %s56, %s63
      %p355 = scmp.eq.s32.totalorder %s354, 0
      %s357 = sadd.s32 %s356, 1
      %s358 = scalar_select %p355, %s356, %s357
      %p361 = pneg %p355
      %p362 = scmp.eq.s32.totalorder %s48, 3
      %p363 = por %p361, %p362
      %p364 = scmp.ne.s32.totalorder %s356, %s359
      %p365 = scmp.eq.s32.totalorder %s48, 0
      %p366 = por %p364, %p365
      %p367 = scmp.ne.s32.totalorder %s356, %s359
      %p368 = scmp.eq.s32.totalorder %s53, 3
      %p369 = por %p367, %p368
      %p370 = scmp.ne.s32.totalorder %s359, %s360
      %p371 = scmp.eq.s32.totalorder %s53, 0
      %p372 = por %p370, %p371
      %p373 = scmp.ne.s32.totalorder %s359, %s360
      %p374 = scmp.eq.s32.totalorder %s54, 3
      %p375 = por %p373, %p374
      %p377 = scmp.ne.s32.totalorder %s360, %s376
      %p378 = scmp.eq.s32.totalorder %s54, 0
      %p379 = por %p377, %p378
      %s380 = ssub.s32 %s56, %s63
      %p381 = scmp.eq.s32.totalorder %s380, 0
      %s383 = sadd.s32 %s382, 1
      %s384 = scalar_select %p381, %s382, %s383
      %p387 = pneg %p381
      %p388 = scmp.eq.s32.totalorder %s48, 3
      %p389 = por %p387, %p388
      %p390 = scmp.ne.s32.totalorder %s382, %s385
      %p391 = scmp.eq.s32.totalorder %s48, 0
      %p392 = por %p390, %p391
      %p393 = scmp.ne.s32.totalorder %s382, %s385
      %p394 = scmp.eq.s32.totalorder %s53, 3
      %p395 = por %p393, %p394
      %p396 = scmp.ne.s32.totalorder %s385, %s386
      %p397 = scmp.eq.s32.totalorder %s53, 0
      %p398 = por %p396, %p397
      %p399 = scmp.ne.s32.totalorder %s385, %s386
      %p400 = scmp.eq.s32.totalorder %s54, 3
      %p401 = por %p399, %p400
      %p403 = scmp.ne.s32.totalorder %s386, %s402
      %p404 = scmp.eq.s32.totalorder %s54, 0
      %p405 = por %p403, %p404
      %s406 = ssub.s32 %s56, %s63
      %p407 = scmp.eq.s32.totalorder %s406, 0
      %s409 = sadd.s32 %s408, 1
      %s410 = scalar_select %p407, %s408, %s409
      %p413 = pneg %p407
      %p414 = scmp.eq.s32.totalorder %s48, 3
      %p415 = por %p413, %p414
      %p416 = scmp.ne.s32.totalorder %s408, %s411
      %p417 = scmp.eq.s32.totalorder %s48, 0
      %p418 = por %p416, %p417
      %p419 = scmp.ne.s32.totalorder %s408, %s411
      %p420 = scmp.eq.s32.totalorder %s53, 3
      %p421 = por %p419, %p420
      %p422 = scmp.ne.s32.totalorder %s411, %s412
      %p423 = scmp.eq.s32.totalorder %s53, 0
      %p424 = por %p422, %p423
      %p425 = scmp.ne.s32.totalorder %s411, %s412
      %p426 = scmp.eq.s32.totalorder %s54, 3
      %p427 = por %p425, %p426
      %p429 = scmp.ne.s32.totalorder %s412, %s428
      %p430 = scmp.eq.s32.totalorder %s54, 0
      %p431 = por %p429, %p430
      %s432 = ssub.s32 %s56, %s63
      %p433 = scmp.eq.s32.totalorder %s432, 0
      %s435 = sadd.s32 %s434, 1
      %s436 = scalar_select %p433, %s434, %s435
      %p439 = pneg %p433
      %p440 = scmp.eq.s32.totalorder %s48, 3
      %p441 = por %p439, %p440
      %p442 = scmp.ne.s32.totalorder %s434, %s437
      %p443 = scmp.eq.s32.totalorder %s48, 0
      %p444 = por %p442, %p443
      %p445 = scmp.ne.s32.totalorder %s434, %s437
      %p446 = scmp.eq.s32.totalorder %s53, 3
      %p447 = por %p445, %p446
      %p448 = scmp.ne.s32.totalorder %s437, %s438
      %p449 = scmp.eq.s32.totalorder %s53, 0
      %p450 = por %p448, %p449
      %p451 = scmp.ne.s32.totalorder %s437, %s438
      %p452 = scmp.eq.s32.totalorder %s54, 3
      %p453 = por %p451, %p452
      %p455 = scmp.ne.s32.totalorder %s438, %s454
      %p456 = scmp.eq.s32.totalorder %s54, 0
      %p457 = por %p455, %p456
      %s458 = ssub.s32 %s55, %s67
      %p459 = scmp.eq.s32.totalorder %s458, 0
      %s461 = sadd.s32 %s460, 1
      %s462 = scalar_select %p459, %s460, %s461
      %p465 = pneg %p459
      %p466 = scmp.eq.s32.totalorder %s48, 3
      %p467 = por %p465, %p466
      %p468 = scmp.ne.s32.totalorder %s460, %s463
      %p469 = scmp.eq.s32.totalorder %s48, 0
      %p470 = por %p468, %p469
      %p471 = scmp.ne.s32.totalorder %s460, %s463
      %p472 = scmp.eq.s32.totalorder %s53, 3
      %p473 = por %p471, %p472
      %p474 = scmp.ne.s32.totalorder %s463, %s464
      %p475 = scmp.eq.s32.totalorder %s53, 0
      %p476 = por %p474, %p475
      %p477 = scmp.ne.s32.totalorder %s463, %s464
      %p478 = scmp.eq.s32.totalorder %s54, 3
      %p479 = por %p477, %p478
      %p481 = scmp.ne.s32.totalorder %s464, %s480
      %p482 = scmp.eq.s32.totalorder %s54, 0
      %p483 = por %p481, %p482
      %p484 = scmp.le.s32.totalorder 1, %s48
      %p485 = scmp.lt.s32.totalorder %s48, 5
      %p486 = pnand %p484, %p485
      %p487 = pneg %p486
      // Predicated region
      $region9: #{tpu_custom_call.1} parent=5 // pred_check
        _
      $region10: #{tpu_custom_call.1} parent=5 // pred_check_branch
        %489 = sbr.rel (%p486) target = $region12
      $region11: #{tpu_custom_call.1} parent=5 // pred_region
        %s490 = ssub.s32 %s48, 1
      $region12: #{tpu_custom_call.1} parent=5 // pred_fallthru
        _
      %p491 = scmp.lt.s32.totalorder %s48, 4
      // Predicated region
      $region13: #{tpu_custom_call.1} parent=5 // pred_check
        %p492 = pneg %p491
      $region14: #{tpu_custom_call.1} parent=5 // pred_check_branch
        %494 = sbr.rel (%p492) target = $region16
      $region15: #{tpu_custom_call.1} parent=5 // pred_region
        // Predicated region
        $region17: #{tpu_custom_call.1} parent=15 // pred_check
          %p495 = pneg %p80
        $region18: #{tpu_custom_call.1} parent=15 // pred_check_branch
          %497 = sbr.rel (%p495) target = $region20
        $region19: #{tpu_custom_call.1} parent=15 // pred_region
          %s498 = sand.u32 %s70, 1
          %s499 = scalar_lea.sflag [#allocation3], %s498
          %s500 = sand.u32 %s70, 1
          %s501 = smul.addr %s500, 16
          %s502 = scalar_lea.vmem [#allocation2], %s501
          %s503 = smul.u32 2, %s55
          %s505 = ssub.s32 256, 256
          %506 = vsyncadd %s499, %s505
          %s507 = smul.addr %s503, 128
          %s508 = scalar_lea.hbm %s0, %s507
          %s509 = sshll.u32 %s502, 4
          %s510 = int_to_ptr.vmem [resolvable:$true] %s509
          %515 = dma.hbm_to_vmem [thread:$0]  %s508, 256, %s510, %s499, 128, 128, 8
        $region20: #{tpu_custom_call.1} parent=15 // pred_fallthru
          _
        // Predicated region
        $region21: #{tpu_custom_call.1} parent=15 // pred_check
          %p516 = pneg %p106
        $region22: #{tpu_custom_call.1} parent=15 // pred_check_branch
          %518 = sbr.rel (%p516) target = $region24
        $region23: #{tpu_custom_call.1} parent=15 // pred_region
          %s519 = sand.u32 %s48, 1
          %s520 = scalar_lea.sflag [#allocation6], %s519
          %s521 = sand.u32 %s96, 1
          %s522 = smul.addr %s521, 2
          %s523 = scalar_lea.vmem [#allocation5], %s522
          %s524 = smul.u32 2, %s55
          %s526 = ssub.s32 32, 32
          %527 = vsyncadd %s520, %s526
          %s528 = smul.addr %s524, 16
          %s529 = scalar_lea.hbm %s1, %s528
          %s530 = sshll.u32 %s523, 4
          %s531 = int_to_ptr.vmem [resolvable:$true] %s530
          %536 = dma.hbm_to_vmem [thread:$0]  %s529, 32, %s531, %s520, 16, 16, 1
        $region24: #{tpu_custom_call.1} parent=15 // pred_fallthru
          _
        // Predicated region
        $region25: #{tpu_custom_call.1} parent=15 // pred_check
          %p537 = pneg %p132
        $region26: #{tpu_custom_call.1} parent=15 // pred_check_branch
          %539 = sbr.rel (%p537) target = $region28
        $region27: #{tpu_custom_call.1} parent=15 // pred_region
          %s540 = sand.u32 %s48, 1
          %s541 = scalar_lea.sflag [#allocation6], %s540
          %s542 = sand.u32 %s122, 1
          %s543 = smul.addr %s542, 16
          %s544 = scalar_lea.vmem [#allocation7], %s543
          %s545 = smul.u32 2, %s55
          %s547 = ssub.s32 256, 256
          %548 = vsyncadd %s541, %s547
          %s549 = smul.addr %s545, 128
          %s550 = scalar_lea.hbm %s2, %s549
          %s551 = sshll.u32 %s544, 4
          %s552 = int_to_ptr.vmem [resolvable:$true] %s551
          %557 = dma.hbm_to_vmem [thread:$0]  %s550, 256, %s552, %s541, 128, 128, 8
        $region28: #{tpu_custom_call.1} parent=15 // pred_fallthru
          _
        // Predicated region
        $region29: #{tpu_custom_call.1} parent=15 // pred_check
          %p558 = pneg %p158
        $region30: #{tpu_custom_call.1} parent=15 // pred_check_branch
          %560 = sbr.rel (%p558) target = $region32
        $region31: #{tpu_custom_call.1} parent=15 // pred_region
          %s561 = sand.u32 %s48, 1
          %s562 = scalar_lea.sflag [#allocation9], %s561
          %s563 = sand.u32 %s148, 1
          %s564 = smul.addr %s563, 16
          %s565 = scalar_lea.vmem [#allocation8], %s564
          %s567 = ssub.s32 256, 256
          %568 = vsyncadd %s562, %s567
          %s569 = smul.addr %s56, 4
          %s570 = smul.addr %s569, 64
          %s571 = scalar_lea.hbm %s3, %s570
          %s572 = sshll.u32 %s565, 4
          %s573 = int_to_ptr.vmem [resolvable:$true] %s572
          %578 = dma.hbm_to_vmem [thread:$0]  %s571, 256, %s573, %s562, 64, 64, 4
        $region32: #{tpu_custom_call.1} parent=15 // pred_fallthru
          _
        // Predicated region
        $region33: #{tpu_custom_call.1} parent=15 // pred_check
          %p579 = pneg %p184
        $region34: #{tpu_custom_call.1} parent=15 // pred_check_branch
          %581 = sbr.rel (%p579) target = $region36
        $region35: #{tpu_custom_call.1} parent=15 // pred_region
          %s582 = sand.u32 %s48, 1
          %s583 = scalar_lea.sflag [#allocation9], %s582
          %s584 = sand.u32 %s174, 1
          %s585 = scalar_lea.vmem [#allocation10], %s584
          %s587 = ssub.s32 16, 16
          %588 = vsyncadd %s583, %s587
          %s589 = smul.addr %s56, 16
          %s590 = scalar_lea.hbm %s4, %s589
          %s592 = sshll.u32 %s585, 4
          %s593 = int_to_ptr.vmem [resolvable:$true] %s592
          %595 = dma.hbm_to_vmem [thread:$0]  %s590, 16, %s593, %s583
        $region36: #{tpu_custom_call.1} parent=15 // pred_fallthru
          _
        // Predicated region
        $region37: #{tpu_custom_call.1} parent=15 // pred_check
          %p596 = pneg %p210
        $region38: #{tpu_custom_call.1} parent=15 // pred_check_branch
          %598 = sbr.rel (%p596) target = $region40
        $region39: #{tpu_custom_call.1} parent=15 // pred_region
          %s599 = sand.u32 %s48, 1
          %s600 = scalar_lea.sflag [#allocation12], %s599
          %s601 = sand.u32 %s200, 1
          %s602 = smul.addr %s601, 16
          %s603 = scalar_lea.vmem [#allocation11], %s602
          %s605 = ssub.s32 256, 256
          %606 = vsyncadd %s600, %s605
          %s607 = smul.addr %s56, 4
          %s608 = smul.addr %s607, 64
          %s609 = scalar_lea.hbm %s5, %s608
          %s610 = sshll.u32 %s603, 4
          %s611 = int_to_ptr.vmem [resolvable:$true] %s610
          %616 = dma.hbm_to_vmem [thread:$0]  %s609, 256, %s611, %s600, 64, 64, 4
        $region40: #{tpu_custom_call.1} parent=15 // pred_fallthru
          _
        // Predicated region
        $region41: #{tpu_custom_call.1} parent=15 // pred_check
          %p617 = pneg %p236
        $region42: #{tpu_custom_call.1} parent=15 // pred_check_branch
          %619 = sbr.rel (%p617) target = $region44
        $region43: #{tpu_custom_call.1} parent=15 // pred_region
          %s620 = sand.u32 %s48, 1
          %s621 = scalar_lea.sflag [#allocation12], %s620
          %s622 = sand.u32 %s226, 1
          %s623 = scalar_lea.vmem [#allocation13], %s622
          %s625 = ssub.s32 16, 16
          %626 = vsyncadd %s621, %s625
          %s627 = smul.addr %s56, 16
          %s628 = scalar_lea.hbm %s6, %s627
          %s630 = sshll.u32 %s623, 4
          %s631 = int_to_ptr.vmem [resolvable:$true] %s630
          %633 = dma.hbm_to_vmem [thread:$0]  %s628, 16, %s631, %s621
        $region44: #{tpu_custom_call.1} parent=15 // pred_fallthru
          _
        // Predicated region
        $region45: #{tpu_custom_call.1} parent=15 // pred_check
          %p634 = pneg %p262
        $region46: #{tpu_custom_call.1} parent=15 // pred_check_branch
          %636 = sbr.rel (%p634) target = $region48
        $region47: #{tpu_custom_call.1} parent=15 // pred_region
          %s637 = sand.u32 %s48, 1
          %s638 = scalar_lea.sflag [#allocation15], %s637
          %s639 = sand.u32 %s252, 1
          %s640 = scalar_lea.vmem [#allocation14], %s639
          %s642 = ssub.s32 16, 16
          %643 = vsyncadd %s638, %s642
          %s644 = smul.addr %s56, 16
          %s645 = scalar_lea.hbm %s7, %s644
          %s647 = sshll.u32 %s640, 4
          %s648 = int_to_ptr.vmem [resolvable:$true] %s647
          %650 = dma.hbm_to_vmem [thread:$0]  %s645, 16, %s648, %s638
        $region48: #{tpu_custom_call.1} parent=15 // pred_fallthru
          _
        // Predicated region
        $region49: #{tpu_custom_call.1} parent=15 // pred_check
          %p651 = pneg %p288
        $region50: #{tpu_custom_call.1} parent=15 // pred_check_branch
          %653 = sbr.rel (%p651) target = $region52
        $region51: #{tpu_custom_call.1} parent=15 // pred_region
          %s654 = sand.u32 %s48, 1
          %s655 = scalar_lea.sflag [#allocation15], %s654
          %s656 = sand.u32 %s278, 1
          %s657 = scalar_lea.vmem [#allocation16], %s656
          %s659 = ssub.s32 16, 16
          %660 = vsyncadd %s655, %s659
          %s661 = smul.addr %s56, 16
          %s662 = scalar_lea.hbm %s8, %s661
          %s664 = sshll.u32 %s657, 4
          %s665 = int_to_ptr.vmem [resolvable:$true] %s664
          %667 = dma.hbm_to_vmem [thread:$0]  %s662, 16, %s665, %s655
        $region52: #{tpu_custom_call.1} parent=15 // pred_fallthru
          _
        // Predicated region
        $region53: #{tpu_custom_call.1} parent=15 // pred_check
          %p668 = pneg %p314
        $region54: #{tpu_custom_call.1} parent=15 // pred_check_branch
          %670 = sbr.rel (%p668) target = $region56
        $region55: #{tpu_custom_call.1} parent=15 // pred_region
          %s671 = sand.u32 %s48, 1
          %s672 = scalar_lea.sflag [#allocation18], %s671
          %s673 = sand.u32 %s304, 1
          %s674 = smul.addr %s673, 144
          %s675 = scalar_lea.vmem [#allocation17], %s674
          %s677 = ssub.s32 2304, 2304
          %678 = vsyncadd %s672, %s677
          %s679 = smul.addr %s56, 36
          %s680 = smul.addr %s679, 64
          %s681 = scalar_lea.hbm %s9, %s680
          %s682 = sshll.u32 %s675, 4
          %s683 = int_to_ptr.vmem [resolvable:$true] %s682
          %688 = dma.hbm_to_vmem [thread:$0]  %s681, 2304, %s683, %s672, 64, 64, 4
        $region56: #{tpu_custom_call.1} parent=15 // pred_fallthru
          _
        // Predicated region
        $region57: #{tpu_custom_call.1} parent=15 // pred_check
          %p689 = pneg %p340
        $region58: #{tpu_custom_call.1} parent=15 // pred_check_branch
          %691 = sbr.rel (%p689) target = $region60
        $region59: #{tpu_custom_call.1} parent=15 // pred_region
          %s692 = sand.u32 %s48, 1
          %s693 = scalar_lea.sflag [#allocation18], %s692
          %s694 = sand.u32 %s330, 1
          %s695 = scalar_lea.vmem [#allocation19], %s694
          %s697 = ssub.s32 16, 16
          %698 = vsyncadd %s693, %s697
          %s699 = smul.addr %s56, 16
          %s700 = scalar_lea.hbm %s10, %s699
          %s702 = sshll.u32 %s695, 4
          %s703 = int_to_ptr.vmem [resolvable:$true] %s702
          %705 = dma.hbm_to_vmem [thread:$0]  %s700, 16, %s703, %s693
        $region60: #{tpu_custom_call.1} parent=15 // pred_fallthru
          _
        // Predicated region
        $region61: #{tpu_custom_call.1} parent=15 // pred_check
          %p706 = pneg %p366
        $region62: #{tpu_custom_call.1} parent=15 // pred_check_branch
          %708 = sbr.rel (%p706) target = $region64
        $region63: #{tpu_custom_call.1} parent=15 // pred_region
          %s709 = sand.u32 %s48, 1
          %s710 = scalar_lea.sflag [#allocation21], %s709
          %s711 = sand.u32 %s356, 1
          %s712 = smul.addr %s711, 32
          %s713 = scalar_lea.vmem [#allocation20], %s712
          %s715 = ssub.s32 512, 512
          %716 = vsyncadd %s710, %s715
          %s717 = smul.addr %s56, 8
          %s718 = smul.addr %s717, 64
          %s719 = scalar_lea.hbm %s11, %s718
          %s720 = sshll.u32 %s713, 4
          %s721 = int_to_ptr.vmem [resolvable:$true] %s720
          %726 = dma.hbm_to_vmem [thread:$0]  %s719, 512, %s721, %s710, 64, 64, 4
        $region64: #{tpu_custom_call.1} parent=15 // pred_fallthru
          _
        // Predicated region
        $region65: #{tpu_custom_call.1} parent=15 // pred_check
          %p727 = pneg %p392
        $region66: #{tpu_custom_call.1} parent=15 // pred_check_branch
          %729 = sbr.rel (%p727) target = $region68
        $region67: #{tpu_custom_call.1} parent=15 // pred_region
          %s730 = sand.u32 %s48, 1
          %s731 = scalar_lea.sflag [#allocation21], %s730
          %s732 = sand.u32 %s382, 1
          %s733 = scalar_lea.vmem [#allocation22], %s732
          %s735 = ssub.s32 16, 16
          %736 = vsyncadd %s731, %s735
          %s737 = smul.addr %s56, 16
          %s738 = scalar_lea.hbm %s12, %s737
          %s740 = sshll.u32 %s733, 4
          %s741 = int_to_ptr.vmem [resolvable:$true] %s740
          %743 = dma.hbm_to_vmem [thread:$0]  %s738, 16, %s741, %s731
        $region68: #{tpu_custom_call.1} parent=15 // pred_fallthru
          _
        // Predicated region
        $region69: #{tpu_custom_call.1} parent=15 // pred_check
          %p744 = pneg %p418
        $region70: #{tpu_custom_call.1} parent=15 // pred_check_branch
          %746 = sbr.rel (%p744) target = $region72
        $region71: #{tpu_custom_call.1} parent=15 // pred_region
          %s747 = sand.u32 %s48, 1
          %s748 = scalar_lea.sflag [#allocation24], %s747
          %s749 = sand.u32 %s408, 1
          %s750 = scalar_lea.vmem [#allocation23], %s749
          %s752 = ssub.s32 16, 16
          %753 = vsyncadd %s748, %s752
          %s754 = smul.addr %s56, 16
          %s755 = scalar_lea.hbm %s13, %s754
          %s757 = sshll.u32 %s750, 4
          %s758 = int_to_ptr.vmem [resolvable:$true] %s757
          %760 = dma.hbm_to_vmem [thread:$0]  %s755, 16, %s758, %s748
        $region72: #{tpu_custom_call.1} parent=15 // pred_fallthru
          _
        // Predicated region
        $region73: #{tpu_custom_call.1} parent=15 // pred_check
          %p761 = pneg %p444
        $region74: #{tpu_custom_call.1} parent=15 // pred_check_branch
          %763 = sbr.rel (%p761) target = $region76
        $region75: #{tpu_custom_call.1} parent=15 // pred_region
          %s764 = sand.u32 %s48, 1
          %s765 = scalar_lea.sflag [#allocation24], %s764
          %s766 = sand.u32 %s434, 1
          %s767 = scalar_lea.vmem [#allocation25], %s766
          %s769 = ssub.s32 16, 16
          %770 = vsyncadd %s765, %s769
          %s771 = smul.addr %s56, 16
          %s772 = scalar_lea.hbm %s14, %s771
          %s774 = sshll.u32 %s767, 4
          %s775 = int_to_ptr.vmem [resolvable:$true] %s774
          %777 = dma.hbm_to_vmem [thread:$0]  %s772, 16, %s775, %s765
        $region76: #{tpu_custom_call.1} parent=15 // pred_fallthru
          _
      $region16: #{tpu_custom_call.1} parent=5 // pred_fallthru
        _
      %p778 = scmp.le.s32.totalorder 1, %s48
      %p779 = scmp.lt.s32.totalorder %s48, 5
      %p780 = pnand %p778, %p779
      %p781 = pneg %p780
      // Predicated region
      $region77: #{tpu_custom_call.1} parent=5 // pred_check
        _
      $region78: #{tpu_custom_call.1} parent=5 // pred_check_branch
        %783 = sbr.rel (%p780) target = $region80
      $region79: #{tpu_custom_call.1} parent=5 // pred_region
        %s784 = ssub.s32 %s48, 1
        %s785 = sand.u32 %s73, 1
        %s786 = scalar_lea.sflag [#allocation3], %s785
        %s787 = sand.u32 %s73, 1
        %s788 = smul.addr %s787, 16
        %s789 = scalar_lea.vmem [#allocation2], %s788
        // Predicated region
        $region81: #{tpu_custom_call.1} parent=79 // pred_check
          %p790 = pneg %p86
        $region82: #{tpu_custom_call.1} parent=79 // pred_check_branch
          %792 = sbr.rel (%p790) target = $region84
        $region83: #{tpu_custom_call.1} parent=79 // pred_region
          %793 = dma.done %s786, 256
        $region84: #{tpu_custom_call.1} parent=79 // pred_fallthru
          _
        %s794 = sand.u32 %s53, 1
        %s795 = scalar_lea.sflag [#allocation6], %s794
        %s796 = sand.u32 %s99, 1
        %s797 = smul.addr %s796, 2
        %s798 = scalar_lea.vmem [#allocation5], %s797
        // Predicated region
        $region85: #{tpu_custom_call.1} parent=79 // pred_check
          %p799 = pneg %p112
        $region86: #{tpu_custom_call.1} parent=79 // pred_check_branch
          %801 = sbr.rel (%p799) target = $region88
        $region87: #{tpu_custom_call.1} parent=79 // pred_region
          %802 = dma.done %s795, 32
        $region88: #{tpu_custom_call.1} parent=79 // pred_fallthru
          _
        %s803 = sand.u32 %s53, 1
        %s804 = scalar_lea.sflag [#allocation6], %s803
        %s805 = sand.u32 %s125, 1
        %s806 = smul.addr %s805, 16
        %s807 = scalar_lea.vmem [#allocation7], %s806
        // Predicated region
        $region89: #{tpu_custom_call.1} parent=79 // pred_check
          %p808 = pneg %p138
        $region90: #{tpu_custom_call.1} parent=79 // pred_check_branch
          %810 = sbr.rel (%p808) target = $region92
        $region91: #{tpu_custom_call.1} parent=79 // pred_region
          %811 = dma.done %s804, 256
        $region92: #{tpu_custom_call.1} parent=79 // pred_fallthru
          _
        %s812 = sand.u32 %s53, 1
        %s813 = scalar_lea.sflag [#allocation9], %s812
        %s814 = sand.u32 %s151, 1
        %s815 = smul.addr %s814, 16
        %s816 = scalar_lea.vmem [#allocation8], %s815
        // Predicated region
        $region93: #{tpu_custom_call.1} parent=79 // pred_check
          %p817 = pneg %p164
        $region94: #{tpu_custom_call.1} parent=79 // pred_check_branch
          %819 = sbr.rel (%p817) target = $region96
        $region95: #{tpu_custom_call.1} parent=79 // pred_region
          %820 = dma.done %s813, 256
        $region96: #{tpu_custom_call.1} parent=79 // pred_fallthru
          _
        %s821 = sand.u32 %s53, 1
        %s822 = scalar_lea.sflag [#allocation9], %s821
        %s823 = sand.u32 %s177, 1
        %s824 = scalar_lea.vmem [#allocation10], %s823
        // Predicated region
        $region97: #{tpu_custom_call.1} parent=79 // pred_check
          %p825 = pneg %p190
        $region98: #{tpu_custom_call.1} parent=79 // pred_check_branch
          %827 = sbr.rel (%p825) target = $region100
        $region99: #{tpu_custom_call.1} parent=79 // pred_region
          %828 = dma.done %s822, 16
        $region100: #{tpu_custom_call.1} parent=79 // pred_fallthru
          _
        %s829 = sand.u32 %s53, 1
        %s830 = scalar_lea.sflag [#allocation12], %s829
        %s831 = sand.u32 %s203, 1
        %s832 = smul.addr %s831, 16
        %s833 = scalar_lea.vmem [#allocation11], %s832
        // Predicated region
        $region101: #{tpu_custom_call.1} parent=79 // pred_check
          %p834 = pneg %p216
        $region102: #{tpu_custom_call.1} parent=79 // pred_check_branch
          %836 = sbr.rel (%p834) target = $region104
        $region103: #{tpu_custom_call.1} parent=79 // pred_region
          %837 = dma.done %s830, 256
        $region104: #{tpu_custom_call.1} parent=79 // pred_fallthru
          _
        %s838 = sand.u32 %s53, 1
        %s839 = scalar_lea.sflag [#allocation12], %s838
        %s840 = sand.u32 %s229, 1
        %s841 = scalar_lea.vmem [#allocation13], %s840
        // Predicated region
        $region105: #{tpu_custom_call.1} parent=79 // pred_check
          %p842 = pneg %p242
        $region106: #{tpu_custom_call.1} parent=79 // pred_check_branch
          %844 = sbr.rel (%p842) target = $region108
        $region107: #{tpu_custom_call.1} parent=79 // pred_region
          %845 = dma.done %s839, 16
        $region108: #{tpu_custom_call.1} parent=79 // pred_fallthru
          _
        %s846 = sand.u32 %s53, 1
        %s847 = scalar_lea.sflag [#allocation15], %s846
        %s848 = sand.u32 %s255, 1
        %s849 = scalar_lea.vmem [#allocation14], %s848
        // Predicated region
        $region109: #{tpu_custom_call.1} parent=79 // pred_check
          %p850 = pneg %p268
        $region110: #{tpu_custom_call.1} parent=79 // pred_check_branch
          %852 = sbr.rel (%p850) target = $region112
        $region111: #{tpu_custom_call.1} parent=79 // pred_region
          %853 = dma.done %s847, 16
        $region112: #{tpu_custom_call.1} parent=79 // pred_fallthru
          _
        %s854 = sand.u32 %s53, 1
        %s855 = scalar_lea.sflag [#allocation15], %s854
        %s856 = sand.u32 %s281, 1
        %s857 = scalar_lea.vmem [#allocation16], %s856
        // Predicated region
        $region113: #{tpu_custom_call.1} parent=79 // pred_check
          %p858 = pneg %p294
        $region114: #{tpu_custom_call.1} parent=79 // pred_check_branch
          %860 = sbr.rel (%p858) target = $region116
        $region115: #{tpu_custom_call.1} parent=79 // pred_region
          %861 = dma.done %s855, 16
        $region116: #{tpu_custom_call.1} parent=79 // pred_fallthru
          _
        %s862 = sand.u32 %s53, 1
        %s863 = scalar_lea.sflag [#allocation18], %s862
        %s864 = sand.u32 %s307, 1
        %s865 = smul.addr %s864, 144
        %s866 = scalar_lea.vmem [#allocation17], %s865
        // Predicated region
        $region117: #{tpu_custom_call.1} parent=79 // pred_check
          %p867 = pneg %p320
        $region118: #{tpu_custom_call.1} parent=79 // pred_check_branch
          %869 = sbr.rel (%p867) target = $region120
        $region119: #{tpu_custom_call.1} parent=79 // pred_region
          %870 = dma.done %s863, 2304
        $region120: #{tpu_custom_call.1} parent=79 // pred_fallthru
          _
        %s871 = sand.u32 %s53, 1
        %s872 = scalar_lea.sflag [#allocation18], %s871
        %s873 = sand.u32 %s333, 1
        %s874 = scalar_lea.vmem [#allocation19], %s873
        // Predicated region
        $region121: #{tpu_custom_call.1} parent=79 // pred_check
          %p875 = pneg %p346
        $region122: #{tpu_custom_call.1} parent=79 // pred_check_branch
          %877 = sbr.rel (%p875) target = $region124
        $region123: #{tpu_custom_call.1} parent=79 // pred_region
          %878 = dma.done %s872, 16
        $region124: #{tpu_custom_call.1} parent=79 // pred_fallthru
          _
        %s879 = sand.u32 %s53, 1
        %s880 = scalar_lea.sflag [#allocation21], %s879
        %s881 = sand.u32 %s359, 1
        %s882 = smul.addr %s881, 32
        %s883 = scalar_lea.vmem [#allocation20], %s882
        // Predicated region
        $region125: #{tpu_custom_call.1} parent=79 // pred_check
          %p884 = pneg %p372
        $region126: #{tpu_custom_call.1} parent=79 // pred_check_branch
          %886 = sbr.rel (%p884) target = $region128
        $region127: #{tpu_custom_call.1} parent=79 // pred_region
          %887 = dma.done %s880, 512
        $region128: #{tpu_custom_call.1} parent=79 // pred_fallthru
          _
        %s888 = sand.u32 %s53, 1
        %s889 = scalar_lea.sflag [#allocation21], %s888
        %s890 = sand.u32 %s385, 1
        %s891 = scalar_lea.vmem [#allocation22], %s890
        // Predicated region
        $region129: #{tpu_custom_call.1} parent=79 // pred_check
          %p892 = pneg %p398
        $region130: #{tpu_custom_call.1} parent=79 // pred_check_branch
          %894 = sbr.rel (%p892) target = $region132
        $region131: #{tpu_custom_call.1} parent=79 // pred_region
          %895 = dma.done %s889, 16
        $region132: #{tpu_custom_call.1} parent=79 // pred_fallthru
          _
        %s896 = sand.u32 %s53, 1
        %s897 = scalar_lea.sflag [#allocation24], %s896
        %s898 = sand.u32 %s411, 1
        %s899 = scalar_lea.vmem [#allocation23], %s898
        // Predicated region
        $region133: #{tpu_custom_call.1} parent=79 // pred_check
          %p900 = pneg %p424
        $region134: #{tpu_custom_call.1} parent=79 // pred_check_branch
          %902 = sbr.rel (%p900) target = $region136
        $region135: #{tpu_custom_call.1} parent=79 // pred_region
          %903 = dma.done %s897, 16
        $region136: #{tpu_custom_call.1} parent=79 // pred_fallthru
          _
        %s904 = sand.u32 %s53, 1
        %s905 = scalar_lea.sflag [#allocation24], %s904
        %s906 = sand.u32 %s437, 1
        %s907 = scalar_lea.vmem [#allocation25], %s906
        // Predicated region
        $region137: #{tpu_custom_call.1} parent=79 // pred_check
          %p908 = pneg %p450
        $region138: #{tpu_custom_call.1} parent=79 // pred_check_branch
          %910 = sbr.rel (%p908) target = $region140
        $region139: #{tpu_custom_call.1} parent=79 // pred_region
          %911 = dma.done %s905, 16
        $region140: #{tpu_custom_call.1} parent=79 // pred_fallthru
          _
        %s912 = sand.u32 %s73, 1
        %s913 = scalar_lea.sflag [#allocation3], %s912
        %s914 = sand.u32 %s73, 1
        %s915 = smul.addr %s914, 16
        %s916 = scalar_lea.vmem [#allocation2], %s915
        %p917 = pneg %p86
        %p918 = pneg %p83
        %s919 = sand.u32 %s53, 1
        %s920 = scalar_lea.sflag [#allocation6], %s919
        %s921 = sand.u32 %s99, 1
        %s922 = smul.addr %s921, 2
        %s923 = scalar_lea.vmem [#allocation5], %s922
        %p924 = pneg %p112
        %p925 = pneg %p109
        %s926 = sand.u32 %s53, 1
        %s927 = scalar_lea.sflag [#allocation6], %s926
        %s928 = sand.u32 %s125, 1
        %s929 = smul.addr %s928, 16
        %s930 = scalar_lea.vmem [#allocation7], %s929
        %p931 = pneg %p138
        %p932 = pneg %p135
        %s933 = sand.u32 %s53, 1
        %s934 = scalar_lea.sflag [#allocation9], %s933
        %s935 = sand.u32 %s151, 1
        %s936 = smul.addr %s935, 16
        %s937 = scalar_lea.vmem [#allocation8], %s936
        %p938 = pneg %p164
        %p939 = pneg %p161
        %s940 = sand.u32 %s53, 1
        %s941 = scalar_lea.sflag [#allocation9], %s940
        %s942 = sand.u32 %s177, 1
        %s943 = scalar_lea.vmem [#allocation10], %s942
        %p944 = pneg %p190
        %p945 = pneg %p187
        %s946 = sand.u32 %s53, 1
        %s947 = scalar_lea.sflag [#allocation12], %s946
        %s948 = sand.u32 %s203, 1
        %s949 = smul.addr %s948, 16
        %s950 = scalar_lea.vmem [#allocation11], %s949
        %p951 = pneg %p216
        %p952 = pneg %p213
        %s953 = sand.u32 %s53, 1
        %s954 = scalar_lea.sflag [#allocation12], %s953
        %s955 = sand.u32 %s229, 1
        %s956 = scalar_lea.vmem [#allocation13], %s955
        %p957 = pneg %p242
        %p958 = pneg %p239
        %s959 = sand.u32 %s53, 1
        %s960 = scalar_lea.sflag [#allocation15], %s959
        %s961 = sand.u32 %s255, 1
        %s962 = scalar_lea.vmem [#allocation14], %s961
        %p963 = pneg %p268
        %p964 = pneg %p265
        %s965 = sand.u32 %s53, 1
        %s966 = scalar_lea.sflag [#allocation15], %s965
        %s967 = sand.u32 %s281, 1
        %s968 = scalar_lea.vmem [#allocation16], %s967
        %p969 = pneg %p294
        %p970 = pneg %p291
        %s971 = sand.u32 %s53, 1
        %s972 = scalar_lea.sflag [#allocation18], %s971
        %s973 = sand.u32 %s307, 1
        %s974 = smul.addr %s973, 144
        %s975 = scalar_lea.vmem [#allocation17], %s974
        %p976 = pneg %p320
        %p977 = pneg %p317
        %s978 = sand.u32 %s53, 1
        %s979 = scalar_lea.sflag [#allocation18], %s978
        %s980 = sand.u32 %s333, 1
        %s981 = scalar_lea.vmem [#allocation19], %s980
        %p982 = pneg %p346
        %p983 = pneg %p343
        %s984 = sand.u32 %s53, 1
        %s985 = scalar_lea.sflag [#allocation21], %s984
        %s986 = sand.u32 %s359, 1
        %s987 = smul.addr %s986, 32
        %s988 = scalar_lea.vmem [#allocation20], %s987
        %p989 = pneg %p372
        %p990 = pneg %p369
        %s991 = sand.u32 %s53, 1
        %s992 = scalar_lea.sflag [#allocation21], %s991
        %s993 = sand.u32 %s385, 1
        %s994 = scalar_lea.vmem [#allocation22], %s993
        %p995 = pneg %p398
        %p996 = pneg %p395
        %s997 = sand.u32 %s53, 1
        %s998 = scalar_lea.sflag [#allocation24], %s997
        %s999 = sand.u32 %s411, 1
        %s1000 = scalar_lea.vmem [#allocation23], %s999
        %p1001 = pneg %p424
        %p1002 = pneg %p421
        %s1003 = sand.u32 %s53, 1
        %s1004 = scalar_lea.sflag [#allocation24], %s1003
        %s1005 = sand.u32 %s437, 1
        %s1006 = scalar_lea.vmem [#allocation25], %s1005
        %p1007 = pneg %p450
        %p1008 = pneg %p447
        %p1009 = pneg %p476
        %p1010 = pneg %p473
        %s1011 = sand.u32 %s463, 1
        %s1012 = scalar_lea.sflag [#allocation4], %s1011
        %s1013 = sand.u32 %s463, 1
        %s1014 = smul.addr %s1013, 16
        %s1015 = scalar_lea.vmem [#allocation26], %s1014
        %s1016 = smul.u32 2, %s57
        %s1017 = smul.u32 2, %s57
        %s1018 = smul.u32 2, %s57
        %s1019 = smul.u32 2, %s57
        %p1021 = scmp.eq.s32.totalorder %s58, 0
        // Predicated region
        $region141: #{tpu_custom_call.1} parent=79 // pred_check
          %p1022 = pneg %p1021
        $region142: #{tpu_custom_call.1} parent=79 // pred_check_branch
          %1024 = sbr.rel (%p1022) target = $region144
        $region143: #{tpu_custom_call.1} parent=79 // pred_region
          %v1025 = vld [vmem:[%s789] sm:$0xff]
          %v1026 = vld [vmem:[%s789 + $0x8] sm:$0xff]
          %vm1027 = vcmask 261120
          %1028 = vst.msk [vmem:[%s1015] sm:$0xff] %vm1027, %v1025
          %1029 = vst.msk [vmem:[%s1015 + $0x8] sm:$0xff] %vm1027, %v1026
        $region144: #{tpu_custom_call.1} parent=79 // pred_fallthru
          _
        %v1030 = vld [vmem:[%s1015] sm:$0xff]
        %v1031 = vld [vmem:[%s1015 + $0x8] sm:$0xff]
        %v1032 = vld [vmem:[%s798] sm:$0x1]
        %v1033 = vld [vmem:[%s798 + $0x1] sm:$0x1]
        %v1034 = vmul.f32 %v1032, -1e+09
        %v1035 = vmul.f32 %v1033, -1e+09
        %v1038 = vlaneseq
        %v1039 = vshrl.u32 %v1038, 7
        %v1040 = vsub.s32 0, %v1039
        %v1041 = vrot.slane %v1034, %v1040
        %v1042 = vlaneseq
        %v1043 = vshrl.u32 %v1042, 7
        %v1044 = vsub.s32 0, %v1043
        %v1045 = vrot.slane %v1035, %v1044
        %v1048 = vld [vmem:[%s807] sm:$0xff]
        %v1049 = vld [vmem:[%s807 + $0x8] sm:$0xff]
        %v1050 = vld [vmem:[%s816] sm:$0xf]
        %v1051 = vld [vmem:[%s816 + $0x4] sm:$0xf]
        %v1052 = vld [vmem:[%s816 + $0x8] sm:$0xf]
        %v1053 = vld [vmem:[%s816 + $0xc] sm:$0xf]
        %v1054 = vld [vmem:[%s833] sm:$0xf]
        %v1055 = vld [vmem:[%s833 + $0x4] sm:$0xf]
        %v1056 = vld [vmem:[%s833 + $0x8] sm:$0xf]
        %v1057 = vld [vmem:[%s833 + $0xc] sm:$0xf]
        %v1058 = vld [vmem:[%s824] sm:$0x1]
        %v1059 = vld [vmem:[%s841] sm:$0x1]
        %v1060 = vld [vmem:[%s849] sm:$0x1]
        %v1061 = vld [vmem:[%s857] sm:$0x1]
        %v1062 = vld [vmem:[%s899] sm:$0x1]
        %v1063 = vld [vmem:[%s907] sm:$0x1]
        %v1064 = vld [vmem:[%s874] sm:$0x1]
        %v1065 = vld [vmem:[%s891] sm:$0x1]
        %v1066 = vpack.c.bf16 %v1031, %v1030
        %v1068 = vlaneseq
        %v1069 = vshrl.u32 %v1068, 7
        %v1070 = vsub.s32 0, %v1069
        %v1071 = vrot.slane %v1058, %v1070
        %v1077 = vunpack.c.l.b16 %v1050
        %v1078 = vunpack.c.l.b16 %v1051
        %v1079 = vunpack.c.l.b16 %v1052
        %v1080 = vunpack.c.l.b16 %v1053
        %v1081 = vpack.c.b16 %v1078, %v1077
        %v1082 = vpack.c.b16 %v1080, %v1079
        %vm1085 = vcmask 261120
        %v1087 = vsel %vm1085, %v1066, 0
        %1089 = vmatprep.subr.bf16.mxu0 0
        %1090 = vmatpush1.bf16.msra.mxu0 %v1081
        %1091 = vmatprep.subr.bf16.mxu0 0
        %1092 = vmatpush1.bf16.msra.mxu0 %v1082
        %1093 = vmatprep.subr.bf16.mxu0 0
        %1094 = vmatpush1.bf16.msra.mxu0 0
        %1095 = vmatprep.subr.bf16.mxu0 0
        %1096 = vmatpush1.bf16.msra.mxu0 0
        %1097 = vmatprep.subr.bf16.mxu0 0
        %1098 = vmatpush1.bf16.msra.mxu0 0
        %1099 = vmatprep.subr.bf16.mxu0 0
        %1100 = vmatpush1.bf16.msra.mxu0 0
        %1101 = vmatprep.subr.bf16.mxu0 0
        %1102 = vmatpush1.bf16.msra.mxu0 0
        %1103 = vmatprep.subr.bf16.mxu0 0
        %1104 = vmatpush1.bf16.msra.mxu0 0
        %1105 = vmatprep.subr.bf16.mxu0 0
        %1106 = vmatpush1.bf16.msra.mxu0 0
        %1107 = vmatprep.subr.bf16.mxu0 0
        %1108 = vmatpush1.bf16.msra.mxu0 0
        %1109 = vmatprep.subr.bf16.mxu0 0
        %1110 = vmatpush1.bf16.msra.mxu0 0
        %1111 = vmatprep.subr.bf16.mxu0 0
        %1112 = vmatpush1.bf16.msra.mxu0 0
        %1113 = vmatprep.subr.bf16.mxu0 0
        %1114 = vmatpush1.bf16.msra.mxu0 0
        %1115 = vmatprep.subr.bf16.mxu0 0
        %1116 = vmatpush1.bf16.msra.mxu0 0
        %1117 = vmatprep.subr.bf16.mxu0 0
        %1118 = vmatpush1.bf16.msra.mxu0 0
        %1119 = vmatprep.subr.bf16.mxu0 0
        %1120 = vmatpush1.bf16.msra.mxu0 0
        %1121 = vmatprep.mubr.bf16.mxu0 0
        %1122 = vmatmul.mubr.bf16.gmra.mrb[0].mxu0 %v1087
        %v1123 = vpop.f32.mrb[0].mxu0
        %v1124 = vadd.f32 %v1071, %v1123
        %v1125 = vpop.f32.mrb[0].mxu0
        %v1126 = vpop.f32.mrb[0].mxu0
        %v1127 = vadd.f32 %v1071, %v1126
        %v1128 = vpop.f32.mrb[0].mxu0
        %1129 = vdwg.mxu0
        %v1130 = vmul.f32 %v1124, 0.25
        %v1131 = vmul.f32 %v1127, 0.25
        %v1132 = vpack.c.bf16 %v1130, %v1130
        %v1133 = vpack.c.bf16 %v1131, %v1131
        %v1134 = vpack.c.bf16 %v1124, %v1124
        %v1135 = vpack.c.bf16 %v1127, %v1127
        %1137 = vrot.lane.b32.xlu0 %v1134, 96
        %v1138 = vpop.permute.xlu0 %1137
        %vm1139 = vcmask 130048
        %v1141 = vsel %vm1139, %v1132, 0
        %v1144 = vsel %vm1139, %v1138, 0
        %1146 = vmatprep.subr.bf16.mxu0 0
        %1147 = vmatpush1.bf16.xpose.msra.mxu0 %v1144
        %1148 = vmatprep.subr.bf16.mxu0 0
        %1149 = vmatpush1.bf16.xpose.msra.mxu0 0
        %1150 = vmatprep.subr.bf16.mxu0 0
        %1151 = vmatpush1.bf16.xpose.msra.mxu0 0
        %1152 = vmatprep.subr.bf16.mxu0 0
        %1153 = vmatpush1.bf16.xpose.msra.mxu0 0
        %1154 = vmatprep.subr.bf16.mxu0 0
        %1155 = vmatpush1.bf16.xpose.msra.mxu0 0
        %1156 = vmatprep.subr.bf16.mxu0 0
        %1157 = vmatpush1.bf16.xpose.msra.mxu0 0
        %1158 = vmatprep.subr.bf16.mxu0 0
        %1159 = vmatpush1.bf16.xpose.msra.mxu0 0
        %1160 = vmatprep.subr.bf16.mxu0 0
        %1161 = vmatpush1.bf16.xpose.msra.mxu0 0
        %1162 = vmatprep.subr.bf16.mxu0 0
        %1163 = vmatpush1.bf16.xpose.msra.mxu0 0
        %1164 = vmatprep.subr.bf16.mxu0 0
        %1165 = vmatpush1.bf16.xpose.msra.mxu0 0
        %1166 = vmatprep.subr.bf16.mxu0 0
        %1167 = vmatpush1.bf16.xpose.msra.mxu0 0
        %1168 = vmatprep.subr.bf16.mxu0 0
        %1169 = vmatpush1.bf16.xpose.msra.mxu0 0
        %1170 = vmatprep.subr.bf16.mxu0 0
        %1171 = vmatpush1.bf16.xpose.msra.mxu0 0
        %1172 = vmatprep.subr.bf16.mxu0 0
        %1173 = vmatpush1.bf16.xpose.msra.mxu0 0
        %1174 = vmatprep.subr.bf16.mxu0 0
        %1175 = vmatpush1.bf16.xpose.msra.mxu0 0
        %1176 = vmatprep.subr.bf16.mxu0 0
        %1177 = vmatpush1.bf16.xpose.msra.mxu0 0
        %1178 = vmatprep.mubr.bf16.mxu0 0
        %1179 = vmatmul.mubr.bf16.gmra.mrb[0].mxu0 %v1141
        %v1180 = vpop.f32.mrb[0].mxu0
        %v1181 = vadd.f32 %v1041, %v1180
        %v1182 = vpop.f32.mrb[0].mxu0
        %v1183 = vpop.f32.mrb[0].mxu0
        %v1184 = vpop.f32.mrb[0].mxu0
        %1185 = vdwg.mxu0
        %1187 = vrot.lane.b32.xlu0 %v1135, 96
        %v1188 = vpop.permute.xlu0 %1187
        %v1190 = vsel %vm1139, %v1133, 0
        %v1193 = vsel %vm1139, %v1188, 0
        %1195 = vmatprep.subr.bf16.mxu0 0
        %1196 = vmatpush1.bf16.xpose.msra.mxu0 %v1193
        %1197 = vmatprep.subr.bf16.mxu0 0
        %1198 = vmatpush1.bf16.xpose.msra.mxu0 0
        %1199 = vmatprep.subr.bf16.mxu0 0
        %1200 = vmatpush1.bf16.xpose.msra.mxu0 0
        %1201 = vmatprep.subr.bf16.mxu0 0
        %1202 = vmatpush1.bf16.xpose.msra.mxu0 0
        %1203 = vmatprep.subr.bf16.mxu0 0
        %1204 = vmatpush1.bf16.xpose.msra.mxu0 0
        %1205 = vmatprep.subr.bf16.mxu0 0
        %1206 = vmatpush1.bf16.xpose.msra.mxu0 0
        %1207 = vmatprep.subr.bf16.mxu0 0
        %1208 = vmatpush1.bf16.xpose.msra.mxu0 0
        %1209 = vmatprep.subr.bf16.mxu0 0
        %1210 = vmatpush1.bf16.xpose.msra.mxu0 0
        %1211 = vmatprep.subr.bf16.mxu0 0
        %1212 = vmatpush1.bf16.xpose.msra.mxu0 0
        %1213 = vmatprep.subr.bf16.mxu0 0
        %1214 = vmatpush1.bf16.xpose.msra.mxu0 0
        %1215 = vmatprep.subr.bf16.mxu0 0
        %1216 = vmatpush1.bf16.xpose.msra.mxu0 0
        %1217 = vmatprep.subr.bf16.mxu0 0
        %1218 = vmatpush1.bf16.xpose.msra.mxu0 0
        %1219 = vmatprep.subr.bf16.mxu0 0
        %1220 = vmatpush1.bf16.xpose.msra.mxu0 0
        %1221 = vmatprep.subr.bf16.mxu0 0
        %1222 = vmatpush1.bf16.xpose.msra.mxu0 0
        %1223 = vmatprep.subr.bf16.mxu0 0
        %1224 = vmatpush1.bf16.xpose.msra.mxu0 0
        %1225 = vmatprep.subr.bf16.mxu0 0
        %1226 = vmatpush1.bf16.xpose.msra.mxu0 0
        %1227 = vmatprep.mubr.bf16.mxu0 0
        %1228 = vmatmul.mubr.bf16.gmra.mrb[0].mxu0 %v1190
        %v1229 = vpop.f32.mrb[0].mxu0
        %v1230 = vadd.f32 %v1045, %v1229
        %v1231 = vpop.f32.mrb[0].mxu0
        %v1232 = vpop.f32.mrb[0].mxu0
        %v1233 = vpop.f32.mrb[0].mxu0
        %1234 = vdwg.mxu0
        %vm1235 = vcmask 64512
        %v1236 = vsel %vm1235, %v1181, -inf
        %1237 = vmax.xlane.f32.xlu0 %v1236
        %v1238 = vpop.xlane.xlu0 %1237
        %v1239 = vsel %vm1235, %v1230, -inf
        %1240 = vmax.xlane.f32.xlu0 %v1239
        %v1241 = vpop.xlane.xlu0 %1240
        %v1242 = vsub.f32 %v1181, %v1238
        %v1243 = vsub.f32 %v1230, %v1241
        %v1244 = vmul.f32 %v1242, 1.442695
        %v1245 = vpow.pop %v1244
        %v1246 = vmul.f32 %v1243, 1.442695
        %v1247 = vpow.pop %v1246
        %v1248 = vsel %vm1235, %v1245, 0.0
        %1249 = vadd.xlane.f32.xlu0 %v1248
        %v1250 = vpop.xlane.xlu0 %1249
        %v1251 = vsel %vm1235, %v1247, 0.0
        %1252 = vadd.xlane.f32.xlu0 %v1251
        %v1253 = vpop.xlane.xlu0 %1252
        %v1254 = vrcp.pop %v1250
        %v1255 = vrcp.pop %v1253
        %v1256 = vmul.f32 %v1245, %v1254
        %v1257 = vmul.f32 %v1247, %v1255
        %v1258 = vpack.c.bf16 %v1256, %v1256
        %v1259 = vpack.c.bf16 %v1257, %v1257
        %1260 = vrot.lane.b32.xlu0 %v1134, 64
        %v1261 = vpop.permute.xlu0 %1260
        %v1263 = vsel %vm1235, %v1258, 0
        %vm1265 = vcmask 1043456
        %v1267 = vsel %vm1265, %v1261, 0
        %1269 = vmatprep.subr.bf16.mxu0 0
        %1270 = vmatpush1.bf16.msra.mxu0 %v1267
        %1271 = vmatprep.subr.bf16.mxu0 0
        %1272 = vmatpush1.bf16.msra.mxu0 0
        %1273 = vmatprep.subr.bf16.mxu0 0
        %1274 = vmatpush1.bf16.msra.mxu0 0
        %1275 = vmatprep.subr.bf16.mxu0 0
        %1276 = vmatpush1.bf16.msra.mxu0 0
        %1277 = vmatprep.subr.bf16.mxu0 0
        %1278 = vmatpush1.bf16.msra.mxu0 0
        %1279 = vmatprep.subr.bf16.mxu0 0
        %1280 = vmatpush1.bf16.msra.mxu0 0
        %1281 = vmatprep.subr.bf16.mxu0 0
        %1282 = vmatpush1.bf16.msra.mxu0 0
        %1283 = vmatprep.subr.bf16.mxu0 0
        %1284 = vmatpush1.bf16.msra.mxu0 0
        %1285 = vmatprep.subr.bf16.mxu0 0
        %1286 = vmatpush1.bf16.msra.mxu0 0
        %1287 = vmatprep.subr.bf16.mxu0 0
        %1288 = vmatpush1.bf16.msra.mxu0 0
        %1289 = vmatprep.subr.bf16.mxu0 0
        %1290 = vmatpush1.bf16.msra.mxu0 0
        %1291 = vmatprep.subr.bf16.mxu0 0
        %1292 = vmatpush1.bf16.msra.mxu0 0
        %1293 = vmatprep.subr.bf16.mxu0 0
        %1294 = vmatpush1.bf16.msra.mxu0 0
        %1295 = vmatprep.subr.bf16.mxu0 0
        %1296 = vmatpush1.bf16.msra.mxu0 0
        %1297 = vmatprep.subr.bf16.mxu0 0
        %1298 = vmatpush1.bf16.msra.mxu0 0
        %1299 = vmatprep.subr.bf16.mxu0 0
        %1300 = vmatpush1.bf16.msra.mxu0 0
        %1301 = vmatprep.mubr.bf16.mxu0 0
        %1302 = vmatmul.mubr.bf16.gmra.mrb[0].mxu0 %v1263
        %v1303 = vpop.f32.mrb[0].mxu0
        %v1304 = vadd.f32 0.0, %v1303
        %v1305 = vpop.f32.mrb[0].mxu0
        %v1306 = vpop.f32.mrb[0].mxu0
        %v1307 = vpop.f32.mrb[0].mxu0
        %1308 = vdwg.mxu0
        %1309 = vrot.lane.b32.xlu0 %v1135, 64
        %v1310 = vpop.permute.xlu0 %1309
        %v1312 = vsel %vm1235, %v1259, 0
        %v1315 = vsel %vm1265, %v1310, 0
        %1317 = vmatprep.subr.bf16.mxu0 0
        %1318 = vmatpush1.bf16.msra.mxu0 %v1315
        %1319 = vmatprep.subr.bf16.mxu0 0
        %1320 = vmatpush1.bf16.msra.mxu0 0
        %1321 = vmatprep.subr.bf16.mxu0 0
        %1322 = vmatpush1.bf16.msra.mxu0 0
        %1323 = vmatprep.subr.bf16.mxu0 0
        %1324 = vmatpush1.bf16.msra.mxu0 0
        %1325 = vmatprep.subr.bf16.mxu0 0
        %1326 = vmatpush1.bf16.msra.mxu0 0
        %1327 = vmatprep.subr.bf16.mxu0 0
        %1328 = vmatpush1.bf16.msra.mxu0 0
        %1329 = vmatprep.subr.bf16.mxu0 0
        %1330 = vmatpush1.bf16.msra.mxu0 0
        %1331 = vmatprep.subr.bf16.mxu0 0
        %1332 = vmatpush1.bf16.msra.mxu0 0
        %1333 = vmatprep.subr.bf16.mxu0 0
        %1334 = vmatpush1.bf16.msra.mxu0 0
        %1335 = vmatprep.subr.bf16.mxu0 0
        %1336 = vmatpush1.bf16.msra.mxu0 0
        %1337 = vmatprep.subr.bf16.mxu0 0
        %1338 = vmatpush1.bf16.msra.mxu0 0
        %1339 = vmatprep.subr.bf16.mxu0 0
        %1340 = vmatpush1.bf16.msra.mxu0 0
        %1341 = vmatprep.subr.bf16.mxu0 0
        %1342 = vmatpush1.bf16.msra.mxu0 0
        %1343 = vmatprep.subr.bf16.mxu0 0
        %1344 = vmatpush1.bf16.msra.mxu0 0
        %1345 = vmatprep.subr.bf16.mxu0 0
        %1346 = vmatpush1.bf16.msra.mxu0 0
        %1347 = vmatprep.subr.bf16.mxu0 0
        %1348 = vmatpush1.bf16.msra.mxu0 0
        %1349 = vmatprep.mubr.bf16.mxu0 0
        %1350 = vmatmul.mubr.bf16.gmra.mrb[0].mxu0 %v1312
        %v1351 = vpop.f32.mrb[0].mxu0
        %v1352 = vadd.f32 0.0, %v1351
        %v1353 = vpop.f32.mrb[0].mxu0
        %v1354 = vpop.f32.mrb[0].mxu0
        %v1355 = vpop.f32.mrb[0].mxu0
        %1356 = vdwg.mxu0
        %v1357 = vpack.c.bf16 %v1352, %v1304
        %1359 = vrot.lane.b32.xlu0 %v1132, 112
        %v1360 = vpop.permute.xlu0 %1359
        %1361 = vrot.lane.b32.xlu0 %v1134, 80
        %v1362 = vpop.permute.xlu0 %1361
        %v1364 = vsel %vm1139, %v1360, 0
        %v1367 = vsel %vm1139, %v1362, 0
        %1369 = vmatprep.subr.bf16.mxu0 0
        %1370 = vmatpush1.bf16.xpose.msra.mxu0 %v1367
        %1371 = vmatprep.subr.bf16.mxu0 0
        %1372 = vmatpush1.bf16.xpose.msra.mxu0 0
        %1373 = vmatprep.subr.bf16.mxu0 0
        %1374 = vmatpush1.bf16.xpose.msra.mxu0 0
        %1375 = vmatprep.subr.bf16.mxu0 0
        %1376 = vmatpush1.bf16.xpose.msra.mxu0 0
        %1377 = vmatprep.subr.bf16.mxu0 0
        %1378 = vmatpush1.bf16.xpose.msra.mxu0 0
        %1379 = vmatprep.subr.bf16.mxu0 0
        %1380 = vmatpush1.bf16.xpose.msra.mxu0 0
        %1381 = vmatprep.subr.bf16.mxu0 0
        %1382 = vmatpush1.bf16.xpose.msra.mxu0 0
        %1383 = vmatprep.subr.bf16.mxu0 0
        %1384 = vmatpush1.bf16.xpose.msra.mxu0 0
        %1385 = vmatprep.subr.bf16.mxu0 0
        %1386 = vmatpush1.bf16.xpose.msra.mxu0 0
        %1387 = vmatprep.subr.bf16.mxu0 0
        %1388 = vmatpush1.bf16.xpose.msra.mxu0 0
        %1389 = vmatprep.subr.bf16.mxu0 0
        %1390 = vmatpush1.bf16.xpose.msra.mxu0 0
        %1391 = vmatprep.subr.bf16.mxu0 0
        %1392 = vmatpush1.bf16.xpose.msra.mxu0 0
        %1393 = vmatprep.subr.bf16.mxu0 0
        %1394 = vmatpush1.bf16.xpose.msra.mxu0 0
        %1395 = vmatprep.subr.bf16.mxu0 0
        %1396 = vmatpush1.bf16.xpose.msra.mxu0 0
        %1397 = vmatprep.subr.bf16.mxu0 0
        %1398 = vmatpush1.bf16.xpose.msra.mxu0 0
        %1399 = vmatprep.subr.bf16.mxu0 0
        %1400 = vmatpush1.bf16.xpose.msra.mxu0 0
        %1401 = vmatprep.mubr.bf16.mxu0 0
        %1402 = vmatmul.mubr.bf16.gmra.mrb[0].mxu0 %v1364
        %v1403 = vpop.f32.mrb[0].mxu0
        %v1404 = vadd.f32 %v1041, %v1403
        %v1405 = vpop.f32.mrb[0].mxu0
        %v1406 = vpop.f32.mrb[0].mxu0
        %v1407 = vpop.f32.mrb[0].mxu0
        %1408 = vdwg.mxu0
        %1410 = vrot.lane.b32.xlu0 %v1133, 112
        %v1411 = vpop.permute.xlu0 %1410
        %1412 = vrot.lane.b32.xlu0 %v1135, 80
        %v1413 = vpop.permute.xlu0 %1412
        %v1415 = vsel %vm1139, %v1411, 0
        %v1418 = vsel %vm1139, %v1413, 0
        %1420 = vmatprep.subr.bf16.mxu0 0
        %1421 = vmatpush1.bf16.xpose.msra.mxu0 %v1418
        %1422 = vmatprep.subr.bf16.mxu0 0
        %1423 = vmatpush1.bf16.xpose.msra.mxu0 0
        %1424 = vmatprep.subr.bf16.mxu0 0
        %1425 = vmatpush1.bf16.xpose.msra.mxu0 0
        %1426 = vmatprep.subr.bf16.mxu0 0
        %1427 = vmatpush1.bf16.xpose.msra.mxu0 0
        %1428 = vmatprep.subr.bf16.mxu0 0
        %1429 = vmatpush1.bf16.xpose.msra.mxu0 0
        %1430 = vmatprep.subr.bf16.mxu0 0
        %1431 = vmatpush1.bf16.xpose.msra.mxu0 0
        %1432 = vmatprep.subr.bf16.mxu0 0
        %1433 = vmatpush1.bf16.xpose.msra.mxu0 0
        %1434 = vmatprep.subr.bf16.mxu0 0
        %1435 = vmatpush1.bf16.xpose.msra.mxu0 0
        %1436 = vmatprep.subr.bf16.mxu0 0
        %1437 = vmatpush1.bf16.xpose.msra.mxu0 0
        %1438 = vmatprep.subr.bf16.mxu0 0
        %1439 = vmatpush1.bf16.xpose.msra.mxu0 0
        %1440 = vmatprep.subr.bf16.mxu0 0
        %1441 = vmatpush1.bf16.xpose.msra.mxu0 0
        %1442 = vmatprep.subr.bf16.mxu0 0
        %1443 = vmatpush1.bf16.xpose.msra.mxu0 0
        %1444 = vmatprep.subr.bf16.mxu0 0
        %1445 = vmatpush1.bf16.xpose.msra.mxu0 0
        %1446 = vmatprep.subr.bf16.mxu0 0
        %1447 = vmatpush1.bf16.xpose.msra.mxu0 0
        %1448 = vmatprep.subr.bf16.mxu0 0
        %1449 = vmatpush1.bf16.xpose.msra.mxu0 0
        %1450 = vmatprep.subr.bf16.mxu0 0
        %1451 = vmatpush1.bf16.xpose.msra.mxu0 0
        %1452 = vmatprep.mubr.bf16.mxu0 0
        %1453 = vmatmul.mubr.bf16.gmra.mrb[0].mxu0 %v1415
        %v1454 = vpop.f32.mrb[0].mxu0
        %v1455 = vadd.f32 %v1045, %v1454
        %v1456 = vpop.f32.mrb[0].mxu0
        %v1457 = vpop.f32.mrb[0].mxu0
        %v1458 = vpop.f32.mrb[0].mxu0
        %1459 = vdwg.mxu0
        %v1460 = vsel %vm1235, %v1404, -inf
        %1461 = vmax.xlane.f32.xlu0 %v1460
        %v1462 = vpop.xlane.xlu0 %1461
        %v1463 = vsel %vm1235, %v1455, -inf
        %1464 = vmax.xlane.f32.xlu0 %v1463
        %v1465 = vpop.xlane.xlu0 %1464
        %v1466 = vsub.f32 %v1404, %v1462
        %v1467 = vsub.f32 %v1455, %v1465
        %v1468 = vmul.f32 %v1466, 1.442695
        %v1469 = vpow.pop %v1468
        %v1470 = vmul.f32 %v1467, 1.442695
        %v1471 = vpow.pop %v1470
        %v1472 = vsel %vm1235, %v1469, 0.0
        %1473 = vadd.xlane.f32.xlu0 %v1472
        %v1474 = vpop.xlane.xlu0 %1473
        %v1475 = vsel %vm1235, %v1471, 0.0
        %1476 = vadd.xlane.f32.xlu0 %v1475
        %v1477 = vpop.xlane.xlu0 %1476
        %v1478 = vrcp.pop %v1474
        %v1479 = vrcp.pop %v1477
        %v1480 = vmul.f32 %v1469, %v1478
        %v1481 = vmul.f32 %v1471, %v1479
        %v1482 = vpack.c.bf16 %v1480, %v1480
        %v1483 = vpack.c.bf16 %v1481, %v1481
        %1484 = vrot.lane.b32.xlu0 %v1134, 48
        %v1485 = vpop.permute.xlu0 %1484
        %v1487 = vsel %vm1235, %v1482, 0
        %v1490 = vsel %vm1265, %v1485, 0
        %1492 = vmatprep.subr.bf16.mxu0 0
        %1493 = vmatpush1.bf16.msra.mxu0 %v1490
        %1494 = vmatprep.subr.bf16.mxu0 0
        %1495 = vmatpush1.bf16.msra.mxu0 0
        %1496 = vmatprep.subr.bf16.mxu0 0
        %1497 = vmatpush1.bf16.msra.mxu0 0
        %1498 = vmatprep.subr.bf16.mxu0 0
        %1499 = vmatpush1.bf16.msra.mxu0 0
        %1500 = vmatprep.subr.bf16.mxu0 0
        %1501 = vmatpush1.bf16.msra.mxu0 0
        %1502 = vmatprep.subr.bf16.mxu0 0
        %1503 = vmatpush1.bf16.msra.mxu0 0
        %1504 = vmatprep.subr.bf16.mxu0 0
        %1505 = vmatpush1.bf16.msra.mxu0 0
        %1506 = vmatprep.subr.bf16.mxu0 0
        %1507 = vmatpush1.bf16.msra.mxu0 0
        %1508 = vmatprep.subr.bf16.mxu0 0
        %1509 = vmatpush1.bf16.msra.mxu0 0
        %1510 = vmatprep.subr.bf16.mxu0 0
        %1511 = vmatpush1.bf16.msra.mxu0 0
        %1512 = vmatprep.subr.bf16.mxu0 0
        %1513 = vmatpush1.bf16.msra.mxu0 0
        %1514 = vmatprep.subr.bf16.mxu0 0
        %1515 = vmatpush1.bf16.msra.mxu0 0
        %1516 = vmatprep.subr.bf16.mxu0 0
        %1517 = vmatpush1.bf16.msra.mxu0 0
        %1518 = vmatprep.subr.bf16.mxu0 0
        %1519 = vmatpush1.bf16.msra.mxu0 0
        %1520 = vmatprep.subr.bf16.mxu0 0
        %1521 = vmatpush1.bf16.msra.mxu0 0
        %1522 = vmatprep.subr.bf16.mxu0 0
        %1523 = vmatpush1.bf16.msra.mxu0 0
        %1524 = vmatprep.mubr.bf16.mxu0 0
        %1525 = vmatmul.mubr.bf16.gmra.mrb[0].mxu0 %v1487
        %v1526 = vpop.f32.mrb[0].mxu0
        %v1527 = vadd.f32 0.0, %v1526
        %v1528 = vpop.f32.mrb[0].mxu0
        %v1529 = vpop.f32.mrb[0].mxu0
        %v1530 = vpop.f32.mrb[0].mxu0
        %1531 = vdwg.mxu0
        %1532 = vrot.lane.b32.xlu0 %v1135, 48
        %v1533 = vpop.permute.xlu0 %1532
        %v1535 = vsel %vm1235, %v1483, 0
        %v1538 = vsel %vm1265, %v1533, 0
        %1540 = vmatprep.subr.bf16.mxu0 0
        %1541 = vmatpush1.bf16.msra.mxu0 %v1538
        %1542 = vmatprep.subr.bf16.mxu0 0
        %1543 = vmatpush1.bf16.msra.mxu0 0
        %1544 = vmatprep.subr.bf16.mxu0 0
        %1545 = vmatpush1.bf16.msra.mxu0 0
        %1546 = vmatprep.subr.bf16.mxu0 0
        %1547 = vmatpush1.bf16.msra.mxu0 0
        %1548 = vmatprep.subr.bf16.mxu0 0
        %1549 = vmatpush1.bf16.msra.mxu0 0
        %1550 = vmatprep.subr.bf16.mxu0 0
        %1551 = vmatpush1.bf16.msra.mxu0 0
        %1552 = vmatprep.subr.bf16.mxu0 0
        %1553 = vmatpush1.bf16.msra.mxu0 0
        %1554 = vmatprep.subr.bf16.mxu0 0
        %1555 = vmatpush1.bf16.msra.mxu0 0
        %1556 = vmatprep.subr.bf16.mxu0 0
        %1557 = vmatpush1.bf16.msra.mxu0 0
        %1558 = vmatprep.subr.bf16.mxu0 0
        %1559 = vmatpush1.bf16.msra.mxu0 0
        %1560 = vmatprep.subr.bf16.mxu0 0
        %1561 = vmatpush1.bf16.msra.mxu0 0
        %1562 = vmatprep.subr.bf16.mxu0 0
        %1563 = vmatpush1.bf16.msra.mxu0 0
        %1564 = vmatprep.subr.bf16.mxu0 0
        %1565 = vmatpush1.bf16.msra.mxu0 0
        %1566 = vmatprep.subr.bf16.mxu0 0
        %1567 = vmatpush1.bf16.msra.mxu0 0
        %1568 = vmatprep.subr.bf16.mxu0 0
        %1569 = vmatpush1.bf16.msra.mxu0 0
        %1570 = vmatprep.subr.bf16.mxu0 0
        %1571 = vmatpush1.bf16.msra.mxu0 0
        %1572 = vmatprep.mubr.bf16.mxu0 0
        %1573 = vmatmul.mubr.bf16.gmra.mrb[0].mxu0 %v1535
        %v1574 = vpop.f32.mrb[0].mxu0
        %v1575 = vadd.f32 0.0, %v1574
        %v1576 = vpop.f32.mrb[0].mxu0
        %v1577 = vpop.f32.mrb[0].mxu0
        %v1578 = vpop.f32.mrb[0].mxu0
        %1579 = vdwg.mxu0
        %v1580 = vpack.c.bf16 %v1575, %v1527
        %v1583 = vunpack.c.l.b16 %v1056
        %v1584 = vunpack.c.l.b16 %v1057
        %v1585 = vpack.c.b16 %v1584, %v1583
        %v1588 = vsel %vm1139, %v1580, 0
        %1590 = vmatprep.subr.bf16.mxu0 0
        %1591 = vmatpush1.bf16.msra.mxu0 %v1585
        %1592 = vmatprep.subr.bf16.mxu0 0
        %1593 = vmatpush1.bf16.msra.mxu0 0
        %1594 = vmatprep.subr.bf16.mxu0 0
        %1595 = vmatpush1.bf16.msra.mxu0 0
        %1596 = vmatprep.subr.bf16.mxu0 0
        %1597 = vmatpush1.bf16.msra.mxu0 0
        %1598 = vmatprep.subr.bf16.mxu0 0
        %1599 = vmatpush1.bf16.msra.mxu0 0
        %1600 = vmatprep.subr.bf16.mxu0 0
        %1601 = vmatpush1.bf16.msra.mxu0 0
        %1602 = vmatprep.subr.bf16.mxu0 0
        %1603 = vmatpush1.bf16.msra.mxu0 0
        %1604 = vmatprep.subr.bf16.mxu0 0
        %1605 = vmatpush1.bf16.msra.mxu0 0
        %1606 = vmatprep.subr.bf16.mxu0 0
        %1607 = vmatpush1.bf16.msra.mxu0 0
        %1608 = vmatprep.subr.bf16.mxu0 0
        %1609 = vmatpush1.bf16.msra.mxu0 0
        %1610 = vmatprep.subr.bf16.mxu0 0
        %1611 = vmatpush1.bf16.msra.mxu0 0
        %1612 = vmatprep.subr.bf16.mxu0 0
        %1613 = vmatpush1.bf16.msra.mxu0 0
        %1614 = vmatprep.subr.bf16.mxu0 0
        %1615 = vmatpush1.bf16.msra.mxu0 0
        %1616 = vmatprep.subr.bf16.mxu0 0
        %1617 = vmatpush1.bf16.msra.mxu0 0
        %1618 = vmatprep.subr.bf16.mxu0 0
        %1619 = vmatpush1.bf16.msra.mxu0 0
        %1620 = vmatprep.subr.bf16.mxu0 0
        %1621 = vmatpush1.bf16.msra.mxu0 0
        %1622 = vmatprep.mubr.bf16.mxu0 0
        %1623 = vmatmul.mubr.bf16.gmra.mrb[0].mxu0 %v1588
        %v1624 = vpop.f32.mrb[0].mxu0
        %v1625 = vadd.f32 0.0, %v1624
        %v1626 = vpop.f32.mrb[0].mxu0
        %v1627 = vpop.f32.mrb[0].mxu0
        %v1628 = vadd.f32 0.0, %v1627
        %v1629 = vpop.f32.mrb[0].mxu0
        %1630 = vdwg.mxu0
        %v1633 = vunpack.c.l.b16 %v1054
        %v1634 = vunpack.c.l.b16 %v1055
        %v1635 = vpack.c.b16 %v1634, %v1633
        %v1638 = vsel %vm1139, %v1357, 0
        %1640 = vmatprep.subr.bf16.mxu0 0
        %1641 = vmatpush1.bf16.msra.mxu0 %v1635
        %1642 = vmatprep.subr.bf16.mxu0 0
        %1643 = vmatpush1.bf16.msra.mxu0 0
        %1644 = vmatprep.subr.bf16.mxu0 0
        %1645 = vmatpush1.bf16.msra.mxu0 0
        %1646 = vmatprep.subr.bf16.mxu0 0
        %1647 = vmatpush1.bf16.msra.mxu0 0
        %1648 = vmatprep.subr.bf16.mxu0 0
        %1649 = vmatpush1.bf16.msra.mxu0 0
        %1650 = vmatprep.subr.bf16.mxu0 0
        %1651 = vmatpush1.bf16.msra.mxu0 0
        %1652 = vmatprep.subr.bf16.mxu0 0
        %1653 = vmatpush1.bf16.msra.mxu0 0
        %1654 = vmatprep.subr.bf16.mxu0 0
        %1655 = vmatpush1.bf16.msra.mxu0 0
        %1656 = vmatprep.subr.bf16.mxu0 0
        %1657 = vmatpush1.bf16.msra.mxu0 0
        %1658 = vmatprep.subr.bf16.mxu0 0
        %1659 = vmatpush1.bf16.msra.mxu0 0
        %1660 = vmatprep.subr.bf16.mxu0 0
        %1661 = vmatpush1.bf16.msra.mxu0 0
        %1662 = vmatprep.subr.bf16.mxu0 0
        %1663 = vmatpush1.bf16.msra.mxu0 0
        %1664 = vmatprep.subr.bf16.mxu0 0
        %1665 = vmatpush1.bf16.msra.mxu0 0
        %1666 = vmatprep.subr.bf16.mxu0 0
        %1667 = vmatpush1.bf16.msra.mxu0 0
        %1668 = vmatprep.subr.bf16.mxu0 0
        %1669 = vmatpush1.bf16.msra.mxu0 0
        %1670 = vmatprep.subr.bf16.mxu0 0
        %1671 = vmatpush1.bf16.msra.mxu0 0
        %1672 = vmatprep.mubr.bf16.mxu0 0
        %1673 = vmatmul.mubr.bf16.gmra.mrb[0].mxu0 %v1638
        %v1674 = vpop.f32.mrb[0].mxu0
        %v1675 = vadd.f32 %v1625, %v1674
        %v1676 = vpop.f32.mrb[0].mxu0
        %v1677 = vpop.f32.mrb[0].mxu0
        %v1678 = vadd.f32 %v1628, %v1677
        %v1679 = vpop.f32.mrb[0].mxu0
        %1680 = vdwg.mxu0
        %v1682 = vlaneseq
        %v1683 = vshrl.u32 %v1682, 7
        %v1684 = vsub.s32 0, %v1683
        %v1685 = vrot.slane %v1059, %v1684
        %v1687 = vadd.f32 %v1675, %v1685
        %v1688 = vadd.f32 %v1678, %v1685
        %v1689 = vadd.f32 %v1687, %v1030
        %v1690 = vadd.f32 %v1688, %v1031
        %v1691 = vsel %vm1085, %v1689, 0.0
        %1692 = vadd.xlane.f32.xlu0 %v1691
        %v1693 = vpop.xlane.xlu0 %1692
        %v1694 = vsel %vm1085, %v1690, 0.0
        %1695 = vadd.xlane.f32.xlu0 %v1694
        %v1696 = vpop.xlane.xlu0 %1695
        %v1697 = vrcp.pop 32.0
        %v1698 = vmul.f32 %v1693, %v1697
        %v1699 = vmul.f32 %v1696, %v1697
        %v1700 = vsub.f32 %v1689, %v1698
        %v1701 = vsub.f32 %v1690, %v1699
        %v1702 = vmul.f32 %v1700, %v1700
        %v1703 = vmul.f32 %v1701, %v1701
        %v1704 = vsel %vm1085, %v1702, 0.0
        %1705 = vadd.xlane.f32.xlu0 %v1704
        %v1706 = vpop.xlane.xlu0 %1705
        %v1707 = vsel %vm1085, %v1703, 0.0
        %1708 = vadd.xlane.f32.xlu0 %v1707
        %v1709 = vpop.xlane.xlu0 %1708
        %v1710 = vmul.f32 %v1706, %v1697
        %v1711 = vmul.f32 %v1709, %v1697
        %v1712 = vadd.f32 %v1710, 1e-05
        %v1713 = vadd.f32 %v1711, 1e-05
        %v1714 = vrsqrt.pop %v1712
        %v1715 = vrsqrt.pop %v1713
        %v1716 = vmul.f32 %v1700, %v1714
        %v1717 = vmul.f32 %v1701, %v1715
        %v1719 = vlaneseq
        %v1720 = vshrl.u32 %v1719, 7
        %v1721 = vsub.s32 0, %v1720
        %v1722 = vrot.slane %v1060, %v1721
        %v1724 = vmul.f32 %v1716, %v1722
        %v1725 = vmul.f32 %v1717, %v1722
        %v1727 = vlaneseq
        %v1728 = vshrl.u32 %v1727, 7
        %v1729 = vsub.s32 0, %v1728
        %v1730 = vrot.slane %v1061, %v1729
        %v1732 = vadd.f32 %v1724, %v1730
        %v1733 = vadd.f32 %v1725, %v1730
        %1735 = vset.pattern.permute.xlu0 0
        %1736 = vperm.xlu0 %1735, %v1048
        %v1737 = vpop.permute.xlu0 %1736
        %1740 = vset.pattern.permute.xlu0 0
        %1741 = vperm.xlu0 %1740, %v1049
        %v1742 = vpop.permute.xlu0 %1741
        %v1744 = vmul.f32 %v1732, %v1737
        %v1745 = vmul.f32 %v1733, %v1742
        %v1746 = vlaneseq
        %v1747 = vshrl.u32 %v1746, 7
        %v1748 = vrot.slane %v1744, 4
        %v1749 = vrot.slane %v1745, 4
        %vm1750 = vcmp.lt.s32.totalorder %v1747, 4
        %v1751 = vsel %vm1750, %v1748, %v1749
        %v1752 = vsel %vm1750, %v1749, %v1748
        %v1753 = vadd.s32 %v1747, 4294967292
        %vm1754 = vcmp.ge.s32.totalorder %v1753, 0
        %vm1755 = vcmp.lt.s32.totalorder %v1753, 8
        %vm1756 = vmand %vm1754, %vm1755
        %v1757 = vpack.c.bf16 %v1751, %v1752
        %v1758 = vsel %vm1756, 1, 0
        %v1759 = vcvt.s32.f32 %v1758
        %v1760 = vpack.c.bf16 %v1759, %v1759
        %v1761 = vmul.bf16 %v1757, %v1760
        %v1762 = vld [vmem:[%s866] sm:$0xf]
        %v1763 = vld [vmem:[%s866 + $0x4] sm:$0xf]
        %v1764 = vld [vmem:[%s866 + $0x8] sm:$0xf]
        %v1765 = vld [vmem:[%s866 + $0xc] sm:$0xf]
        %v1766 = vrot.slane %v1744, 5
        %v1767 = vrot.slane %v1745, 5
        %vm1768 = vcmp.lt.s32.totalorder %v1747, 3
        %v1769 = vsel %vm1768, %v1766, %v1767
        %v1770 = vsel %vm1768, %v1767, %v1766
        %v1771 = vadd.s32 %v1747, 4294967293
        %vm1772 = vcmp.ge.s32.totalorder %v1771, 0
        %vm1773 = vcmp.lt.s32.totalorder %v1771, 8
        %vm1774 = vmand %vm1772, %vm1773
        %v1775 = vpack.c.bf16 %v1769, %v1770
        %v1776 = vsel %vm1774, 1, 0
        %v1777 = vcvt.s32.f32 %v1776
        %v1778 = vpack.c.bf16 %v1777, %v1777
        %v1779 = vmul.bf16 %v1775, %v1778
        %s1780 = scalar_lea.vmem %s866, 16 [#allocation17]
        %v1781 = vld [vmem:[%s1780] sm:$0xf]
        %v1782 = vld [vmem:[%s1780 + $0x4] sm:$0xf]
        %v1783 = vld [vmem:[%s1780 + $0x8] sm:$0xf]
        %v1784 = vld [vmem:[%s1780 + $0xc] sm:$0xf]
        %v1789 = vunpack.c.l.b16 %v1781
        %v1790 = vunpack.c.l.b16 %v1782
        %v1791 = vunpack.c.l.b16 %v1783
        %v1792 = vunpack.c.l.b16 %v1784
        %v1793 = vpack.c.b16 %v1790, %v1789
        %v1794 = vpack.c.b16 %v1792, %v1791
        %v1798 = vsel %vm1085, %v1779, 0
        %1800 = vmatprep.subr.bf16.mxu0 0
        %1801 = vmatpush1.bf16.msra.mxu0 %v1793
        %1802 = vmatprep.subr.bf16.mxu0 0
        %1803 = vmatpush1.bf16.msra.mxu0 %v1794
        %1804 = vmatprep.subr.bf16.mxu0 0
        %1805 = vmatpush1.bf16.msra.mxu0 0
        %1806 = vmatprep.subr.bf16.mxu0 0
        %1807 = vmatpush1.bf16.msra.mxu0 0
        %1808 = vmatprep.subr.bf16.mxu0 0
        %1809 = vmatpush1.bf16.msra.mxu0 0
        %1810 = vmatprep.subr.bf16.mxu0 0
        %1811 = vmatpush1.bf16.msra.mxu0 0
        %1812 = vmatprep.subr.bf16.mxu0 0
        %1813 = vmatpush1.bf16.msra.mxu0 0
        %1814 = vmatprep.subr.bf16.mxu0 0
        %1815 = vmatpush1.bf16.msra.mxu0 0
        %1816 = vmatprep.subr.bf16.mxu0 0
        %1817 = vmatpush1.bf16.msra.mxu0 0
        %1818 = vmatprep.subr.bf16.mxu0 0
        %1819 = vmatpush1.bf16.msra.mxu0 0
        %1820 = vmatprep.subr.bf16.mxu0 0
        %1821 = vmatpush1.bf16.msra.mxu0 0
        %1822 = vmatprep.subr.bf16.mxu0 0
        %1823 = vmatpush1.bf16.msra.mxu0 0
        %1824 = vmatprep.subr.bf16.mxu0 0
        %1825 = vmatpush1.bf16.msra.mxu0 0
        %1826 = vmatprep.subr.bf16.mxu0 0
        %1827 = vmatpush1.bf16.msra.mxu0 0
        %1828 = vmatprep.subr.bf16.mxu0 0
        %1829 = vmatpush1.bf16.msra.mxu0 0
        %1830 = vmatprep.subr.bf16.mxu0 0
        %1831 = vmatpush1.bf16.msra.mxu0 0
        %1832 = vmatprep.mubr.bf16.mxu0 0
        %1833 = vmatmul.mubr.bf16.gmra.mrb[0].mxu0 %v1798
        %v1834 = vpop.f32.mrb[0].mxu0
        %v1835 = vadd.f32 0.0, %v1834
        %v1836 = vpop.f32.mrb[0].mxu0
        %v1837 = vpop.f32.mrb[0].mxu0
        %v1838 = vadd.f32 0.0, %v1837
        %v1839 = vpop.f32.mrb[0].mxu0
        %1840 = vdwg.mxu0
        %v1845 = vunpack.c.l.b16 %v1762
        %v1846 = vunpack.c.l.b16 %v1763
        %v1847 = vunpack.c.l.b16 %v1764
        %v1848 = vunpack.c.l.b16 %v1765
        %v1849 = vpack.c.b16 %v1846, %v1845
        %v1850 = vpack.c.b16 %v1848, %v1847
        %v1854 = vsel %vm1085, %v1761, 0
        %1856 = vmatprep.subr.bf16.mxu0 0
        %1857 = vmatpush1.bf16.msra.mxu0 %v1849
        %1858 = vmatprep.subr.bf16.mxu0 0
        %1859 = vmatpush1.bf16.msra.mxu0 %v1850
        %1860 = vmatprep.subr.bf16.mxu0 0
        %1861 = vmatpush1.bf16.msra.mxu0 0
        %1862 = vmatprep.subr.bf16.mxu0 0
        %1863 = vmatpush1.bf16.msra.mxu0 0
        %1864 = vmatprep.subr.bf16.mxu0 0
        %1865 = vmatpush1.bf16.msra.mxu0 0
        %1866 = vmatprep.subr.bf16.mxu0 0
        %1867 = vmatpush1.bf16.msra.mxu0 0
        %1868 = vmatprep.subr.bf16.mxu0 0
        %1869 = vmatpush1.bf16.msra.mxu0 0
        %1870 = vmatprep.subr.bf16.mxu0 0
        %1871 = vmatpush1.bf16.msra.mxu0 0
        %1872 = vmatprep.subr.bf16.mxu0 0
        %1873 = vmatpush1.bf16.msra.mxu0 0
        %1874 = vmatprep.subr.bf16.mxu0 0
        %1875 = vmatpush1.bf16.msra.mxu0 0
        %1876 = vmatprep.subr.bf16.mxu0 0
        %1877 = vmatpush1.bf16.msra.mxu0 0
        %1878 = vmatprep.subr.bf16.mxu0 0
        %1879 = vmatpush1.bf16.msra.mxu0 0
        %1880 = vmatprep.subr.bf16.mxu0 0
        %1881 = vmatpush1.bf16.msra.mxu0 0
        %1882 = vmatprep.subr.bf16.mxu0 0
        %1883 = vmatpush1.bf16.msra.mxu0 0
        %1884 = vmatprep.subr.bf16.mxu0 0
        %1885 = vmatpush1.bf16.msra.mxu0 0
        %1886 = vmatprep.subr.bf16.mxu0 0
        %1887 = vmatpush1.bf16.msra.mxu0 0
        %1888 = vmatprep.mubr.bf16.mxu0 0
        %1889 = vmatmul.mubr.bf16.gmra.mrb[0].mxu0 %v1854
        %v1890 = vpop.f32.mrb[0].mxu0
        %v1891 = vadd.f32 %v1835, %v1890
        %v1892 = vpop.f32.mrb[0].mxu0
        %v1893 = vpop.f32.mrb[0].mxu0
        %v1894 = vadd.f32 %v1838, %v1893
        %v1895 = vpop.f32.mrb[0].mxu0
        %1896 = vdwg.mxu0
        %v1897 = vrot.slane %v1744, 6
        %v1898 = vrot.slane %v1745, 6
        %vm1899 = vcmp.lt.s32.totalorder %v1747, 2
        %v1900 = vsel %vm1899, %v1897, %v1898
        %v1901 = vsel %vm1899, %v1898, %v1897
        %v1902 = vadd.s32 %v1747, 4294967294
        %vm1903 = vcmp.ge.s32.totalorder %v1902, 0
        %vm1904 = vcmp.lt.s32.totalorder %v1902, 8
        %vm1905 = vmand %vm1903, %vm1904
        %v1906 = vpack.c.bf16 %v1900, %v1901
        %v1907 = vsel %vm1905, 1, 0
        %v1908 = vcvt.s32.f32 %v1907
        %v1909 = vpack.c.bf16 %v1908, %v1908
        %v1910 = vmul.bf16 %v1906, %v1909
        %s1911 = scalar_lea.vmem %s866, 32 [#allocation17]
        %v1912 = vld [vmem:[%s1911] sm:$0xf]
        %v1913 = vld [vmem:[%s1911 + $0x4] sm:$0xf]
        %v1914 = vld [vmem:[%s1911 + $0x8] sm:$0xf]
        %v1915 = vld [vmem:[%s1911 + $0xc] sm:$0xf]
        %v1920 = vunpack.c.l.b16 %v1912
        %v1921 = vunpack.c.l.b16 %v1913
        %v1922 = vunpack.c.l.b16 %v1914
        %v1923 = vunpack.c.l.b16 %v1915
        %v1924 = vpack.c.b16 %v1921, %v1920
        %v1925 = vpack.c.b16 %v1923, %v1922
        %v1929 = vsel %vm1085, %v1910, 0
        %1931 = vmatprep.subr.bf16.mxu0 0
        %1932 = vmatpush1.bf16.msra.mxu0 %v1924
        %1933 = vmatprep.subr.bf16.mxu0 0
        %1934 = vmatpush1.bf16.msra.mxu0 %v1925
        %1935 = vmatprep.subr.bf16.mxu0 0
        %1936 = vmatpush1.bf16.msra.mxu0 0
        %1937 = vmatprep.subr.bf16.mxu0 0
        %1938 = vmatpush1.bf16.msra.mxu0 0
        %1939 = vmatprep.subr.bf16.mxu0 0
        %1940 = vmatpush1.bf16.msra.mxu0 0
        %1941 = vmatprep.subr.bf16.mxu0 0
        %1942 = vmatpush1.bf16.msra.mxu0 0
        %1943 = vmatprep.subr.bf16.mxu0 0
        %1944 = vmatpush1.bf16.msra.mxu0 0
        %1945 = vmatprep.subr.bf16.mxu0 0
        %1946 = vmatpush1.bf16.msra.mxu0 0
        %1947 = vmatprep.subr.bf16.mxu0 0
        %1948 = vmatpush1.bf16.msra.mxu0 0
        %1949 = vmatprep.subr.bf16.mxu0 0
        %1950 = vmatpush1.bf16.msra.mxu0 0
        %1951 = vmatprep.subr.bf16.mxu0 0
        %1952 = vmatpush1.bf16.msra.mxu0 0
        %1953 = vmatprep.subr.bf16.mxu0 0
        %1954 = vmatpush1.bf16.msra.mxu0 0
        %1955 = vmatprep.subr.bf16.mxu0 0
        %1956 = vmatpush1.bf16.msra.mxu0 0
        %1957 = vmatprep.subr.bf16.mxu0 0
        %1958 = vmatpush1.bf16.msra.mxu0 0
        %1959 = vmatprep.subr.bf16.mxu0 0
        %1960 = vmatpush1.bf16.msra.mxu0 0
        %1961 = vmatprep.subr.bf16.mxu0 0
        %1962 = vmatpush1.bf16.msra.mxu0 0
        %1963 = vmatprep.mubr.bf16.mxu0 0
        %1964 = vmatmul.mubr.bf16.gmra.mrb[0].mxu0 %v1929
        %v1965 = vpop.f32.mrb[0].mxu0
        %v1966 = vadd.f32 0.0, %v1965
        %v1967 = vpop.f32.mrb[0].mxu0
        %v1968 = vpop.f32.mrb[0].mxu0
        %v1969 = vadd.f32 0.0, %v1968
        %v1970 = vpop.f32.mrb[0].mxu0
        %1971 = vdwg.mxu0
        %v1972 = vadd.f32 %v1891, %v1966
        %v1973 = vadd.f32 %v1894, %v1969
        %v1974 = vrot.slane %v1744, 7
        %v1975 = vrot.slane %v1745, 7
        %vm1976 = vcmp.lt.s32.totalorder %v1747, 1
        %v1977 = vsel %vm1976, %v1974, %v1975
        %v1978 = vsel %vm1976, %v1975, %v1974
        %v1979 = vadd.s32 %v1747, 4294967295
        %vm1980 = vcmp.ge.s32.totalorder %v1979, 0
        %vm1981 = vcmp.lt.s32.totalorder %v1979, 8
        %vm1982 = vmand %vm1980, %vm1981
        %v1983 = vpack.c.bf16 %v1977, %v1978
        %v1984 = vsel %vm1982, 1, 0
        %v1985 = vcvt.s32.f32 %v1984
        %v1986 = vpack.c.bf16 %v1985, %v1985
        %v1987 = vmul.bf16 %v1983, %v1986
        %s1988 = scalar_lea.vmem %s866, 48 [#allocation17]
        %v1989 = vld [vmem:[%s1988] sm:$0xf]
        %v1990 = vld [vmem:[%s1988 + $0x4] sm:$0xf]
        %v1991 = vld [vmem:[%s1988 + $0x8] sm:$0xf]
        %v1992 = vld [vmem:[%s1988 + $0xc] sm:$0xf]
        %v1997 = vunpack.c.l.b16 %v1989
        %v1998 = vunpack.c.l.b16 %v1990
        %v1999 = vunpack.c.l.b16 %v1991
        %v2000 = vunpack.c.l.b16 %v1992
        %v2001 = vpack.c.b16 %v1998, %v1997
        %v2002 = vpack.c.b16 %v2000, %v1999
        %v2006 = vsel %vm1085, %v1987, 0
        %2008 = vmatprep.subr.bf16.mxu0 0
        %2009 = vmatpush1.bf16.msra.mxu0 %v2001
        %2010 = vmatprep.subr.bf16.mxu0 0
        %2011 = vmatpush1.bf16.msra.mxu0 %v2002
        %2012 = vmatprep.subr.bf16.mxu0 0
        %2013 = vmatpush1.bf16.msra.mxu0 0
        %2014 = vmatprep.subr.bf16.mxu0 0
        %2015 = vmatpush1.bf16.msra.mxu0 0
        %2016 = vmatprep.subr.bf16.mxu0 0
        %2017 = vmatpush1.bf16.msra.mxu0 0
        %2018 = vmatprep.subr.bf16.mxu0 0
        %2019 = vmatpush1.bf16.msra.mxu0 0
        %2020 = vmatprep.subr.bf16.mxu0 0
        %2021 = vmatpush1.bf16.msra.mxu0 0
        %2022 = vmatprep.subr.bf16.mxu0 0
        %2023 = vmatpush1.bf16.msra.mxu0 0
        %2024 = vmatprep.subr.bf16.mxu0 0
        %2025 = vmatpush1.bf16.msra.mxu0 0
        %2026 = vmatprep.subr.bf16.mxu0 0
        %2027 = vmatpush1.bf16.msra.mxu0 0
        %2028 = vmatprep.subr.bf16.mxu0 0
        %2029 = vmatpush1.bf16.msra.mxu0 0
        %2030 = vmatprep.subr.bf16.mxu0 0
        %2031 = vmatpush1.bf16.msra.mxu0 0
        %2032 = vmatprep.subr.bf16.mxu0 0
        %2033 = vmatpush1.bf16.msra.mxu0 0
        %2034 = vmatprep.subr.bf16.mxu0 0
        %2035 = vmatpush1.bf16.msra.mxu0 0
        %2036 = vmatprep.subr.bf16.mxu0 0
        %2037 = vmatpush1.bf16.msra.mxu0 0
        %2038 = vmatprep.subr.bf16.mxu0 0
        %2039 = vmatpush1.bf16.msra.mxu0 0
        %2040 = vmatprep.mubr.bf16.mxu0 0
        %2041 = vmatmul.mubr.bf16.gmra.mrb[0].mxu0 %v2006
        %v2042 = vpop.f32.mrb[0].mxu0
        %v2043 = vadd.f32 0.0, %v2042
        %v2044 = vpop.f32.mrb[0].mxu0
        %v2045 = vpop.f32.mrb[0].mxu0
        %v2046 = vadd.f32 0.0, %v2045
        %v2047 = vpop.f32.mrb[0].mxu0
        %2048 = vdwg.mxu0
        %v2049 = vadd.f32 %v1972, %v2043
        %v2050 = vadd.f32 %v1973, %v2046
        %v2051 = vpack.c.bf16 %v1745, %v1744
        %s2052 = scalar_lea.vmem %s866, 64 [#allocation17]
        %v2053 = vld [vmem:[%s2052] sm:$0xf]
        %v2054 = vld [vmem:[%s2052 + $0x4] sm:$0xf]
        %v2055 = vld [vmem:[%s2052 + $0x8] sm:$0xf]
        %v2056 = vld [vmem:[%s2052 + $0xc] sm:$0xf]
        %v2061 = vunpack.c.l.b16 %v2053
        %v2062 = vunpack.c.l.b16 %v2054
        %v2063 = vunpack.c.l.b16 %v2055
        %v2064 = vunpack.c.l.b16 %v2056
        %v2065 = vpack.c.b16 %v2062, %v2061
        %v2066 = vpack.c.b16 %v2064, %v2063
        %v2070 = vsel %vm1085, %v2051, 0
        %2072 = vmatprep.subr.bf16.mxu0 0
        %2073 = vmatpush1.bf16.msra.mxu0 %v2065
        %2074 = vmatprep.subr.bf16.mxu0 0
        %2075 = vmatpush1.bf16.msra.mxu0 %v2066
        %2076 = vmatprep.subr.bf16.mxu0 0
        %2077 = vmatpush1.bf16.msra.mxu0 0
        %2078 = vmatprep.subr.bf16.mxu0 0
        %2079 = vmatpush1.bf16.msra.mxu0 0
        %2080 = vmatprep.subr.bf16.mxu0 0
        %2081 = vmatpush1.bf16.msra.mxu0 0
        %2082 = vmatprep.subr.bf16.mxu0 0
        %2083 = vmatpush1.bf16.msra.mxu0 0
        %2084 = vmatprep.subr.bf16.mxu0 0
        %2085 = vmatpush1.bf16.msra.mxu0 0
        %2086 = vmatprep.subr.bf16.mxu0 0
        %2087 = vmatpush1.bf16.msra.mxu0 0
        %2088 = vmatprep.subr.bf16.mxu0 0
        %2089 = vmatpush1.bf16.msra.mxu0 0
        %2090 = vmatprep.subr.bf16.mxu0 0
        %2091 = vmatpush1.bf16.msra.mxu0 0
        %2092 = vmatprep.subr.bf16.mxu0 0
        %2093 = vmatpush1.bf16.msra.mxu0 0
        %2094 = vmatprep.subr.bf16.mxu0 0
        %2095 = vmatpush1.bf16.msra.mxu0 0
        %2096 = vmatprep.subr.bf16.mxu0 0
        %2097 = vmatpush1.bf16.msra.mxu0 0
        %2098 = vmatprep.subr.bf16.mxu0 0
        %2099 = vmatpush1.bf16.msra.mxu0 0
        %2100 = vmatprep.subr.bf16.mxu0 0
        %2101 = vmatpush1.bf16.msra.mxu0 0
        %2102 = vmatprep.subr.bf16.mxu0 0
        %2103 = vmatpush1.bf16.msra.mxu0 0
        %2104 = vmatprep.mubr.bf16.mxu0 0
        %2105 = vmatmul.mubr.bf16.gmra.mrb[0].mxu0 %v2070
        %v2106 = vpop.f32.mrb[0].mxu0
        %v2107 = vadd.f32 0.0, %v2106
        %v2108 = vpop.f32.mrb[0].mxu0
        %v2109 = vpop.f32.mrb[0].mxu0
        %v2110 = vadd.f32 0.0, %v2109
        %v2111 = vpop.f32.mrb[0].mxu0
        %2112 = vdwg.mxu0
        %v2113 = vadd.f32 %v2049, %v2107
        %v2114 = vadd.f32 %v2050, %v2110
        %v2115 = vrot.slane %v1744, 1
        %v2116 = vrot.slane %v1745, 1
        %vm2117 = vcmp.lt.s32.totalorder %v1747, 7
        %v2118 = vsel %vm2117, %v2115, %v2116
        %v2119 = vsel %vm2117, %v2116, %v2115
        %v2120 = vadd.s32 %v1747, 1
        %vm2121 = vcmp.ge.s32.totalorder %v2120, 0
        %vm2122 = vcmp.lt.s32.totalorder %v2120, 8
        %vm2123 = vmand %vm2121, %vm2122
        %v2124 = vpack.c.bf16 %v2119, %v2118
        %v2125 = vsel %vm2123, 1, 0
        %v2126 = vcvt.s32.f32 %v2125
        %v2127 = vpack.c.bf16 %v2126, %v2126
        %v2128 = vmul.bf16 %v2124, %v2127
        %s2129 = scalar_lea.vmem %s866, 80 [#allocation17]
        %v2130 = vld [vmem:[%s2129] sm:$0xf]
        %v2131 = vld [vmem:[%s2129 + $0x4] sm:$0xf]
        %v2132 = vld [vmem:[%s2129 + $0x8] sm:$0xf]
        %v2133 = vld [vmem:[%s2129 + $0xc] sm:$0xf]
        %v2138 = vunpack.c.l.b16 %v2130
        %v2139 = vunpack.c.l.b16 %v2131
        %v2140 = vunpack.c.l.b16 %v2132
        %v2141 = vunpack.c.l.b16 %v2133
        %v2142 = vpack.c.b16 %v2139, %v2138
        %v2143 = vpack.c.b16 %v2141, %v2140
        %v2147 = vsel %vm1085, %v2128, 0
        %2149 = vmatprep.subr.bf16.mxu0 0
        %2150 = vmatpush1.bf16.msra.mxu0 %v2142
        %2151 = vmatprep.subr.bf16.mxu0 0
        %2152 = vmatpush1.bf16.msra.mxu0 %v2143
        %2153 = vmatprep.subr.bf16.mxu0 0
        %2154 = vmatpush1.bf16.msra.mxu0 0
        %2155 = vmatprep.subr.bf16.mxu0 0
        %2156 = vmatpush1.bf16.msra.mxu0 0
        %2157 = vmatprep.subr.bf16.mxu0 0
        %2158 = vmatpush1.bf16.msra.mxu0 0
        %2159 = vmatprep.subr.bf16.mxu0 0
        %2160 = vmatpush1.bf16.msra.mxu0 0
        %2161 = vmatprep.subr.bf16.mxu0 0
        %2162 = vmatpush1.bf16.msra.mxu0 0
        %2163 = vmatprep.subr.bf16.mxu0 0
        %2164 = vmatpush1.bf16.msra.mxu0 0
        %2165 = vmatprep.subr.bf16.mxu0 0
        %2166 = vmatpush1.bf16.msra.mxu0 0
        %2167 = vmatprep.subr.bf16.mxu0 0
        %2168 = vmatpush1.bf16.msra.mxu0 0
        %2169 = vmatprep.subr.bf16.mxu0 0
        %2170 = vmatpush1.bf16.msra.mxu0 0
        %2171 = vmatprep.subr.bf16.mxu0 0
        %2172 = vmatpush1.bf16.msra.mxu0 0
        %2173 = vmatprep.subr.bf16.mxu0 0
        %2174 = vmatpush1.bf16.msra.mxu0 0
        %2175 = vmatprep.subr.bf16.mxu0 0
        %2176 = vmatpush1.bf16.msra.mxu0 0
        %2177 = vmatprep.subr.bf16.mxu0 0
        %2178 = vmatpush1.bf16.msra.mxu0 0
        %2179 = vmatprep.subr.bf16.mxu0 0
        %2180 = vmatpush1.bf16.msra.mxu0 0
        %2181 = vmatprep.mubr.bf16.mxu0 0
        %2182 = vmatmul.mubr.bf16.gmra.mrb[0].mxu0 %v2147
        %v2183 = vpop.f32.mrb[0].mxu0
        %v2184 = vadd.f32 0.0, %v2183
        %v2185 = vpop.f32.mrb[0].mxu0
        %v2186 = vpop.f32.mrb[0].mxu0
        %v2187 = vadd.f32 0.0, %v2186
        %v2188 = vpop.f32.mrb[0].mxu0
        %2189 = vdwg.mxu0
        %v2190 = vadd.f32 %v2113, %v2184
        %v2191 = vadd.f32 %v2114, %v2187
        %v2192 = vrot.slane %v1744, 2
        %v2193 = vrot.slane %v1745, 2
        %vm2194 = vcmp.lt.s32.totalorder %v1747, 6
        %v2195 = vsel %vm2194, %v2192, %v2193
        %v2196 = vsel %vm2194, %v2193, %v2192
        %v2197 = vadd.s32 %v1747, 2
        %vm2198 = vcmp.ge.s32.totalorder %v2197, 0
        %vm2199 = vcmp.lt.s32.totalorder %v2197, 8
        %vm2200 = vmand %vm2198, %vm2199
        %v2201 = vpack.c.bf16 %v2196, %v2195
        %v2202 = vsel %vm2200, 1, 0
        %v2203 = vcvt.s32.f32 %v2202
        %v2204 = vpack.c.bf16 %v2203, %v2203
        %v2205 = vmul.bf16 %v2201, %v2204
        %s2206 = scalar_lea.vmem %s866, 96 [#allocation17]
        %v2207 = vld [vmem:[%s2206] sm:$0xf]
        %v2208 = vld [vmem:[%s2206 + $0x4] sm:$0xf]
        %v2209 = vld [vmem:[%s2206 + $0x8] sm:$0xf]
        %v2210 = vld [vmem:[%s2206 + $0xc] sm:$0xf]
        %v2215 = vunpack.c.l.b16 %v2207
        %v2216 = vunpack.c.l.b16 %v2208
        %v2217 = vunpack.c.l.b16 %v2209
        %v2218 = vunpack.c.l.b16 %v2210
        %v2219 = vpack.c.b16 %v2216, %v2215
        %v2220 = vpack.c.b16 %v2218, %v2217
        %v2224 = vsel %vm1085, %v2205, 0
        %2226 = vmatprep.subr.bf16.mxu0 0
        %2227 = vmatpush1.bf16.msra.mxu0 %v2219
        %2228 = vmatprep.subr.bf16.mxu0 0
        %2229 = vmatpush1.bf16.msra.mxu0 %v2220
        %2230 = vmatprep.subr.bf16.mxu0 0
        %2231 = vmatpush1.bf16.msra.mxu0 0
        %2232 = vmatprep.subr.bf16.mxu0 0
        %2233 = vmatpush1.bf16.msra.mxu0 0
        %2234 = vmatprep.subr.bf16.mxu0 0
        %2235 = vmatpush1.bf16.msra.mxu0 0
        %2236 = vmatprep.subr.bf16.mxu0 0
        %2237 = vmatpush1.bf16.msra.mxu0 0
        %2238 = vmatprep.subr.bf16.mxu0 0
        %2239 = vmatpush1.bf16.msra.mxu0 0
        %2240 = vmatprep.subr.bf16.mxu0 0
        %2241 = vmatpush1.bf16.msra.mxu0 0
        %2242 = vmatprep.subr.bf16.mxu0 0
        %2243 = vmatpush1.bf16.msra.mxu0 0
        %2244 = vmatprep.subr.bf16.mxu0 0
        %2245 = vmatpush1.bf16.msra.mxu0 0
        %2246 = vmatprep.subr.bf16.mxu0 0
        %2247 = vmatpush1.bf16.msra.mxu0 0
        %2248 = vmatprep.subr.bf16.mxu0 0
        %2249 = vmatpush1.bf16.msra.mxu0 0
        %2250 = vmatprep.subr.bf16.mxu0 0
        %2251 = vmatpush1.bf16.msra.mxu0 0
        %2252 = vmatprep.subr.bf16.mxu0 0
        %2253 = vmatpush1.bf16.msra.mxu0 0
        %2254 = vmatprep.subr.bf16.mxu0 0
        %2255 = vmatpush1.bf16.msra.mxu0 0
        %2256 = vmatprep.subr.bf16.mxu0 0
        %2257 = vmatpush1.bf16.msra.mxu0 0
        %2258 = vmatprep.mubr.bf16.mxu0 0
        %2259 = vmatmul.mubr.bf16.gmra.mrb[0].mxu0 %v2224
        %v2260 = vpop.f32.mrb[0].mxu0
        %v2261 = vadd.f32 0.0, %v2260
        %v2262 = vpop.f32.mrb[0].mxu0
        %v2263 = vpop.f32.mrb[0].mxu0
        %v2264 = vadd.f32 0.0, %v2263
        %v2265 = vpop.f32.mrb[0].mxu0
        %2266 = vdwg.mxu0
        %v2267 = vadd.f32 %v2190, %v2261
        %v2268 = vadd.f32 %v2191, %v2264
        %v2269 = vrot.slane %v1744, 3
        %v2270 = vrot.slane %v1745, 3
        %vm2271 = vcmp.lt.s32.totalorder %v1747, 5
        %v2272 = vsel %vm2271, %v2269, %v2270
        %v2273 = vsel %vm2271, %v2270, %v2269
        %v2274 = vadd.s32 %v1747, 3
        %vm2275 = vcmp.ge.s32.totalorder %v2274, 0
        %vm2276 = vcmp.lt.s32.totalorder %v2274, 8
        %vm2277 = vmand %vm2275, %vm2276
        %v2278 = vpack.c.bf16 %v2273, %v2272
        %v2279 = vsel %vm2277, 1, 0
        %v2280 = vcvt.s32.f32 %v2279
        %v2281 = vpack.c.bf16 %v2280, %v2280
        %v2282 = vmul.bf16 %v2278, %v2281
        %s2283 = scalar_lea.vmem %s866, 112 [#allocation17]
        %v2284 = vld [vmem:[%s2283] sm:$0xf]
        %v2285 = vld [vmem:[%s2283 + $0x4] sm:$0xf]
        %v2286 = vld [vmem:[%s2283 + $0x8] sm:$0xf]
        %v2287 = vld [vmem:[%s2283 + $0xc] sm:$0xf]
        %v2292 = vunpack.c.l.b16 %v2284
        %v2293 = vunpack.c.l.b16 %v2285
        %v2294 = vunpack.c.l.b16 %v2286
        %v2295 = vunpack.c.l.b16 %v2287
        %v2296 = vpack.c.b16 %v2293, %v2292
        %v2297 = vpack.c.b16 %v2295, %v2294
        %v2301 = vsel %vm1085, %v2282, 0
        %2303 = vmatprep.subr.bf16.mxu0 0
        %2304 = vmatpush1.bf16.msra.mxu0 %v2296
        %2305 = vmatprep.subr.bf16.mxu0 0
        %2306 = vmatpush1.bf16.msra.mxu0 %v2297
        %2307 = vmatprep.subr.bf16.mxu0 0
        %2308 = vmatpush1.bf16.msra.mxu0 0
        %2309 = vmatprep.subr.bf16.mxu0 0
        %2310 = vmatpush1.bf16.msra.mxu0 0
        %2311 = vmatprep.subr.bf16.mxu0 0
        %2312 = vmatpush1.bf16.msra.mxu0 0
        %2313 = vmatprep.subr.bf16.mxu0 0
        %2314 = vmatpush1.bf16.msra.mxu0 0
        %2315 = vmatprep.subr.bf16.mxu0 0
        %2316 = vmatpush1.bf16.msra.mxu0 0
        %2317 = vmatprep.subr.bf16.mxu0 0
        %2318 = vmatpush1.bf16.msra.mxu0 0
        %2319 = vmatprep.subr.bf16.mxu0 0
        %2320 = vmatpush1.bf16.msra.mxu0 0
        %2321 = vmatprep.subr.bf16.mxu0 0
        %2322 = vmatpush1.bf16.msra.mxu0 0
        %2323 = vmatprep.subr.bf16.mxu0 0
        %2324 = vmatpush1.bf16.msra.mxu0 0
        %2325 = vmatprep.subr.bf16.mxu0 0
        %2326 = vmatpush1.bf16.msra.mxu0 0
        %2327 = vmatprep.subr.bf16.mxu0 0
        %2328 = vmatpush1.bf16.msra.mxu0 0
        %2329 = vmatprep.subr.bf16.mxu0 0
        %2330 = vmatpush1.bf16.msra.mxu0 0
        %2331 = vmatprep.subr.bf16.mxu0 0
        %2332 = vmatpush1.bf16.msra.mxu0 0
        %2333 = vmatprep.subr.bf16.mxu0 0
        %2334 = vmatpush1.bf16.msra.mxu0 0
        %2335 = vmatprep.mubr.bf16.mxu0 0
        %2336 = vmatmul.mubr.bf16.gmra.mrb[0].mxu0 %v2301
        %v2337 = vpop.f32.mrb[0].mxu0
        %v2338 = vadd.f32 0.0, %v2337
        %v2339 = vpop.f32.mrb[0].mxu0
        %v2340 = vpop.f32.mrb[0].mxu0
        %v2341 = vadd.f32 0.0, %v2340
        %v2342 = vpop.f32.mrb[0].mxu0
        %2343 = vdwg.mxu0
        %v2344 = vadd.f32 %v2267, %v2338
        %v2345 = vadd.f32 %v2268, %v2341
        %v2346 = vadd.s32 %v1747, 4
        %vm2347 = vcmp.ge.s32.totalorder %v2346, 0
        %vm2348 = vcmp.lt.s32.totalorder %v2346, 8
        %vm2349 = vmand %vm2347, %vm2348
        %v2350 = vpack.c.bf16 %v1752, %v1751
        %v2351 = vsel %vm2349, 1, 0
        %v2352 = vcvt.s32.f32 %v2351
        %v2353 = vpack.c.bf16 %v2352, %v2352
        %v2354 = vmul.bf16 %v2350, %v2353
        %s2355 = scalar_lea.vmem %s866, 128 [#allocation17]
        %v2356 = vld [vmem:[%s2355] sm:$0xf]
        %v2357 = vld [vmem:[%s2355 + $0x4] sm:$0xf]
        %v2358 = vld [vmem:[%s2355 + $0x8] sm:$0xf]
        %v2359 = vld [vmem:[%s2355 + $0xc] sm:$0xf]
        %v2364 = vunpack.c.l.b16 %v2356
        %v2365 = vunpack.c.l.b16 %v2357
        %v2366 = vunpack.c.l.b16 %v2358
        %v2367 = vunpack.c.l.b16 %v2359
        %v2368 = vpack.c.b16 %v2365, %v2364
        %v2369 = vpack.c.b16 %v2367, %v2366
        %v2373 = vsel %vm1085, %v2354, 0
        %2375 = vmatprep.subr.bf16.mxu0 0
        %2376 = vmatpush1.bf16.msra.mxu0 %v2368
        %2377 = vmatprep.subr.bf16.mxu0 0
        %2378 = vmatpush1.bf16.msra.mxu0 %v2369
        %2379 = vmatprep.subr.bf16.mxu0 0
        %2380 = vmatpush1.bf16.msra.mxu0 0
        %2381 = vmatprep.subr.bf16.mxu0 0
        %2382 = vmatpush1.bf16.msra.mxu0 0
        %2383 = vmatprep.subr.bf16.mxu0 0
        %2384 = vmatpush1.bf16.msra.mxu0 0
        %2385 = vmatprep.subr.bf16.mxu0 0
        %2386 = vmatpush1.bf16.msra.mxu0 0
        %2387 = vmatprep.subr.bf16.mxu0 0
        %2388 = vmatpush1.bf16.msra.mxu0 0
        %2389 = vmatprep.subr.bf16.mxu0 0
        %2390 = vmatpush1.bf16.msra.mxu0 0
        %2391 = vmatprep.subr.bf16.mxu0 0
        %2392 = vmatpush1.bf16.msra.mxu0 0
        %2393 = vmatprep.subr.bf16.mxu0 0
        %2394 = vmatpush1.bf16.msra.mxu0 0
        %2395 = vmatprep.subr.bf16.mxu0 0
        %2396 = vmatpush1.bf16.msra.mxu0 0
        %2397 = vmatprep.subr.bf16.mxu0 0
        %2398 = vmatpush1.bf16.msra.mxu0 0
        %2399 = vmatprep.subr.bf16.mxu0 0
        %2400 = vmatpush1.bf16.msra.mxu0 0
        %2401 = vmatprep.subr.bf16.mxu0 0
        %2402 = vmatpush1.bf16.msra.mxu0 0
        %2403 = vmatprep.subr.bf16.mxu0 0
        %2404 = vmatpush1.bf16.msra.mxu0 0
        %2405 = vmatprep.subr.bf16.mxu0 0
        %2406 = vmatpush1.bf16.msra.mxu0 0
        %2407 = vmatprep.mubr.bf16.mxu0 0
        %2408 = vmatmul.mubr.bf16.gmra.mrb[0].mxu0 %v2373
        %v2409 = vpop.f32.mrb[0].mxu0
        %v2410 = vadd.f32 0.0, %v2409
        %v2411 = vpop.f32.mrb[0].mxu0
        %v2412 = vpop.f32.mrb[0].mxu0
        %v2413 = vadd.f32 0.0, %v2412
        %v2414 = vpop.f32.mrb[0].mxu0
        %2415 = vdwg.mxu0
        %v2416 = vadd.f32 %v2344, %v2410
        %v2417 = vadd.f32 %v2345, %v2413
        %v2419 = vlaneseq
        %v2420 = vshrl.u32 %v2419, 7
        %v2421 = vsub.s32 0, %v2420
        %v2422 = vrot.slane %v1064, %v2421
        %v2424 = vadd.f32 %v2416, %v2422
        %v2425 = vadd.f32 %v2417, %v2422
        %v2426 = vmax.f32 %v2424, 0.0
        %v2427 = vmax.f32 %v2425, 0.0
        %v2428 = vpack.c.bf16 %v2427, %v2426
        %v2429 = vld [vmem:[%s883] sm:$0xf]
        %v2430 = vld [vmem:[%s883 + $0x4] sm:$0xf]
        %v2431 = vld [vmem:[%s883 + $0x8] sm:$0xf]
        %v2432 = vld [vmem:[%s883 + $0xc] sm:$0xf]
        %v2433 = vld [vmem:[%s883 + $0x10] sm:$0xf]
        %v2434 = vld [vmem:[%s883 + $0x14] sm:$0xf]
        %v2435 = vld [vmem:[%s883 + $0x18] sm:$0xf]
        %v2436 = vld [vmem:[%s883 + $0x1c] sm:$0xf]
        %v2438 = vlaneseq
        %v2439 = vshrl.u32 %v2438, 7
        %v2440 = vsub.s32 0, %v2439
        %v2441 = vrot.slane %v1065, %v2440
        %v2451 = vunpack.c.l.b16 %v2429
        %v2452 = vunpack.c.l.b16 %v2430
        %v2453 = vunpack.c.l.b16 %v2431
        %v2454 = vunpack.c.l.b16 %v2432
        %v2455 = vunpack.c.l.b16 %v2433
        %v2456 = vunpack.c.l.b16 %v2434
        %v2457 = vunpack.c.l.b16 %v2435
        %v2458 = vunpack.c.l.b16 %v2436
        %v2459 = vpack.c.b16 %v2452, %v2451
        %v2460 = vpack.c.b16 %v2454, %v2453
        %v2461 = vpack.c.b16 %v2456, %v2455
        %v2462 = vpack.c.b16 %v2458, %v2457
        %vm2467 = vcmask 523264
        %v2469 = vsel %vm2467, %v2428, 0
        %2471 = vmatprep.subr.bf16.mxu0 0
        %2472 = vmatpush1.bf16.msra.mxu0 %v2459
        %2473 = vmatprep.subr.bf16.mxu0 0
        %2474 = vmatpush1.bf16.msra.mxu0 %v2460
        %2475 = vmatprep.subr.bf16.mxu0 0
        %2476 = vmatpush1.bf16.msra.mxu0 %v2461
        %2477 = vmatprep.subr.bf16.mxu0 0
        %2478 = vmatpush1.bf16.msra.mxu0 %v2462
        %2479 = vmatprep.subr.bf16.mxu0 0
        %2480 = vmatpush1.bf16.msra.mxu0 0
        %2481 = vmatprep.subr.bf16.mxu0 0
        %2482 = vmatpush1.bf16.msra.mxu0 0
        %2483 = vmatprep.subr.bf16.mxu0 0
        %2484 = vmatpush1.bf16.msra.mxu0 0
        %2485 = vmatprep.subr.bf16.mxu0 0
        %2486 = vmatpush1.bf16.msra.mxu0 0
        %2487 = vmatprep.subr.bf16.mxu0 0
        %2488 = vmatpush1.bf16.msra.mxu0 0
        %2489 = vmatprep.subr.bf16.mxu0 0
        %2490 = vmatpush1.bf16.msra.mxu0 0
        %2491 = vmatprep.subr.bf16.mxu0 0
        %2492 = vmatpush1.bf16.msra.mxu0 0
        %2493 = vmatprep.subr.bf16.mxu0 0
        %2494 = vmatpush1.bf16.msra.mxu0 0
        %2495 = vmatprep.subr.bf16.mxu0 0
        %2496 = vmatpush1.bf16.msra.mxu0 0
        %2497 = vmatprep.subr.bf16.mxu0 0
        %2498 = vmatpush1.bf16.msra.mxu0 0
        %2499 = vmatprep.subr.bf16.mxu0 0
        %2500 = vmatpush1.bf16.msra.mxu0 0
        %2501 = vmatprep.subr.bf16.mxu0 0
        %2502 = vmatpush1.bf16.msra.mxu0 0
        %2503 = vmatprep.mubr.bf16.mxu0 0
        %2504 = vmatmul.mubr.bf16.gmra.mrb[0].mxu0 %v2469
        %v2505 = vpop.f32.mrb[0].mxu0
        %v2506 = vadd.f32 %v2441, %v2505
        %v2507 = vpop.f32.mrb[0].mxu0
        %v2508 = vpop.f32.mrb[0].mxu0
        %v2509 = vadd.f32 %v2441, %v2508
        %v2510 = vpop.f32.mrb[0].mxu0
        %2511 = vdwg.mxu0
        %v2512 = vadd.f32 %v2506, %v1744
        %v2513 = vadd.f32 %v2509, %v1745
        %v2514 = vsel %vm1085, %v2512, 0.0
        %2515 = vadd.xlane.f32.xlu0 %v2514
        %v2516 = vpop.xlane.xlu0 %2515
        %v2517 = vsel %vm1085, %v2513, 0.0
        %2518 = vadd.xlane.f32.xlu0 %v2517
        %v2519 = vpop.xlane.xlu0 %2518
        %v2520 = vmul.f32 %v2516, %v1697
        %v2521 = vmul.f32 %v2519, %v1697
        %v2522 = vsub.f32 %v2512, %v2520
        %v2523 = vsub.f32 %v2513, %v2521
        %v2524 = vmul.f32 %v2522, %v2522
        %v2525 = vmul.f32 %v2523, %v2523
        %v2526 = vsel %vm1085, %v2524, 0.0
        %2527 = vadd.xlane.f32.xlu0 %v2526
        %v2528 = vpop.xlane.xlu0 %2527
        %v2529 = vsel %vm1085, %v2525, 0.0
        %2530 = vadd.xlane.f32.xlu0 %v2529
        %v2531 = vpop.xlane.xlu0 %2530
        %v2532 = vmul.f32 %v2528, %v1697
        %v2533 = vmul.f32 %v2531, %v1697
        %v2534 = vadd.f32 %v2532, 1e-05
        %v2535 = vadd.f32 %v2533, 1e-05
        %v2536 = vrsqrt.pop %v2534
        %v2537 = vrsqrt.pop %v2535
        %v2538 = vmul.f32 %v2522, %v2536
        %v2539 = vmul.f32 %v2523, %v2537
        %v2541 = vlaneseq
        %v2542 = vshrl.u32 %v2541, 7
        %v2543 = vsub.s32 0, %v2542
        %v2544 = vrot.slane %v1062, %v2543
        %v2546 = vmul.f32 %v2538, %v2544
        %v2547 = vmul.f32 %v2539, %v2544
        %v2549 = vlaneseq
        %v2550 = vshrl.u32 %v2549, 7
        %v2551 = vsub.s32 0, %v2550
        %v2552 = vrot.slane %v1063, %v2551
        %v2554 = vadd.f32 %v2546, %v2552
        %v2555 = vadd.f32 %v2547, %v2552
        %v2556 = vmul.f32 %v2554, %v1737
        %v2557 = vmul.f32 %v2555, %v1742
        %2558 = vst.msk [vmem:[%s1015] sm:$0xff] %vm1085, %v2556
        %2559 = vst.msk [vmem:[%s1015 + $0x8] sm:$0xff] %vm1085, %v2557
        %s2560 = sand.u32 %s463, 1
        %s2561 = scalar_lea.sflag [#allocation4], %s2560
        %s2562 = sand.u32 %s463, 1
        %s2563 = smul.addr %s2562, 16
        %s2564 = scalar_lea.vmem [#allocation26], %s2563
        // Predicated region
        $region145: #{tpu_custom_call.1} parent=79 // pred_check
          %p2565 = pneg %p473
        $region146: #{tpu_custom_call.1} parent=79 // pred_check_branch
          %2567 = sbr.rel (%p2565) target = $region148
        $region147: #{tpu_custom_call.1} parent=79 // pred_region
          %s2568 = smul.u32 2, %s57
          %s2570 = ssub.s32 256, 256
          %2571 = vsyncadd %s2561, %s2570
          %s2572 = smul.addr %s2568, 128
          %s2573 = scalar_lea.hbm %s15, %s2572
          %s2574 = sshll.u32 %s2564, 4
          %s2575 = int_to_ptr.vmem [resolvable:$true] %s2574
          %2580 = dma.vmem_to_hbm [thread:$0]  %s2575, 256, %s2573, %s2561, 128, 128, 8
        $region148: #{tpu_custom_call.1} parent=79 // pred_fallthru
          _
      $region80: #{tpu_custom_call.1} parent=5 // pred_fallthru
        _
      %p2581 = scmp.le.s32.totalorder 2, %s48
      // Predicated region
      $region149: #{tpu_custom_call.1} parent=5 // pred_check
        %p2582 = pneg %p2581
      $region150: #{tpu_custom_call.1} parent=5 // pred_check_branch
        %2584 = sbr.rel (%p2582) target = $region152
      $region151: #{tpu_custom_call.1} parent=5 // pred_region
        %s2585 = ssub.s32 %s48, 2
        // Predicated region
        $region153: #{tpu_custom_call.1} parent=151 // pred_check
          %p2586 = pneg %p479
        $region154: #{tpu_custom_call.1} parent=151 // pred_check_branch
          %2588 = sbr.rel (%p2586) target = $region156
        $region155: #{tpu_custom_call.1} parent=151 // pred_region
          %s2589 = sand.u32 %s464, 1
          %s2590 = scalar_lea.sflag [#allocation4], %s2589
          %s2591 = sand.u32 %s464, 1
          %s2592 = smul.addr %s2591, 16
          %s2593 = scalar_lea.vmem [#allocation26], %s2592
          %2594 = dma.done %s2590, 256
        $region156: #{tpu_custom_call.1} parent=151 // pred_fallthru
          _
      $region152: #{tpu_custom_call.1} parent=5 // pred_fallthru
        _
    $region6: #{tpu_custom_call.1} parent=1 // loop_footer
      %s52 = sadd.s32 1, %s48
    $region7: #{tpu_custom_call.1} parent=1 // loop_footer_branch
      %47 = sbr.rel target = $region3
    $region8: #{tpu_custom_call.1} parent=1 // loop_exit
      _
    %2595 = vsyncpa [#allocation3], 1
    %s2596 = scalar_lea.sflag [#allocation3], 1
    %2597 = vsyncpa %s2596, 1
    %2598 = vsyncpa [#allocation6], 1
    %s2599 = scalar_lea.sflag [#allocation6], 1
    %2600 = vsyncpa %s2599, 1
    %2601 = vsyncpa [#allocation9], 1
    %s2602 = scalar_lea.sflag [#allocation9], 1
    %2603 = vsyncpa %s2602, 1
    %2604 = vsyncpa [#allocation12], 1
    %s2605 = scalar_lea.sflag [#allocation12], 1
    %2606 = vsyncpa %s2605, 1
    %2607 = vsyncpa [#allocation15], 1
    %s2608 = scalar_lea.sflag [#allocation15], 1
    %2609 = vsyncpa %s2608, 1
    %2610 = vsyncpa [#allocation18], 1
    %s2611 = scalar_lea.sflag [#allocation18], 1
    %2612 = vsyncpa %s2611, 1
    %2613 = vsyncpa [#allocation21], 1
    %s2614 = scalar_lea.sflag [#allocation21], 1
    %2615 = vsyncpa %s2614, 1
    %2616 = vsyncpa [#allocation24], 1
    %s2617 = scalar_lea.sflag [#allocation24], 1
    %2618 = vsyncpa %s2617, 1
    %2619 = vsyncpa [#allocation4], 1
    %s2620 = scalar_lea.sflag [#allocation4], 1
    %2621 = vsyncpa %s2620, 1

</llo_original>
